<compile_context>
chip_gen: v7x
topology: tpu7x:2x2x1
jax: 0.10.0
libtpu: 0.0.40
codegen_flags: <defaults>
</compile_context>

<pallas_src>
import functools
import math

import jax
import jax.numpy as jnp
from jax import lax
from jax.experimental import pallas as pl
from jax.experimental.pallas import tpu as pltpu


# --------------------------------------------------------------------------- helpers
def _bf16(x):
    return x.astype(jnp.bfloat16)


def _layernorm(x, gamma, beta, eps=1e-5):
    # torch.nn.LayerNorm: biased variance over last dim, eps inside sqrt
    mean = jnp.mean(x, axis=-1, keepdims=True)
    var = jnp.mean(jnp.square(x - mean), axis=-1, keepdims=True)
    return (x - mean) * lax.rsqrt(var + eps) * gamma + beta


def _softmax_attend(q, k, v):
    # q, k, v: (Bb, T, D) f32 (q already carries 1/sqrt(D) via the folded Wq)
    s = lax.dot_general(_bf16(q), _bf16(k),
                        dimension_numbers=(((2,), (2,)), ((0,), (0,))),
                        preferred_element_type=jnp.float32)          # (Bb, T, T)
    s = s - jnp.max(s, axis=-1, keepdims=True)
    p = jnp.exp(s)
    p = p * pl.reciprocal(jnp.sum(p, axis=-1, keepdims=True), approx=True)
    return lax.dot_general(_bf16(p), _bf16(v),
                           dimension_numbers=(((2,), (1,)), ((0,), (0,))),
                           preferred_element_type=jnp.float32)       # (Bb, T, D)


_SMEM_SPEC = pl.BlockSpec(memory_space=pltpu.MemorySpace.SMEM)


# --------------------------------------------------------------------------- kernels
def _initial_encoder_kernel(lam_ref, x_ref, w_ref, v_ref,
                            o_ref, pool_x_ref, pool_y_ref):
    # w_ref : (D, 5D) bf16  -> columns [wq | wk | wv | w1 | w2]   (wq pre-scaled)
    # v_ref : (9, D)  f32   -> rows    [bq, bk, bv, bf1, bf2, g1, be1, g2, be2]
    Bb, T, D = x_ref.shape
    lam = lam_ref[0]
    x = x_ref[...]                                   # (Bb, T, D) f32
    M = Bb * T
    x2d = x.reshape(M, D)
    xb = _bf16(x2d)
    vecs = v_ref[...]                                # (9, D) f32

    # fused QKV: one wide matmul, slice lane-aligned columns of the result
    qkv = jnp.dot(xb, w_ref[:, 0:3 * D], preferred_element_type=jnp.float32)  # (M, 3D)
    q = (qkv[:, 0 * D:1 * D] + vecs[0:1]).reshape(Bb, T, D)
    k = (qkv[:, 1 * D:2 * D] + vecs[1:2]).reshape(Bb, T, D)
    v = (qkv[:, 2 * D:3 * D] + vecs[2:3]).reshape(Bb, T, D)

    att = _softmax_attend(q, k, v).reshape(M, D)
    xw = x2d * lam + att * (1.0 - lam)
    xw = _layernorm(xw, vecs[5:6], vecs[6:7])
    h = jnp.dot(_bf16(xw), w_ref[:, 3 * D:4 * D],
                preferred_element_type=jnp.float32) + vecs[3:4]
    xw = _layernorm(xw + h, vecs[7:8], vecs[8:9])
    y = jnp.dot(_bf16(xw), w_ref[:, 4 * D:5 * D],
                preferred_element_type=jnp.float32) + vecs[4:5]
    y3 = y.reshape(Bb, T, D)

    o_ref[...] = y3                                  # full output (feeds SecondEncoders)
    pool_x_ref[0] = jnp.mean(x, axis=1)              # pooled x   (feeds decoder 0)
    pool_y_ref[0] = jnp.mean(y3, axis=1)             # pooled y0  (feeds decoder 1)


def _second_encoder_kernel(lam_ref, x_ref, xw1_ref, w_ref, v_ref,
                           o_pool_ref, carry_ref):
    # w_ref : (1, D, 8D) bf16 -> columns [wq1|wk1|wv1|wq2 | wk2|wv2 | w1 | w2]
    # v_ref : (1, 12, D) f32  -> rows [bq1,bk1,bv1,bq2,bk2,bv2,bf1,bf2,g1,be1,g2,be2]
    j = pl.program_id(1)                             # encoder-block index (weight stream)

    @pl.when(j == 0)
    def _():                                         # seed the carry with x_w[1]
        carry_ref[...] = xw1_ref[...]

    Bb, T, D = x_ref.shape
    lam = lam_ref[j]
    x1 = x_ref[...]                                  # original x, VMEM-resident across j
    M = Bb * T
    x1_2d = x1.reshape(M, D)
    x1b = _bf16(x1_2d)
    x2b = _bf16(carry_ref[...].reshape(M, D))        # previous block's output
    vecs = v_ref[0]                                  # (12, D) f32

    # fused projections
    yA = jnp.dot(x1b, w_ref[0, :, 0:4 * D], preferred_element_type=jnp.float32)  # (M, 4D)
    yB = jnp.dot(x2b, w_ref[0, :, 4 * D:6 * D], preferred_element_type=jnp.float32)  # (M, 2D)

    q1 = (yA[:, 0 * D:1 * D] + vecs[0:1]).reshape(Bb, T, D)
    k1 = (yA[:, 1 * D:2 * D] + vecs[1:2]).reshape(Bb, T, D)
    v1 = (yA[:, 2 * D:3 * D] + vecs[2:3]).reshape(Bb, T, D)
    q2 = (yA[:, 3 * D:4 * D] + vecs[3:4]).reshape(Bb, T, D)
    k2 = (yB[:, 0 * D:1 * D] + vecs[4:5]).reshape(Bb, T, D)
    v2 = (yB[:, 1 * D:2 * D] + vecs[5:6]).reshape(Bb, T, D)

    a1 = _softmax_attend(q1, k1, v1)                 # self-attention att1(x1, x1, x1)
    a2 = _softmax_attend(q2, k2, v2)                 # cross-attention att2(x1, x2, x2)

    blend = (a1 * lam + a2 * (1.0 - lam)).reshape(M, D)
    xw = _layernorm(x1_2d + blend, vecs[8:9], vecs[9:10])
    h = jnp.dot(_bf16(xw), w_ref[0, :, 6 * D:7 * D],
                preferred_element_type=jnp.float32) + vecs[6:7]
    xw = _layernorm(xw + h, vecs[10:11], vecs[11:12])
    y = jnp.dot(_bf16(xw), w_ref[0, :, 7 * D:8 * D],
                preferred_element_type=jnp.float32) + vecs[7:8]
    y3 = y.reshape(Bb, T, D)

    carry_ref[...] = y3                              # carry to next encoder block
    o_pool_ref[0, 0] = jnp.mean(y3, axis=1)          # only the pooled output hits HBM


def _decoder_kernel(pooled_ref, w1_ref, b1_ref, w2_ref, b2_ref, o_ref, *, inv_n):
    # Single grid step: batched MLP + softmax over all n decoders, mean in-register.
    x = _bf16(pooled_ref[...])                       # (n, B, D)
    h = lax.dot_general(x, w1_ref[...],
                        dimension_numbers=(((2,), (1,)), ((0,), (0,))),
                        preferred_element_type=jnp.float32) + b1_ref[...]
    h = jnp.maximum(h, 0.0)
    logits = lax.dot_general(_bf16(h), w2_ref[...],
                             dimension_numbers=(((2,), (1,)), ((0,), (0,))),
                             preferred_element_type=jnp.float32) + b2_ref[...]
    logits = logits - jnp.max(logits, axis=-1, keepdims=True)
    e = jnp.exp(logits)
    p = e * pl.reciprocal(jnp.sum(e, axis=-1, keepdims=True), approx=True)
    o_ref[...] = jnp.sum(p, axis=0) * inv_n          # mean over decoders -> (B, C)


# --------------------------------------------------------------------------- wrappers
def initial_encoder(x, kp, groups):
    B, T, D = x.shape
    Bb = B // groups
    ce = pl.CostEstimate(flops=10 * B * T * D * D + 4 * B * T * T * D,
                         transcendentals=B * T * T,
                         bytes_accessed=8 * B * T * D + 2 * 5 * D * D + 4 * 9 * D + 8 * B * D)
    y, px, py = pl.pallas_call(
        _initial_encoder_kernel,
        out_shape=(jax.ShapeDtypeStruct((B, T, D), jnp.float32),
                   jax.ShapeDtypeStruct((groups, Bb, D), jnp.float32),
                   jax.ShapeDtypeStruct((groups, Bb, D), jnp.float32)),
        grid=(groups,),
        in_specs=[_SMEM_SPEC,
                  pl.BlockSpec((Bb, T, D), lambda g: (g, 0, 0)),
                  pl.BlockSpec(kp['w'].shape, lambda g: (0, 0)),
                  pl.BlockSpec(kp['v'].shape, lambda g: (0, 0))],
        out_specs=(pl.BlockSpec((Bb, T, D), lambda g: (g, 0, 0)),
                   pl.BlockSpec((1, Bb, D), lambda g: (g, 0, 0)),
                   pl.BlockSpec((1, Bb, D), lambda g: (g, 0, 0))),
        compiler_params=pltpu.CompilerParams(dimension_semantics=("parallel",)),
        cost_estimate=ce,
    )(kp['lam'], x, kp['w'], kp['v'])
    return y, px.reshape(B, D), py.reshape(B, D)


def second_encoders(x, xw1, kp, groups):
    """All (used) SecondEncoder blocks in one weight-streaming pallas_call.

    Only the T-pooled activations are written back to HBM; the running x_w carry lives
    in a VMEM scratch, so the full (n_sec, B, T, D) tensor never exists."""
    B, T, D = x.shape
    Bb = B // groups
    n_sec = kp['w'].shape[0]
    act_spec = pl.BlockSpec((Bb, T, D), lambda g, j: (g, 0, 0))          # resident over j
    ce = pl.CostEstimate(
        flops=n_sec * (16 * B * T * D * D + 8 * B * T * T * D),
        transcendentals=2 * n_sec * B * T * T,
        bytes_accessed=groups * 8 * B // groups * T * D
        + groups * n_sec * (2 * 8 * D * D + 4 * 12 * D) + 4 * n_sec * B * D)
    # TODO(synk): at real-model dims (D padded to 512, large B*T) re-derive this VMEM
    # budget for v7x's 64 MiB physical / v5e's 16 MiB scoped default.
    pooled = pl.pallas_call(
        _second_encoder_kernel,
        out_shape=jax.ShapeDtypeStruct((n_sec, groups, Bb, D), jnp.float32),
        grid=(groups, n_sec),
        in_specs=[_SMEM_SPEC, act_spec, act_spec,
                  pl.BlockSpec((1, D, 8 * D), lambda g, j: (j, 0, 0)),
                  pl.BlockSpec((1, 12, D), lambda g, j: (j, 0, 0))],
        out_specs=pl.BlockSpec((1, 1, Bb, D), lambda g, j: (j, g, 0, 0)),
        scratch_shapes=[pltpu.VMEM((Bb, T, D), jnp.float32)],            # x_w carry
        compiler_params=pltpu.CompilerParams(
            dimension_semantics=("parallel", "arbitrary"),
            vmem_limit_bytes=32 * 1024 * 1024),
        cost_estimate=ce,
    )(kp['lam'], x, xw1, kp['w'], kp['v'])
    return pooled.reshape(n_sec, B, D)


def decoders(pooled, kp):
    """All decoders in one single-step pallas_call on the pre-pooled activations."""
    n, B, D = pooled.shape
    H = kp['w1'].shape[2]
    C = kp['w2'].shape[2]
    ce = pl.CostEstimate(flops=n * (2 * B * D * H + 2 * B * H * C),
                         transcendentals=n * B * C,
                         bytes_accessed=4 * n * B * D + 2 * n * (D * H + H * C) + 4 * B * C)
    return pl.pallas_call(
        functools.partial(_decoder_kernel, inv_n=1.0 / n),
        out_shape=jax.ShapeDtypeStruct((B, C), jnp.float32),
        cost_estimate=ce,
    )(pooled, kp['w1'], kp['b1'], kp['w2'], kp['b2'])


def transformer_forward(x, kparams, groups=1):
    y0, pooled_x, pooled_y0 = initial_encoder(x, kparams['enc0'], groups)
    parts = [pooled_x[None], pooled_y0[None]]
    if kparams['sec'] is not None:
        parts.append(second_encoders(x, y0, kparams['sec'], groups))
    pooled = jnp.concatenate(parts, axis=0)          # (n_blocks, B, D): tiny
    # NOTE: the original module also computes one more SecondEncoder whose output is
    # never consumed by any decoder; it is skipped here (identical result).
    return decoders(pooled, kparams['dec'])


def default_groups(batch):
    """2 batch groups only on dual-TensorCore chips (v7x); 1 on single-TC v5e/v6e."""
    g = 1
    try:
        kind = jax.devices()[0].device_kind.lower()
        if "v7" in kind:
            g = 2
    except Exception:
        g = 1
    while g > 1 and batch % g:
        g -= 1
    return max(g, 1)


# --------------------------------------------------------------------------- params
def init_params(key, D, h_u, n_class, n_blocks):
    """f32 'model' parameters, torch-like layout (weights stored (in, out))."""
    def linear(k, fi, fo):
        kw, kb = jax.random.split(k)
        bound = 1.0 / math.sqrt(fi)
        return (jax.random.uniform(kw, (fi, fo), jnp.float32, -bound, bound),
                jax.random.uniform(kb, (1, fo), jnp.float32, -bound, bound))

    ks = iter(jax.random.split(key, 256))
    ones, zeros = jnp.ones((1, D), jnp.float32), jnp.zeros((1, D), jnp.float32)

    enc0 = {'lam': jnp.array([0.3], jnp.float32),
            'g1': ones, 'be1': zeros, 'g2': ones, 'be2': zeros}
    enc0['wq'], enc0['bq'] = linear(next(ks), D, D)
    enc0['wk'], enc0['bk'] = linear(next(ks), D, D)
    enc0['wv'], enc0['bv'] = linear(next(ks), D, D)
    enc0['w1'], enc0['bf1'] = linear(next(ks), D, D)
    enc0['w2'], enc0['bf2'] = linear(next(ks), D, D)

    sec = []
    for i in range(n_blocks - 1):
        p = {'lam': jnp.array([0.35 + 0.1 * i], jnp.float32),
             'g1': ones, 'be1': zeros, 'g2': ones, 'be2': zeros}
        for t in ('1', '2'):
            p['wq' + t], p['bq' + t] = linear(next(ks), D, D)
            p['wk' + t], p['bk' + t] = linear(next(ks), D, D)
            p['wv' + t], p['bv' + t] = linear(next(ks), D, D)
        p['w1'], p['bf1'] = linear(next(ks), D, D)
        p['w2'], p['bf2'] = linear(next(ks), D, D)
        sec.append(p)

    dec = []
    for _ in range(n_blocks):
        dp = {}
        dp['w1'], dp['b1'] = linear(next(ks), D, h_u)
        dp['w2'], dp['b2'] = linear(next(ks), h_u, n_class)
        dec.append(dp)
    return {'enc0': enc0, 'enc': sec, 'dec': dec}


def prepare_kernel_params(params, D):
    """Kernel-side params: fused bf16 weight slabs, packed f32 bias/LN slabs,
    1/sqrt(D) folded into Wq/bq."""
    scale = 1.0 / math.sqrt(D)
    e0 = params['enc0']
    w0 = jnp.concatenate([e0['wq'] * scale, e0['wk'], e0['wv'],
                          e0['w1'], e0['w2']], axis=1)                 # (D, 5D)
    v0 = jnp.concatenate([e0['bq'] * scale, e0['bk'], e0['bv'],
                          e0['bf1'], e0['bf2'],
                          e0['g1'], e0['be1'], e0['g2'], e0['be2']], axis=0)  # (9, D)
    k0 = {'lam': e0['lam'], 'w': _bf16(w0), 'v': v0}

    sec_used = params['enc'][:-1]          # drop the encoder whose output is unused
    ksec = None
    if sec_used:
        w_blocks, v_blocks = [], []
        for p in sec_used:
            w_blocks.append(jnp.concatenate(
                [p['wq1'] * scale, p['wk1'], p['wv1'], p['wq2'] * scale,
                 p['wk2'], p['wv2'], p['w1'], p['w2']], axis=1))       # (D, 8D)
            v_blocks.append(jnp.concatenate(
                [p['bq1'] * scale, p['bk1'], p['bv1'], p['bq2'] * scale,
                 p['bk2'], p['bv2'], p['bf1'], p['bf2'],
                 p['g1'], p['be1'], p['g2'], p['be2']], axis=0))       # (12, D)
        ksec = {'lam': jnp.concatenate([p['lam'] for p in sec_used], axis=0),
                'w': _bf16(jnp.stack(w_blocks, axis=0)),               # (n_sec, D, 8D)
                'v': jnp.stack(v_blocks, axis=0)}                      # (n_sec, 12, D)

    kdec = {'w1': _bf16(jnp.stack([p['w1'] for p in params['dec']])),
            'b1': jnp.stack([p['b1'] for p in params['dec']]),
            'w2': _bf16(jnp.stack([p['w2'] for p in params['dec']])),
            'b2': jnp.stack([p['b2'] for p in params['dec']])}
    return {'enc0': k0, 'sec': ksec, 'dec': kdec}


# --------------------------------------------------------------------------- independent pure-JAX reference
def _ref_ln(x, g, b, eps=1e-5):
    m = jnp.mean(x, axis=-1, keepdims=True)
    v = jnp.mean((x - m) ** 2, axis=-1, keepdims=True)
    return (x - m) / jnp.sqrt(v + eps) * g + b


def _ref_attention(x1, x2, x3, wq, bq, wk, bk, wv, bv, D):
    q = x1 @ wq + bq
    k = x2 @ wk + bk
    v = x3 @ wv + bv
    s = jnp.einsum('btd,bsd->bts', q, k) / math.sqrt(D)
    return jnp.einsum('bts,bsd->btd', jax.nn.softmax(s, axis=-1), v)


def transformer_ref(x, params):
    D = x.shape[-1]
    e0 = params['enc0']
    a = _ref_attention(x, x, x, e0['wq'], e0['bq'], e0['wk'], e0['bk'], e0['wv'], e0['bv'], D)
    h = x * e0['lam'][0] + a * (1.0 - e0['lam'][0])
    h = _ref_ln(h, e0['g1'], e0['be1'])
    h = _ref_ln(h + (h @ e0['w1'] + e0['bf1']), e0['g2'], e0['be2'])
    x_w = [x, h @ e0['w2'] + e0['bf2']]
    for p in params['enc']:
        a1 = _ref_attention(x, x, x, p['wq1'], p['bq1'], p['wk1'], p['bk1'], p['wv1'], p['bv1'], D)
        a2 = _ref_attention(x, x_w[-1], x_w[-1],
                            p['wq2'], p['bq2'], p['wk2'], p['bk2'], p['wv2'], p['bv2'], D)
        b = a1 * p['lam'][0] + a2 * (1.0 - p['lam'][0])
        h = _ref_ln(x + b, p['g1'], p['be1'])
        h = _ref_ln(h + (h @ p['w1'] + p['bf1']), p['g2'], p['be2'])
        x_w.append(h @ p['w2'] + p['bf2'])
    ys = []
    for i, dp in enumerate(params['dec']):
        pooled = jnp.mean(x_w[i], axis=1)
        hh = jax.nn.relu(pooled @ dp['w1'] + dp['b1'])
        ys.append(jax.nn.softmax(hh @ dp['w2'] + dp['b2'], axis=-1))
    return jnp.mean(jnp.stack(ys), axis=0)


# --------------------------------------------------------------------------- main
if __name__ == "__main__":
    B, T, D = 4, 8, 128          # batch, seq, input_dim (lane-dense D)
    H_U, N_CLASS = 128, 128      # hidden / classes (multiples of 128 -> unmasked stores)
    N_BLOCKS = 4                 # encoder_decoder (5 in the original; kept small)
    GROUPS = default_groups(B)   # 1 on single-TC v5e/v6e, 2 on dual-TC v7x
    assert N_BLOCKS >= 2 and B % GROUPS == 0

    key = jax.random.PRNGKey(0)
    kx, kp = jax.random.split(key)
    x = jax.random.normal(kx, (B, T, D), jnp.float32)
    params = init_params(kp, D, H_U, N_CLASS, N_BLOCKS)
    kparams = prepare_kernel_params(params, D)

    fwd = jax.jit(functools.partial(transformer_forward, groups=GROUPS))
    y = jax.block_until_ready(fwd(x, kparams))
    y_ref = transformer_ref(x, params)        # independent f32 oracle

    assert y.shape == (B, N_CLASS), y.shape
    max_err = float(jnp.max(jnp.abs(y - y_ref)))
    # tolerance loosened for bf16 MXU inputs + approx reciprocal (expected)
    assert jnp.allclose(y, y_ref, atol=2e-2, rtol=5e-2), max_err
    print("KERNEL_OK")
</pallas_src>

<mosaic_0001>
module attributes {stable_mosaic.version = 11 : i64} {
  func.func @_initial_encoder_kernel(%arg0: i32, %arg1: memref<1xf32, #tpu.memory_space<smem>>, %arg2: memref<4x8x128xf32, #tpu.memory_space<vmem>>, %arg3: memref<128x640xbf16, #tpu.memory_space<vmem>>, %arg4: memref<9x128xf32, #tpu.memory_space<vmem>>, %arg5: memref<4x8x128xf32, #tpu.memory_space<vmem>>, %arg6: memref<1x4x128xf32, #tpu.memory_space<vmem>>, %arg7: memref<1x4x128xf32, #tpu.memory_space<vmem>>) attributes {dimension_semantics = [#tpu.dimension_semantics<parallel>], iteration_bounds = array<i64: 1>, scalar_prefetch = 0 : i64, scratch_operands = 0 : i64, tpu.core_type = #tpu.core_type<tc>, window_params = [{transform_indices = @transform_0, window_bounds = array<i64: 1>}, {transform_indices = @transform_1, window_bounds = array<i64: 4, 8, 128>}, {pipeline_mode = #tpu.pipeline_mode<synchronous>, transform_indices = @transform_2, window_bounds = array<i64: 128, 640>}, {pipeline_mode = #tpu.pipeline_mode<synchronous>, transform_indices = @transform_3, window_bounds = array<i64: 9, 128>}, {transform_indices = @transform_4, window_bounds = array<i64: 4, 8, 128>}, {transform_indices = @transform_5, window_bounds = array<i64: 1, 4, 128>}, {transform_indices = @transform_6, window_bounds = array<i64: 1, 4, 128>}]} {
    %c0 = arith.constant 0 : index
    %0 = memref.load %arg1[%c0] : memref<1xf32, #tpu.memory_space<smem>>
    %c0_0 = arith.constant 0 : index
    %c0_1 = arith.constant 0 : index
    %c0_2 = arith.constant 0 : index
    %1 = vector.load %arg2[%c0_0, %c0_1, %c0_2] : memref<4x8x128xf32, #tpu.memory_space<vmem>>, vector<4x8x128xf32>
    %2 = vector.shape_cast %1 : vector<4x8x128xf32> to vector<32x128xf32>
    %3 = arith.truncf %2 : vector<32x128xf32> to vector<32x128xbf16>
    %c0_3 = arith.constant 0 : index
    %c0_4 = arith.constant 0 : index
    %4 = vector.load %arg4[%c0_3, %c0_4] : memref<9x128xf32, #tpu.memory_space<vmem>>, vector<9x128xf32>
    %c0_5 = arith.constant 0 : index
    %c0_6 = arith.constant 0 : index
    %5 = vector.load %arg3[%c0_5, %c0_6] : memref<128x640xbf16, #tpu.memory_space<vmem>>, vector<128x384xbf16>
    %cst = arith.constant dense<0.000000e+00> : vector<32x384xf32>
    %6 = tpu.matmul %3, %5, %cst {dimension_numbers = #tpu.dot_dimension_numbers<[1], [0], [0], [1], [0, 0, 1, 1], [], []>} : vector<32x128xbf16>, vector<128x384xbf16>, vector<32x384xf32> -> vector<32x384xf32>
    %7 = vector.extract_strided_slice %6 {offsets = [0, 0], sizes = [32, 128], strides = [1, 1]} : vector<32x384xf32> to vector<32x128xf32>
    %8 = vector.extract_strided_slice %4 {offsets = [0, 0], sizes = [1, 128], strides = [1, 1]} : vector<9x128xf32> to vector<1x128xf32>
    %9 = vector.broadcast %8 : vector<1x128xf32> to vector<32x128xf32>
    %10 = arith.addf %7, %9 : vector<32x128xf32>
    %11 = vector.shape_cast %10 : vector<32x128xf32> to vector<4x8x128xf32>
    %12 = vector.extract_strided_slice %6 {offsets = [0, 128], sizes = [32, 128], strides = [1, 1]} : vector<32x384xf32> to vector<32x128xf32>
    %13 = vector.extract_strided_slice %4 {offsets = [1, 0], sizes = [1, 128], strides = [1, 1]} : vector<9x128xf32> to vector<1x128xf32>
    %14 = vector.broadcast %13 : vector<1x128xf32> to vector<32x128xf32>
    %15 = arith.addf %12, %14 : vector<32x128xf32>
    %16 = vector.shape_cast %15 : vector<32x128xf32> to vector<4x8x128xf32>
    %17 = vector.extract_strided_slice %6 {offsets = [0, 256], sizes = [32, 128], strides = [1, 1]} : vector<32x384xf32> to vector<32x128xf32>
    %18 = vector.extract_strided_slice %4 {offsets = [2, 0], sizes = [1, 128], strides = [1, 1]} : vector<9x128xf32> to vector<1x128xf32>
    %19 = vector.broadcast %18 : vector<1x128xf32> to vector<32x128xf32>
    %20 = arith.addf %17, %19 : vector<32x128xf32>
    %21 = vector.shape_cast %20 : vector<32x128xf32> to vector<4x8x128xf32>
    %22 = arith.truncf %11 : vector<4x8x128xf32> to vector<4x8x128xbf16>
    %23 = arith.truncf %16 : vector<4x8x128xf32> to vector<4x8x128xbf16>
    %cst_7 = arith.constant dense<0.000000e+00> : vector<4x8x8xf32>
    %24 = tpu.matmul %22, %23, %cst_7 {dimension_numbers = #tpu.dot_dimension_numbers<[2], [2], [1], [1], [0, 0, 0, 1, 1, 1], [0], [0]>} : vector<4x8x128xbf16>, vector<4x8x128xbf16>, vector<4x8x8xf32> -> vector<4x8x8xf32>
    %cst_8 = arith.constant dense<0xFF800000> : vector<4x8xf32>
    %25 = vector.multi_reduction <maximumf>, %24, %cst_8 [2] : vector<4x8x8xf32> to vector<4x8xf32>
    %26 = vector.shape_cast %25 : vector<4x8xf32> to vector<4x8x1xf32>
    %27 = vector.broadcast %26 : vector<4x8x1xf32> to vector<4x8x8xf32>
    %28 = arith.subf %24, %27 : vector<4x8x8xf32>
    %29 = math.exp %28 : vector<4x8x8xf32>
    %cst_9 = arith.constant dense<0.000000e+00> : vector<4x8xf32>
    %30 = vector.multi_reduction <add>, %29, %cst_9 [2] : vector<4x8x8xf32> to vector<4x8xf32>
    %31 = vector.shape_cast %30 : vector<4x8xf32> to vector<4x8x1xf32>
    %32 = tpu.reciprocal %31 {approx = true} : vector<4x8x1xf32> -> vector<4x8x1xf32>
    %33 = vector.broadcast %32 : vector<4x8x1xf32> to vector<4x8x8xf32>
    %34 = arith.mulf %29, %33 : vector<4x8x8xf32>
    %35 = arith.truncf %34 : vector<4x8x8xf32> to vector<4x8x8xbf16>
    %36 = arith.truncf %21 : vector<4x8x128xf32> to vector<4x8x128xbf16>
    %cst_10 = arith.constant dense<0.000000e+00> : vector<4x8x128xf32>
    %37 = tpu.matmul %35, %36, %cst_10 {dimension_numbers = #tpu.dot_dimension_numbers<[2], [1], [1], [2], [0, 0, 0, 1, 1, 2], [0], [0]>} : vector<4x8x8xbf16>, vector<4x8x128xbf16>, vector<4x8x128xf32> -> vector<4x8x128xf32>
    %38 = vector.shape_cast %37 : vector<4x8x128xf32> to vector<32x128xf32>
    %39 = vector.broadcast %0 : f32 to vector<32x128xf32>
    %40 = arith.mulf %2, %39 : vector<32x128xf32>
    %cst_11 = arith.constant 1.000000e+00 : f32
    %41 = arith.subf %cst_11, %0 : f32
    %42 = vector.broadcast %41 : f32 to vector<32x128xf32>
    %43 = arith.mulf %38, %42 : vector<32x128xf32>
    %44 = arith.addf %40, %43 : vector<32x128xf32>
    %45 = vector.extract_strided_slice %4 {offsets = [5, 0], sizes = [1, 128], strides = [1, 1]} : vector<9x128xf32> to vector<1x128xf32>
    %46 = vector.extract_strided_slice %4 {offsets = [6, 0], sizes = [1, 128], strides = [1, 1]} : vector<9x128xf32> to vector<1x128xf32>
    %cst_12 = arith.constant dense<0.000000e+00> : vector<32xf32>
    %47 = vector.multi_reduction <add>, %44, %cst_12 [1] : vector<32x128xf32> to vector<32xf32>
    %48 = vector.shape_cast %47 : vector<32xf32> to vector<32x1xf32>
    %cst_13 = arith.constant 1.280000e+02 : f32
    %49 = vector.broadcast %cst_13 : f32 to vector<32x1xf32>
    %50 = arith.divf %48, %49 : vector<32x1xf32>
    %51 = vector.broadcast %50 : vector<32x1xf32> to vector<32x128xf32>
    %52 = arith.subf %44, %51 : vector<32x128xf32>
    %53 = arith.mulf %52, %52 : vector<32x128xf32>
    %cst_14 = arith.constant dense<0.000000e+00> : vector<32xf32>
    %54 = vector.multi_reduction <add>, %53, %cst_14 [1] : vector<32x128xf32> to vector<32xf32>
    %55 = vector.shape_cast %54 : vector<32xf32> to vector<32x1xf32>
    %cst_15 = arith.constant 1.280000e+02 : f32
    %56 = vector.broadcast %cst_15 : f32 to vector<32x1xf32>
    %57 = arith.divf %55, %56 : vector<32x1xf32>
    %58 = vector.broadcast %50 : vector<32x1xf32> to vector<32x128xf32>
    %59 = arith.subf %44, %58 : vector<32x128xf32>
    %cst_16 = arith.constant 9.99999974E-6 : f32
    %60 = vector.broadcast %cst_16 : f32 to vector<32x1xf32>
    %61 = arith.addf %57, %60 : vector<32x1xf32>
    %62 = math.rsqrt %61 : vector<32x1xf32>
    %63 = vector.broadcast %62 : vector<32x1xf32> to vector<32x128xf32>
    %64 = arith.mulf %59, %63 : vector<32x128xf32>
    %65 = vector.broadcast %45 : vector<1x128xf32> to vector<32x128xf32>
    %66 = arith.mulf %64, %65 : vector<32x128xf32>
    %67 = vector.broadcast %46 : vector<1x128xf32> to vector<32x128xf32>
    %68 = arith.addf %66, %67 : vector<32x128xf32>
    %69 = arith.truncf %68 : vector<32x128xf32> to vector<32x128xbf16>
    %c0_17 = arith.constant 0 : index
    %c384 = arith.constant 384 : index
    %70 = vector.load %arg3[%c0_17, %c384] : memref<128x640xbf16, #tpu.memory_space<vmem>>, vector<128x128xbf16>
    %cst_18 = arith.constant dense<0.000000e+00> : vector<32x128xf32>
    %71 = tpu.matmul %69, %70, %cst_18 {dimension_numbers = #tpu.dot_dimension_numbers<[1], [0], [0], [1], [0, 0, 1, 1], [], []>} : vector<32x128xbf16>, vector<128x128xbf16>, vector<32x128xf32> -> vector<32x128xf32>
    %72 = vector.extract_strided_slice %4 {offsets = [3, 0], sizes = [1, 128], strides = [1, 1]} : vector<9x128xf32> to vector<1x128xf32>
    %73 = vector.broadcast %72 : vector<1x128xf32> to vector<32x128xf32>
    %74 = arith.addf %71, %73 : vector<32x128xf32>
    %75 = arith.addf %68, %74 : vector<32x128xf32>
    %76 = vector.extract_strided_slice %4 {offsets = [7, 0], sizes = [1, 128], strides = [1, 1]} : vector<9x128xf32> to vector<1x128xf32>
    %77 = vector.extract_strided_slice %4 {offsets = [8, 0], sizes = [1, 128], strides = [1, 1]} : vector<9x128xf32> to vector<1x128xf32>
    %cst_19 = arith.constant dense<0.000000e+00> : vector<32xf32>
    %78 = vector.multi_reduction <add>, %75, %cst_19 [1] : vector<32x128xf32> to vector<32xf32>
    %79 = vector.shape_cast %78 : vector<32xf32> to vector<32x1xf32>
    %cst_20 = arith.constant 1.280000e+02 : f32
    %80 = vector.broadcast %cst_20 : f32 to vector<32x1xf32>
    %81 = arith.divf %79, %80 : vector<32x1xf32>
    %82 = vector.broadcast %81 : vector<32x1xf32> to vector<32x128xf32>
    %83 = arith.subf %75, %82 : vector<32x128xf32>
    %84 = arith.mulf %83, %83 : vector<32x128xf32>
    %cst_21 = arith.constant dense<0.000000e+00> : vector<32xf32>
    %85 = vector.multi_reduction <add>, %84, %cst_21 [1] : vector<32x128xf32> to vector<32xf32>
    %86 = vector.shape_cast %85 : vector<32xf32> to vector<32x1xf32>
    %cst_22 = arith.constant 1.280000e+02 : f32
    %87 = vector.broadcast %cst_22 : f32 to vector<32x1xf32>
    %88 = arith.divf %86, %87 : vector<32x1xf32>
    %89 = vector.broadcast %81 : vector<32x1xf32> to vector<32x128xf32>
    %90 = arith.subf %75, %89 : vector<32x128xf32>
    %cst_23 = arith.constant 9.99999974E-6 : f32
    %91 = vector.broadcast %cst_23 : f32 to vector<32x1xf32>
    %92 = arith.addf %88, %91 : vector<32x1xf32>
    %93 = math.rsqrt %92 : vector<32x1xf32>
    %94 = vector.broadcast %93 : vector<32x1xf32> to vector<32x128xf32>
    %95 = arith.mulf %90, %94 : vector<32x128xf32>
    %96 = vector.broadcast %76 : vector<1x128xf32> to vector<32x128xf32>
    %97 = arith.mulf %95, %96 : vector<32x128xf32>
    %98 = vector.broadcast %77 : vector<1x128xf32> to vector<32x128xf32>
    %99 = arith.addf %97, %98 : vector<32x128xf32>
    %100 = arith.truncf %99 : vector<32x128xf32> to vector<32x128xbf16>
    %c0_24 = arith.constant 0 : index
    %c512 = arith.constant 512 : index
    %101 = vector.load %arg3[%c0_24, %c512] : memref<128x640xbf16, #tpu.memory_space<vmem>>, vector<128x128xbf16>
    %cst_25 = arith.constant dense<0.000000e+00> : vector<32x128xf32>
    %102 = tpu.matmul %100, %101, %cst_25 {dimension_numbers = #tpu.dot_dimension_numbers<[1], [0], [0], [1], [0, 0, 1, 1], [], []>} : vector<32x128xbf16>, vector<128x128xbf16>, vector<32x128xf32> -> vector<32x128xf32>
    %103 = vector.extract_strided_slice %4 {offsets = [4, 0], sizes = [1, 128], strides = [1, 1]} : vector<9x128xf32> to vector<1x128xf32>
    %104 = vector.broadcast %103 : vector<1x128xf32> to vector<32x128xf32>
    %105 = arith.addf %102, %104 : vector<32x128xf32>
    %106 = vector.shape_cast %105 : vector<32x128xf32> to vector<4x8x128xf32>
    %c0_26 = arith.constant 0 : index
    %c0_27 = arith.constant 0 : index
    %c0_28 = arith.constant 0 : index
    %107 = vector.load %arg5[%c0_26, %c0_27, %c0_28] : memref<4x8x128xf32, #tpu.memory_space<vmem>>, vector<4x8x128xf32>
    tpu.vector_store %arg5[%c0_26, %c0_27, %c0_28], %106 {strides = array<i32>} : memref<4x8x128xf32, #tpu.memory_space<vmem>>, vector<4x8x128xf32>,
    %cst_29 = arith.constant dense<0.000000e+00> : vector<4x128xf32>
    %108 = vector.multi_reduction <add>, %1, %cst_29 [1] : vector<4x8x128xf32> to vector<4x128xf32>
    %cst_30 = arith.constant 8.000000e+00 : f32
    %109 = vector.broadcast %cst_30 : f32 to vector<4x128xf32>
    %110 = arith.divf %108, %109 : vector<4x128xf32>
    %c0_31 = arith.constant 0 : index
    %c0_32 = arith.constant 0 : index
    %c0_33 = arith.constant 0 : index
    %111 = vector.load %arg6[%c0_31, %c0_32, %c0_33] : memref<1x4x128xf32, #tpu.memory_space<vmem>>, vector<1x4x128xf32>
    %112 = vector.shape_cast %111 : vector<1x4x128xf32> to vector<4x128xf32>
    %113 = vector.shape_cast %110 : vector<4x128xf32> to vector<1x4x128xf32>
    tpu.vector_store %arg6[%c0_31, %c0_32, %c0_33], %113 {strides = array<i32>} : memref<1x4x128xf32, #tpu.memory_space<vmem>>, vector<1x4x128xf32>,
    %cst_34 = arith.constant dense<0.000000e+00> : vector<4x128xf32>
    %114 = vector.multi_reduction <add>, %106, %cst_34 [1] : vector<4x8x128xf32> to vector<4x128xf32>
    %cst_35 = arith.constant 8.000000e+00 : f32
    %115 = vector.broadcast %cst_35 : f32 to vector<4x128xf32>
    %116 = arith.divf %114, %115 : vector<4x128xf32>
    %c0_36 = arith.constant 0 : index
    %c0_37 = arith.constant 0 : index
    %c0_38 = arith.constant 0 : index
    %117 = vector.load %arg7[%c0_36, %c0_37, %c0_38] : memref<1x4x128xf32, #tpu.memory_space<vmem>>, vector<1x4x128xf32>
    %118 = vector.shape_cast %117 : vector<1x4x128xf32> to vector<4x128xf32>
    %119 = vector.shape_cast %116 : vector<4x128xf32> to vector<1x4x128xf32>
    tpu.vector_store %arg7[%c0_36, %c0_37, %c0_38], %119 {strides = array<i32>} : memref<1x4x128xf32, #tpu.memory_space<vmem>>, vector<1x4x128xf32>,
    return
  }
  func.func @transform_0(%arg0: i32) -> i32 {
    %c0_i32 = arith.constant 0 : i32
    %c0_i32_0 = arith.constant 0 : i32
    return %c0_i32 : i32
  }
  func.func @transform_1(%arg0: i32) -> (i32, i32, i32) {
    %c0_i32 = arith.constant 0 : i32
    %c0_i32_0 = arith.constant 0 : i32
    %c0_i32_1 = arith.constant 0 : i32
    return %arg0, %c0_i32, %c0_i32_0 : i32, i32, i32
  }
  func.func @transform_2(%arg0: i32) -> (i32, i32) {
    %c0_i32 = arith.constant 0 : i32
    %c0_i32_0 = arith.constant 0 : i32
    %c0_i32_1 = arith.constant 0 : i32
    return %c0_i32, %c0_i32_0 : i32, i32
  }
  func.func @transform_3(%arg0: i32) -> (i32, i32) {
    %c0_i32 = arith.constant 0 : i32
    %c0_i32_0 = arith.constant 0 : i32
    %c0_i32_1 = arith.constant 0 : i32
    return %c0_i32, %c0_i32_0 : i32, i32
  }
  func.func @transform_4(%arg0: i32) -> (i32, i32, i32) {
    %c0_i32 = arith.constant 0 : i32
    %c0_i32_0 = arith.constant 0 : i32
    %c0_i32_1 = arith.constant 0 : i32
    return %arg0, %c0_i32, %c0_i32_0 : i32, i32, i32
  }
  func.func @transform_5(%arg0: i32) -> (i32, i32, i32) {
    %c0_i32 = arith.constant 0 : i32
    %c0_i32_0 = arith.constant 0 : i32
    %c0_i32_1 = arith.constant 0 : i32
    return %arg0, %c0_i32, %c0_i32_0 : i32, i32, i32
  }
  func.func @transform_6(%arg0: i32) -> (i32, i32, i32) {
    %c0_i32 = arith.constant 0 : i32
    %c0_i32_0 = arith.constant 0 : i32
    %c0_i32_1 = arith.constant 0 : i32
    return %arg0, %c0_i32, %c0_i32_0 : i32, i32, i32
  }
}

module attributes {stable_mosaic.version = 11 : i64} {
  func.func @_second_encoder_kernel(%arg0: i32, %arg1: i32, %arg2: memref<2xf32, #tpu.memory_space<smem>>, %arg3: memref<4x8x128xf32, #tpu.memory_space<vmem>>, %arg4: memref<4x8x128xf32, #tpu.memory_space<vmem>>, %arg5: memref<1x128x1024xbf16, #tpu.memory_space<vmem>>, %arg6: memref<1x12x128xf32, #tpu.memory_space<vmem>>, %arg7: memref<1x1x4x128xf32, #tpu.memory_space<vmem>>, %arg8: memref<4x8x128xf32, #tpu.memory_space<vmem>>) attributes {dimension_semantics = [#tpu.dimension_semantics<parallel>, #tpu.dimension_semantics<arbitrary>], iteration_bounds = array<i64: 1, 2>, scalar_prefetch = 0 : i64, scratch_operands = 1 : i64, tpu.core_type = #tpu.core_type<tc>, window_params = [{transform_indices = @transform_0, window_bounds = array<i64: 2>}, {transform_indices = @transform_1, window_bounds = array<i64: 4, 8, 128>}, {transform_indices = @transform_2, window_bounds = array<i64: 4, 8, 128>}, {transform_indices = @transform_3, window_bounds = array<i64: 1, 128, 1024>}, {transform_indices = @transform_4, window_bounds = array<i64: 1, 12, 128>}, {transform_indices = @transform_5, window_bounds = array<i64: 1, 1, 4, 128>}]} {
    %c0_i32 = arith.constant 0 : i32
    %0 = arith.cmpi eq, %arg1, %c0_i32 : i32
    %1 = arith.extui %0 : i1 to i32
    %c0_i32_0 = arith.constant 0 : i32
    %2 = arith.cmpi ne, %1, %c0_i32_0 : i32
    scf.if %2 {
      %c0_49 = arith.constant 0 : index
      %c0_50 = arith.constant 0 : index
      %c0_51 = arith.constant 0 : index
      %160 = vector.load %arg4[%c0_49, %c0_50, %c0_51] : memref<4x8x128xf32, #tpu.memory_space<vmem>>, vector<4x8x128xf32>
      %c0_52 = arith.constant 0 : index
      %c0_53 = arith.constant 0 : index
      %c0_54 = arith.constant 0 : index
      %161 = vector.load %arg8[%c0_52, %c0_53, %c0_54] : memref<4x8x128xf32, #tpu.memory_space<vmem>>, vector<4x8x128xf32>
      tpu.vector_store %arg8[%c0_52, %c0_53, %c0_54], %160 {strides = array<i32>} : memref<4x8x128xf32, #tpu.memory_space<vmem>>, vector<4x8x128xf32>,
    } else {
    }
    %3 = arith.index_cast %arg1 : i32 to index
    %4 = memref.load %arg2[%3] : memref<2xf32, #tpu.memory_space<smem>>
    %c0 = arith.constant 0 : index
    %c0_1 = arith.constant 0 : index
    %c0_2 = arith.constant 0 : index
    %5 = vector.load %arg3[%c0, %c0_1, %c0_2] : memref<4x8x128xf32, #tpu.memory_space<vmem>>, vector<4x8x128xf32>
    %6 = vector.shape_cast %5 : vector<4x8x128xf32> to vector<32x128xf32>
    %7 = arith.truncf %6 : vector<32x128xf32> to vector<32x128xbf16>
    %c0_3 = arith.constant 0 : index
    %c0_4 = arith.constant 0 : index
    %c0_5 = arith.constant 0 : index
    %8 = vector.load %arg8[%c0_3, %c0_4, %c0_5] : memref<4x8x128xf32, #tpu.memory_space<vmem>>, vector<4x8x128xf32>
    %9 = vector.shape_cast %8 : vector<4x8x128xf32> to vector<32x128xf32>
    %10 = arith.truncf %9 : vector<32x128xf32> to vector<32x128xbf16>
    %c0_6 = arith.constant 0 : index
    %c0_7 = arith.constant 0 : index
    %c0_8 = arith.constant 0 : index
    %11 = vector.load %arg6[%c0_6, %c0_7, %c0_8] : memref<1x12x128xf32, #tpu.memory_space<vmem>>, vector<1x12x128xf32>
    %12 = vector.shape_cast %11 : vector<1x12x128xf32> to vector<12x128xf32>
    %c0_9 = arith.constant 0 : index
    %c0_10 = arith.constant 0 : index
    %c0_11 = arith.constant 0 : index
    %13 = vector.load %arg5[%c0_9, %c0_10, %c0_11] : memref<1x128x1024xbf16, #tpu.memory_space<vmem>>, vector<1x128x512xbf16>
    %14 = vector.shape_cast %13 : vector<1x128x512xbf16> to vector<128x512xbf16>
    %cst = arith.constant dense<0.000000e+00> : vector<32x512xf32>
    %15 = tpu.matmul %7, %14, %cst {dimension_numbers = #tpu.dot_dimension_numbers<[1], [0], [0], [1], [0, 0, 1, 1], [], []>} : vector<32x128xbf16>, vector<128x512xbf16>, vector<32x512xf32> -> vector<32x512xf32>
    %c0_12 = arith.constant 0 : index
    %c0_13 = arith.constant 0 : index
    %c512 = arith.constant 512 : index
    %16 = vector.load %arg5[%c0_12, %c0_13, %c512] : memref<1x128x1024xbf16, #tpu.memory_space<vmem>>, vector<1x128x256xbf16>
    %17 = vector.shape_cast %16 : vector<1x128x256xbf16> to vector<128x256xbf16>
    %cst_14 = arith.constant dense<0.000000e+00> : vector<32x256xf32>
    %18 = tpu.matmul %10, %17, %cst_14 {dimension_numbers = #tpu.dot_dimension_numbers<[1], [0], [0], [1], [0, 0, 1, 1], [], []>} : vector<32x128xbf16>, vector<128x256xbf16>, vector<32x256xf32> -> vector<32x256xf32>
    %19 = vector.extract_strided_slice %15 {offsets = [0, 0], sizes = [32, 128], strides = [1, 1]} : vector<32x512xf32> to vector<32x128xf32>
    %20 = vector.extract_strided_slice %12 {offsets = [0, 0], sizes = [1, 128], strides = [1, 1]} : vector<12x128xf32> to vector<1x128xf32>
    %21 = vector.broadcast %20 : vector<1x128xf32> to vector<32x128xf32>
    %22 = arith.addf %19, %21 : vector<32x128xf32>
    %23 = vector.shape_cast %22 : vector<32x128xf32> to vector<4x8x128xf32>
    %24 = vector.extract_strided_slice %15 {offsets = [0, 128], sizes = [32, 128], strides = [1, 1]} : vector<32x512xf32> to vector<32x128xf32>
    %25 = vector.extract_strided_slice %12 {offsets = [1, 0], sizes = [1, 128], strides = [1, 1]} : vector<12x128xf32> to vector<1x128xf32>
    %26 = vector.broadcast %25 : vector<1x128xf32> to vector<32x128xf32>
    %27 = arith.addf %24, %26 : vector<32x128xf32>
    %28 = vector.shape_cast %27 : vector<32x128xf32> to vector<4x8x128xf32>
    %29 = vector.extract_strided_slice %15 {offsets = [0, 256], sizes = [32, 128], strides = [1, 1]} : vector<32x512xf32> to vector<32x128xf32>
    %30 = vector.extract_strided_slice %12 {offsets = [2, 0], sizes = [1, 128], strides = [1, 1]} : vector<12x128xf32> to vector<1x128xf32>
    %31 = vector.broadcast %30 : vector<1x128xf32> to vector<32x128xf32>
    %32 = arith.addf %29, %31 : vector<32x128xf32>
    %33 = vector.shape_cast %32 : vector<32x128xf32> to vector<4x8x128xf32>
    %34 = vector.extract_strided_slice %15 {offsets = [0, 384], sizes = [32, 128], strides = [1, 1]} : vector<32x512xf32> to vector<32x128xf32>
    %35 = vector.extract_strided_slice %12 {offsets = [3, 0], sizes = [1, 128], strides = [1, 1]} : vector<12x128xf32> to vector<1x128xf32>
    %36 = vector.broadcast %35 : vector<1x128xf32> to vector<32x128xf32>
    %37 = arith.addf %34, %36 : vector<32x128xf32>
    %38 = vector.shape_cast %37 : vector<32x128xf32> to vector<4x8x128xf32>
    %39 = vector.extract_strided_slice %18 {offsets = [0, 0], sizes = [32, 128], strides = [1, 1]} : vector<32x256xf32> to vector<32x128xf32>
    %40 = vector.extract_strided_slice %12 {offsets = [4, 0], sizes = [1, 128], strides = [1, 1]} : vector<12x128xf32> to vector<1x128xf32>
    %41 = vector.broadcast %40 : vector<1x128xf32> to vector<32x128xf32>
    %42 = arith.addf %39, %41 : vector<32x128xf32>
    %43 = vector.shape_cast %42 : vector<32x128xf32> to vector<4x8x128xf32>
    %44 = vector.extract_strided_slice %18 {offsets = [0, 128], sizes = [32, 128], strides = [1, 1]} : vector<32x256xf32> to vector<32x128xf32>
    %45 = vector.extract_strided_slice %12 {offsets = [5, 0], sizes = [1, 128], strides = [1, 1]} : vector<12x128xf32> to vector<1x128xf32>
    %46 = vector.broadcast %45 : vector<1x128xf32> to vector<32x128xf32>
    %47 = arith.addf %44, %46 : vector<32x128xf32>
    %48 = vector.shape_cast %47 : vector<32x128xf32> to vector<4x8x128xf32>
    %49 = arith.truncf %23 : vector<4x8x128xf32> to vector<4x8x128xbf16>
    %50 = arith.truncf %28 : vector<4x8x128xf32> to vector<4x8x128xbf16>
    %cst_15 = arith.constant dense<0.000000e+00> : vector<4x8x8xf32>
    %51 = tpu.matmul %49, %50, %cst_15 {dimension_numbers = #tpu.dot_dimension_numbers<[2], [2], [1], [1], [0, 0, 0, 1, 1, 1], [0], [0]>} : vector<4x8x128xbf16>, vector<4x8x128xbf16>, vector<4x8x8xf32> -> vector<4x8x8xf32>
    %cst_16 = arith.constant dense<0xFF800000> : vector<4x8xf32>
    %52 = vector.multi_reduction <maximumf>, %51, %cst_16 [2] : vector<4x8x8xf32> to vector<4x8xf32>
    %53 = vector.shape_cast %52 : vector<4x8xf32> to vector<4x8x1xf32>
    %54 = vector.broadcast %53 : vector<4x8x1xf32> to vector<4x8x8xf32>
    %55 = arith.subf %51, %54 : vector<4x8x8xf32>
    %56 = math.exp %55 : vector<4x8x8xf32>
    %cst_17 = arith.constant dense<0.000000e+00> : vector<4x8xf32>
    %57 = vector.multi_reduction <add>, %56, %cst_17 [2] : vector<4x8x8xf32> to vector<4x8xf32>
    %58 = vector.shape_cast %57 : vector<4x8xf32> to vector<4x8x1xf32>
    %59 = tpu.reciprocal %58 {approx = true} : vector<4x8x1xf32> -> vector<4x8x1xf32>
    %60 = vector.broadcast %59 : vector<4x8x1xf32> to vector<4x8x8xf32>
    %61 = arith.mulf %56, %60 : vector<4x8x8xf32>
    %62 = arith.truncf %61 : vector<4x8x8xf32> to vector<4x8x8xbf16>
    %63 = arith.truncf %33 : vector<4x8x128xf32> to vector<4x8x128xbf16>
    %cst_18 = arith.constant dense<0.000000e+00> : vector<4x8x128xf32>
    %64 = tpu.matmul %62, %63, %cst_18 {dimension_numbers = #tpu.dot_dimension_numbers<[2], [1], [1], [2], [0, 0, 0, 1, 1, 2], [0], [0]>} : vector<4x8x8xbf16>, vector<4x8x128xbf16>, vector<4x8x128xf32> -> vector<4x8x128xf32>
    %65 = arith.truncf %38 : vector<4x8x128xf32> to vector<4x8x128xbf16>
    %66 = arith.truncf %43 : vector<4x8x128xf32> to vector<4x8x128xbf16>
    %cst_19 = arith.constant dense<0.000000e+00> : vector<4x8x8xf32>
    %67 = tpu.matmul %65, %66, %cst_19 {dimension_numbers = #tpu.dot_dimension_numbers<[2], [2], [1], [1], [0, 0, 0, 1, 1, 1], [0], [0]>} : vector<4x8x128xbf16>, vector<4x8x128xbf16>, vector<4x8x8xf32> -> vector<4x8x8xf32>
    %cst_20 = arith.constant dense<0xFF800000> : vector<4x8xf32>
    %68 = vector.multi_reduction <maximumf>, %67, %cst_20 [2] : vector<4x8x8xf32> to vector<4x8xf32>
    %69 = vector.shape_cast %68 : vector<4x8xf32> to vector<4x8x1xf32>
    %70 = vector.broadcast %69 : vector<4x8x1xf32> to vector<4x8x8xf32>
    %71 = arith.subf %67, %70 : vector<4x8x8xf32>
    %72 = math.exp %71 : vector<4x8x8xf32>
    %cst_21 = arith.constant dense<0.000000e+00> : vector<4x8xf32>
    %73 = vector.multi_reduction <add>, %72, %cst_21 [2] : vector<4x8x8xf32> to vector<4x8xf32>
    %74 = vector.shape_cast %73 : vector<4x8xf32> to vector<4x8x1xf32>
    %75 = tpu.reciprocal %74 {approx = true} : vector<4x8x1xf32> -> vector<4x8x1xf32>
    %76 = vector.broadcast %75 : vector<4x8x1xf32> to vector<4x8x8xf32>
    %77 = arith.mulf %72, %76 : vector<4x8x8xf32>
    %78 = arith.truncf %77 : vector<4x8x8xf32> to vector<4x8x8xbf16>
    %79 = arith.truncf %48 : vector<4x8x128xf32> to vector<4x8x128xbf16>
    %cst_22 = arith.constant dense<0.000000e+00> : vector<4x8x128xf32>
    %80 = tpu.matmul %78, %79, %cst_22 {dimension_numbers = #tpu.dot_dimension_numbers<[2], [1], [1], [2], [0, 0, 0, 1, 1, 2], [0], [0]>} : vector<4x8x8xbf16>, vector<4x8x128xbf16>, vector<4x8x128xf32> -> vector<4x8x128xf32>
    %81 = vector.broadcast %4 : f32 to vector<4x8x128xf32>
    %82 = arith.mulf %64, %81 : vector<4x8x128xf32>
    %cst_23 = arith.constant 1.000000e+00 : f32
    %83 = arith.subf %cst_23, %4 : f32
    %84 = vector.broadcast %83 : f32 to vector<4x8x128xf32>
    %85 = arith.mulf %80, %84 : vector<4x8x128xf32>
    %86 = arith.addf %82, %85 : vector<4x8x128xf32>
    %87 = vector.shape_cast %86 : vector<4x8x128xf32> to vector<32x128xf32>
    %88 = arith.addf %6, %87 : vector<32x128xf32>
    %89 = vector.extract_strided_slice %12 {offsets = [8, 0], sizes = [1, 128], strides = [1, 1]} : vector<12x128xf32> to vector<1x128xf32>
    %90 = vector.extract_strided_slice %12 {offsets = [9, 0], sizes = [1, 128], strides = [1, 1]} : vector<12x128xf32> to vector<1x128xf32>
    %cst_24 = arith.constant dense<0.000000e+00> : vector<32xf32>
    %91 = vector.multi_reduction <add>, %88, %cst_24 [1] : vector<32x128xf32> to vector<32xf32>
    %92 = vector.shape_cast %91 : vector<32xf32> to vector<32x1xf32>
    %cst_25 = arith.constant 1.280000e+02 : f32
    %93 = vector.broadcast %cst_25 : f32 to vector<32x1xf32>
    %94 = arith.divf %92, %93 : vector<32x1xf32>
    %95 = vector.broadcast %94 : vector<32x1xf32> to vector<32x128xf32>
    %96 = arith.subf %88, %95 : vector<32x128xf32>
    %97 = arith.mulf %96, %96 : vector<32x128xf32>
    %cst_26 = arith.constant dense<0.000000e+00> : vector<32xf32>
    %98 = vector.multi_reduction <add>, %97, %cst_26 [1] : vector<32x128xf32> to vector<32xf32>
    %99 = vector.shape_cast %98 : vector<32xf32> to vector<32x1xf32>
    %cst_27 = arith.constant 1.280000e+02 : f32
    %100 = vector.broadcast %cst_27 : f32 to vector<32x1xf32>
    %101 = arith.divf %99, %100 : vector<32x1xf32>
    %102 = vector.broadcast %94 : vector<32x1xf32> to vector<32x128xf32>
    %103 = arith.subf %88, %102 : vector<32x128xf32>
    %cst_28 = arith.constant 9.99999974E-6 : f32
    %104 = vector.broadcast %cst_28 : f32 to vector<32x1xf32>
    %105 = arith.addf %101, %104 : vector<32x1xf32>
    %106 = math.rsqrt %105 : vector<32x1xf32>
    %107 = vector.broadcast %106 : vector<32x1xf32> to vector<32x128xf32>
    %108 = arith.mulf %103, %107 : vector<32x128xf32>
    %109 = vector.broadcast %89 : vector<1x128xf32> to vector<32x128xf32>
    %110 = arith.mulf %108, %109 : vector<32x128xf32>
    %111 = vector.broadcast %90 : vector<1x128xf32> to vector<32x128xf32>
    %112 = arith.addf %110, %111 : vector<32x128xf32>
    %113 = arith.truncf %112 : vector<32x128xf32> to vector<32x128xbf16>
    %c0_29 = arith.constant 0 : index
    %c0_30 = arith.constant 0 : index
    %c768 = arith.constant 768 : index
    %114 = vector.load %arg5[%c0_29, %c0_30, %c768] : memref<1x128x1024xbf16, #tpu.memory_space<vmem>>, vector<1x128x128xbf16>
    %115 = vector.shape_cast %114 : vector<1x128x128xbf16> to vector<128x128xbf16>
    %cst_31 = arith.constant dense<0.000000e+00> : vector<32x128xf32>
    %116 = tpu.matmul %113, %115, %cst_31 {dimension_numbers = #tpu.dot_dimension_numbers<[1], [0], [0], [1], [0, 0, 1, 1], [], []>} : vector<32x128xbf16>, vector<128x128xbf16>, vector<32x128xf32> -> vector<32x128xf32>
    %117 = vector.extract_strided_slice %12 {offsets = [6, 0], sizes = [1, 128], strides = [1, 1]} : vector<12x128xf32> to vector<1x128xf32>
    %118 = vector.broadcast %117 : vector<1x128xf32> to vector<32x128xf32>
    %119 = arith.addf %116, %118 : vector<32x128xf32>
    %120 = arith.addf %112, %119 : vector<32x128xf32>
    %121 = vector.extract_strided_slice %12 {offsets = [10, 0], sizes = [1, 128], strides = [1, 1]} : vector<12x128xf32> to vector<1x128xf32>
    %122 = vector.extract_strided_slice %12 {offsets = [11, 0], sizes = [1, 128], strides = [1, 1]} : vector<12x128xf32> to vector<1x128xf32>
    %cst_32 = arith.constant dense<0.000000e+00> : vector<32xf32>
    %123 = vector.multi_reduction <add>, %120, %cst_32 [1] : vector<32x128xf32> to vector<32xf32>
    %124 = vector.shape_cast %123 : vector<32xf32> to vector<32x1xf32>
    %cst_33 = arith.constant 1.280000e+02 : f32
    %125 = vector.broadcast %cst_33 : f32 to vector<32x1xf32>
    %126 = arith.divf %124, %125 : vector<32x1xf32>
    %127 = vector.broadcast %126 : vector<32x1xf32> to vector<32x128xf32>
    %128 = arith.subf %120, %127 : vector<32x128xf32>
    %129 = arith.mulf %128, %128 : vector<32x128xf32>
    %cst_34 = arith.constant dense<0.000000e+00> : vector<32xf32>
    %130 = vector.multi_reduction <add>, %129, %cst_34 [1] : vector<32x128xf32> to vector<32xf32>
    %131 = vector.shape_cast %130 : vector<32xf32> to vector<32x1xf32>
    %cst_35 = arith.constant 1.280000e+02 : f32
    %132 = vector.broadcast %cst_35 : f32 to vector<32x1xf32>
    %133 = arith.divf %131, %132 : vector<32x1xf32>
    %134 = vector.broadcast %126 : vector<32x1xf32> to vector<32x128xf32>
    %135 = arith.subf %120, %134 : vector<32x128xf32>
    %cst_36 = arith.constant 9.99999974E-6 : f32
    %136 = vector.broadcast %cst_36 : f32 to vector<32x1xf32>
    %137 = arith.addf %133, %136 : vector<32x1xf32>
    %138 = math.rsqrt %137 : vector<32x1xf32>
    %139 = vector.broadcast %138 : vector<32x1xf32> to vector<32x128xf32>
    %140 = arith.mulf %135, %139 : vector<32x128xf32>
    %141 = vector.broadcast %121 : vector<1x128xf32> to vector<32x128xf32>
    %142 = arith.mulf %140, %141 : vector<32x128xf32>
    %143 = vector.broadcast %122 : vector<1x128xf32> to vector<32x128xf32>
    %144 = arith.addf %142, %143 : vector<32x128xf32>
    %145 = arith.truncf %144 : vector<32x128xf32> to vector<32x128xbf16>
    %c0_37 = arith.constant 0 : index
    %c0_38 = arith.constant 0 : index
    %c896 = arith.constant 896 : index
    %146 = vector.load %arg5[%c0_37, %c0_38, %c896] : memref<1x128x1024xbf16, #tpu.memory_space<vmem>>, vector<1x128x128xbf16>
    %147 = vector.shape_cast %146 : vector<1x128x128xbf16> to vector<128x128xbf16>
    %cst_39 = arith.constant dense<0.000000e+00> : vector<32x128xf32>
    %148 = tpu.matmul %145, %147, %cst_39 {dimension_numbers = #tpu.dot_dimension_numbers<[1], [0], [0], [1], [0, 0, 1, 1], [], []>} : vector<32x128xbf16>, vector<128x128xbf16>, vector<32x128xf32> -> vector<32x128xf32>
    %149 = vector.extract_strided_slice %12 {offsets = [7, 0], sizes = [1, 128], strides = [1, 1]} : vector<12x128xf32> to vector<1x128xf32>
    %150 = vector.broadcast %149 : vector<1x128xf32> to vector<32x128xf32>
    %151 = arith.addf %148, %150 : vector<32x128xf32>
    %152 = vector.shape_cast %151 : vector<32x128xf32> to vector<4x8x128xf32>
    %c0_40 = arith.constant 0 : index
    %c0_41 = arith.constant 0 : index
    %c0_42 = arith.constant 0 : index
    %153 = vector.load %arg8[%c0_40, %c0_41, %c0_42] : memref<4x8x128xf32, #tpu.memory_space<vmem>>, vector<4x8x128xf32>
    tpu.vector_store %arg8[%c0_40, %c0_41, %c0_42], %152 {strides = array<i32>} : memref<4x8x128xf32, #tpu.memory_space<vmem>>, vector<4x8x128xf32>,
    %cst_43 = arith.constant dense<0.000000e+00> : vector<4x128xf32>
    %154 = vector.multi_reduction <add>, %152, %cst_43 [1] : vector<4x8x128xf32> to vector<4x128xf32>
    %cst_44 = arith.constant 8.000000e+00 : f32
    %155 = vector.broadcast %cst_44 : f32 to vector<4x128xf32>
    %156 = arith.divf %154, %155 : vector<4x128xf32>
    %c0_45 = arith.constant 0 : index
    %c0_46 = arith.constant 0 : index
    %c0_47 = arith.constant 0 : index
    %c0_48 = arith.constant 0 : index
    %157 = vector.load %arg7[%c0_45, %c0_46, %c0_47, %c0_48] : memref<1x1x4x128xf32, #tpu.memory_space<vmem>>, vector<1x1x4x128xf32>
    %158 = vector.shape_cast %157 : vector<1x1x4x128xf32> to vector<4x128xf32>
    %159 = vector.shape_cast %156 : vector<4x128xf32> to vector<1x1x4x128xf32>
    tpu.vector_store %arg7[%c0_45, %c0_46, %c0_47, %c0_48], %159 {strides = array<i32>} : memref<1x1x4x128xf32, #tpu.memory_space<vmem>>, vector<1x1x4x128xf32>,
    return
  }
  func.func @transform_0(%arg0: i32, %arg1: i32) -> i32 {
    %c0_i32 = arith.constant 0 : i32
    %c0_i32_0 = arith.constant 0 : i32
    return %c0_i32 : i32
  }
  func.func @transform_1(%arg0: i32, %arg1: i32) -> (i32, i32, i32) {
    %c0_i32 = arith.constant 0 : i32
    %c0_i32_0 = arith.constant 0 : i32
    %c0_i32_1 = arith.constant 0 : i32
    return %arg0, %c0_i32, %c0_i32_0 : i32, i32, i32
  }
  func.func @transform_2(%arg0: i32, %arg1: i32) -> (i32, i32, i32) {
    %c0_i32 = arith.constant 0 : i32
    %c0_i32_0 = arith.constant 0 : i32
    %c0_i32_1 = arith.constant 0 : i32
    return %arg0, %c0_i32, %c0_i32_0 : i32, i32, i32
  }
  func.func @transform_3(%arg0: i32, %arg1: i32) -> (i32, i32, i32) {
    %c0_i32 = arith.constant 0 : i32
    %c0_i32_0 = arith.constant 0 : i32
    %c0_i32_1 = arith.constant 0 : i32
    return %arg1, %c0_i32, %c0_i32_0 : i32, i32, i32
  }
  func.func @transform_4(%arg0: i32, %arg1: i32) -> (i32, i32, i32) {
    %c0_i32 = arith.constant 0 : i32
    %c0_i32_0 = arith.constant 0 : i32
    %c0_i32_1 = arith.constant 0 : i32
    return %arg1, %c0_i32, %c0_i32_0 : i32, i32, i32
  }
  func.func @transform_5(%arg0: i32, %arg1: i32) -> (i32, i32, i32, i32) {
    %c0_i32 = arith.constant 0 : i32
    %c0_i32_0 = arith.constant 0 : i32
    %c0_i32_1 = arith.constant 0 : i32
    return %arg1, %arg0, %c0_i32, %c0_i32_0 : i32, i32, i32, i32
  }
}

module attributes {stable_mosaic.version = 11 : i64} {
  func.func @_decoder_kernel(%arg0: memref<4x4x128xf32, #tpu.memory_space<vmem>>, %arg1: memref<4x128x128xbf16, #tpu.memory_space<vmem>>, %arg2: memref<4x1x128xf32, #tpu.memory_space<vmem>>, %arg3: memref<4x128x128xbf16, #tpu.memory_space<vmem>>, %arg4: memref<4x1x128xf32, #tpu.memory_space<vmem>>, %arg5: memref<4x128xf32, #tpu.memory_space<vmem>>) attributes {dimension_semantics = [], scalar_prefetch = 0 : i64, scratch_operands = 0 : i64, tpu.core_type = #tpu.core_type<tc>} {
    %c0 = arith.constant 0 : index
    %c0_0 = arith.constant 0 : index
    %c0_1 = arith.constant 0 : index
    %0 = vector.load %arg0[%c0, %c0_0, %c0_1] : memref<4x4x128xf32, #tpu.memory_space<vmem>>, vector<4x4x128xf32>
    %1 = arith.truncf %0 : vector<4x4x128xf32> to vector<4x4x128xbf16>
    %c0_2 = arith.constant 0 : index
    %c0_3 = arith.constant 0 : index
    %c0_4 = arith.constant 0 : index
    %2 = vector.load %arg1[%c0_2, %c0_3, %c0_4] : memref<4x128x128xbf16, #tpu.memory_space<vmem>>, vector<4x128x128xbf16>
    %cst = arith.constant dense<0.000000e+00> : vector<4x4x128xf32>
    %3 = tpu.matmul %1, %2, %cst {dimension_numbers = #tpu.dot_dimension_numbers<[2], [1], [1], [2], [0, 0, 0, 1, 1, 2], [0], [0]>} : vector<4x4x128xbf16>, vector<4x128x128xbf16>, vector<4x4x128xf32> -> vector<4x4x128xf32>
    %c0_5 = arith.constant 0 : index
    %c0_6 = arith.constant 0 : index
    %c0_7 = arith.constant 0 : index
    %4 = vector.load %arg2[%c0_5, %c0_6, %c0_7] : memref<4x1x128xf32, #tpu.memory_space<vmem>>, vector<4x1x128xf32>
    %5 = vector.broadcast %4 : vector<4x1x128xf32> to vector<4x4x128xf32>
    %6 = arith.addf %3, %5 : vector<4x4x128xf32>
    %cst_8 = arith.constant 0.000000e+00 : f32
    %7 = vector.broadcast %cst_8 : f32 to vector<4x4x128xf32>
    %8 = arith.maximumf %6, %7 : vector<4x4x128xf32>
    %9 = arith.truncf %8 : vector<4x4x128xf32> to vector<4x4x128xbf16>
    %c0_9 = arith.constant 0 : index
    %c0_10 = arith.constant 0 : index
    %c0_11 = arith.constant 0 : index
    %10 = vector.load %arg3[%c0_9, %c0_10, %c0_11] : memref<4x128x128xbf16, #tpu.memory_space<vmem>>, vector<4x128x128xbf16>
    %cst_12 = arith.constant dense<0.000000e+00> : vector<4x4x128xf32>
    %11 = tpu.matmul %9, %10, %cst_12 {dimension_numbers = #tpu.dot_dimension_numbers<[2], [1], [1], [2], [0, 0, 0, 1, 1, 2], [0], [0]>} : vector<4x4x128xbf16>, vector<4x128x128xbf16>, vector<4x4x128xf32> -> vector<4x4x128xf32>
    %c0_13 = arith.constant 0 : index
    %c0_14 = arith.constant 0 : index
    %c0_15 = arith.constant 0 : index
    %12 = vector.load %arg4[%c0_13, %c0_14, %c0_15] : memref<4x1x128xf32, #tpu.memory_space<vmem>>, vector<4x1x128xf32>
    %13 = vector.broadcast %12 : vector<4x1x128xf32> to vector<4x4x128xf32>
    %14 = arith.addf %11, %13 : vector<4x4x128xf32>
    %cst_16 = arith.constant dense<0xFF800000> : vector<4x4xf32>
    %15 = vector.multi_reduction <maximumf>, %14, %cst_16 [2] : vector<4x4x128xf32> to vector<4x4xf32>
    %16 = vector.shape_cast %15 : vector<4x4xf32> to vector<4x4x1xf32>
    %17 = vector.broadcast %16 : vector<4x4x1xf32> to vector<4x4x128xf32>
    %18 = arith.subf %14, %17 : vector<4x4x128xf32>
    %19 = math.exp %18 : vector<4x4x128xf32>
    %cst_17 = arith.constant dense<0.000000e+00> : vector<4x4xf32>
    %20 = vector.multi_reduction <add>, %19, %cst_17 [2] : vector<4x4x128xf32> to vector<4x4xf32>
    %21 = vector.shape_cast %20 : vector<4x4xf32> to vector<4x4x1xf32>
    %22 = tpu.reciprocal %21 {approx = true} : vector<4x4x1xf32> -> vector<4x4x1xf32>
    %23 = vector.broadcast %22 : vector<4x4x1xf32> to vector<4x4x128xf32>
    %24 = arith.mulf %19, %23 : vector<4x4x128xf32>
    %cst_18 = arith.constant dense<0.000000e+00> : vector<4x128xf32>
    %25 = vector.multi_reduction <add>, %24, %cst_18 [0] : vector<4x4x128xf32> to vector<4x128xf32>
    %cst_19 = arith.constant 2.500000e-01 : f32
    %26 = vector.broadcast %cst_19 : f32 to vector<4x128xf32>
    %27 = arith.mulf %25, %26 : vector<4x128xf32>
    %c0_20 = arith.constant 0 : index
    %c0_21 = arith.constant 0 : index
    %28 = vector.load %arg5[%c0_20, %c0_21] : memref<4x128xf32, #tpu.memory_space<vmem>>, vector<4x128xf32>
    tpu.vector_store %arg5[%c0_20, %c0_21], %27 {strides = array<i32>} : memref<4x128xf32, #tpu.memory_space<vmem>>, vector<4x128xf32>,
    return
  }
}

</mosaic_0001>

<llo_original>
// kernel: transformer_forward.3
$region0: #{transformer_forward.3}
  #allocation0 [shape = 'u32[]', space=smem, size = 0x4, offset = 0x4, fixed_abs, tag = 'smem constant byte address 0x4 - core index']
  #allocation1 [shape = 'u32[144,128]{1,0:T(1,128)}', space=vmem, size = 0x12000, scoped, tag = 'internal scratch']
  #allocation2 [shape = 'f32[1]{0:T(128)S(6)}', space=smem, size = 0x200, scoped, tag = 'scoped memory for transformer_forward.3']
  %s0 = inlined_call_operand.<no memory space> [shape: f32[1], index: 0, kind: input, shape index: {}]
  %s1 = inlined_call_operand.vmem [shape: f32[4,8,128], index: 1, kind: input, shape index: {}]
  %s2 = inlined_call_operand.hbm [shape: bf16[128,640], index: 2, kind: input, shape index: {}]
  %s3 = inlined_call_operand.vmem [shape: f32[9,128], index: 3, kind: input, shape index: {}]
  %s4 = inlined_call_operand.vmem [shape: f32[4,8,128], index: 4, kind: output, shape index: {0}]
  %s5 = inlined_call_operand.vmem [shape: f32[1,4,128], index: 5, kind: output, shape index: {1}]
  %s6 = inlined_call_operand.vmem [shape: f32[1,4,128], index: 6, kind: output, shape index: {2}]
  %7 = xla_tuple %s4, %s5, %s6
  %s8 = sld [smem:[#allocation0]]
  $region46: #{transformer_forward.3} parent=0
    _
  %s10 = ssub.s32 1, %s8
  %s11 = scalar_select 0, %s10, %s8
  %12 = sst [smem:[#allocation2]] %s0
  $region1: #{transformer_forward.3} parent=0
    #allocation3 [shape = 'u8[163840]{0}', space=vmem, size = 0x28000, scoped, tag = 'input window, operand 2, single buffered']
    #allocation4 [shape = 's32[1]{0}', space=sflag, size = 0x4, scoped, tag = 'scoped memory for transformer_forward.3']
    %13 = vsyncpa [#allocation4], 0
    // Predicated region
    $region2: #{transformer_forward.3} parent=1 // pred_check
      _
    $region3: #{transformer_forward.3} parent=1 // pred_check_branch
      %15 = sbr.rel (0) target = $region5
    $region4: #{transformer_forward.3} parent=1 // pred_region
      _
    $region5: #{transformer_forward.3} parent=1 // pred_fallthru
      _
    // Predicated region
    $region6: #{transformer_forward.3} parent=1 // pred_check
      _
    $region7: #{transformer_forward.3} parent=1 // pred_check_branch
      %17 = sbr.rel (0) target = $region9
    $region8: #{transformer_forward.3} parent=1 // pred_region
      _
    $region9: #{transformer_forward.3} parent=1 // pred_fallthru
      _
    // Predicated region
    $region10: #{transformer_forward.3} parent=1 // pred_check
      _
    $region11: #{transformer_forward.3} parent=1 // pred_check_branch
      %19 = sbr.rel (0) target = $region13
    $region12: #{transformer_forward.3} parent=1 // pred_region
      %s21 = ssub.s32 5120, 5120
      %22 = vsyncadd [#allocation4], %s21
      %s23 = sshll.u32 [#allocation3], 4
      %s24 = int_to_ptr.vmem [resolvable:$true] %s23
      %29 = dma.hbm_to_vmem [thread:$0]  %s2, 5120, %s24, [#allocation4], 320, 320, 20
    $region13: #{transformer_forward.3} parent=1 // pred_fallthru
      _
    // Predicated region
    $region14: #{transformer_forward.3} parent=1 // pred_check
      _
    $region15: #{transformer_forward.3} parent=1 // pred_check_branch
      %31 = sbr.rel (0) target = $region17
    $region16: #{transformer_forward.3} parent=1 // pred_region
      _
    $region17: #{transformer_forward.3} parent=1 // pred_fallthru
      _
    // Predicated region
    $region18: #{transformer_forward.3} parent=1 // pred_check
      _
    $region19: #{transformer_forward.3} parent=1 // pred_check_branch
      %33 = sbr.rel (0) target = $region21
    $region20: #{transformer_forward.3} parent=1 // pred_region
      %34 = dma.done [#allocation4], 5120
    $region21: #{transformer_forward.3} parent=1 // pred_fallthru
      _
    %s36 = sld [smem:[#allocation2]]
    %v37 = vld [vmem:[%s1] sm:$0xff]
    %v38 = vld [vmem:[%s1 + $0x8] sm:$0xff]
    %v39 = vld [vmem:[%s1 + $0x10] sm:$0xff]
    %v40 = vld [vmem:[%s1 + $0x18] sm:$0xff]
    %v41 = vpack.c.bf16 %v38, %v37
    %v42 = vpack.c.bf16 %v40, %v39
    %v43 = vld [vmem:[%s3] sm:$0xff]
    %v44 = vld [vmem:[%s3 + $0x8] sm:$0x1]
    %v45 = vld [vmem:[#allocation3] sm:$0xff]
    %v46 = vld [vmem:[#allocation3 + $0x8] sm:$0xf]
    %v47 = vld [vmem:[#allocation3 + $0x14] sm:$0xff]
    %v48 = vld [vmem:[#allocation3 + $0x1c] sm:$0xf]
    %v49 = vld [vmem:[#allocation3 + $0x28] sm:$0xff]
    %v50 = vld [vmem:[#allocation3 + $0x30] sm:$0xf]
    %v51 = vld [vmem:[#allocation3 + $0x3c] sm:$0xff]
    %v52 = vld [vmem:[#allocation3 + $0x44] sm:$0xf]
    %v53 = vld [vmem:[#allocation3 + $0x50] sm:$0xff]
    %v54 = vld [vmem:[#allocation3 + $0x58] sm:$0xf]
    %v55 = vld [vmem:[#allocation3 + $0x64] sm:$0xff]
    %v56 = vld [vmem:[#allocation3 + $0x6c] sm:$0xf]
    %v57 = vld [vmem:[#allocation3 + $0x78] sm:$0xff]
    %v58 = vld [vmem:[#allocation3 + $0x80] sm:$0xf]
    %v59 = vld [vmem:[#allocation3 + $0x8c] sm:$0xff]
    %v60 = vld [vmem:[#allocation3 + $0x94] sm:$0xf]
    %v61 = vld [vmem:[#allocation3 + $0xa0] sm:$0xff]
    %v62 = vld [vmem:[#allocation3 + $0xa8] sm:$0xf]
    %v63 = vld [vmem:[#allocation3 + $0xb4] sm:$0xff]
    %v64 = vld [vmem:[#allocation3 + $0xbc] sm:$0xf]
    %v65 = vld [vmem:[#allocation3 + $0xc8] sm:$0xff]
    %v66 = vld [vmem:[#allocation3 + $0xd0] sm:$0xf]
    %v67 = vld [vmem:[#allocation3 + $0xdc] sm:$0xff]
    %v68 = vld [vmem:[#allocation3 + $0xe4] sm:$0xf]
    %v69 = vld [vmem:[#allocation3 + $0xf0] sm:$0xff]
    %v70 = vld [vmem:[#allocation3 + $0xf8] sm:$0xf]
    %v71 = vld [vmem:[#allocation3 + $0x104] sm:$0xff]
    %v72 = vld [vmem:[#allocation3 + $0x10c] sm:$0xf]
    %v73 = vld [vmem:[#allocation3 + $0x118] sm:$0xff]
    %v74 = vld [vmem:[#allocation3 + $0x120] sm:$0xf]
    %v75 = vld [vmem:[#allocation3 + $0x12c] sm:$0xff]
    %v76 = vld [vmem:[#allocation3 + $0x134] sm:$0xf]
    %v109 = vunpack.c.l.b16 %v45
    %v110 = vunpack.c.h.b16 %v45
    %v111 = vunpack.c.l.b16 %v46
    %v112 = vunpack.c.l.b16 %v47
    %v113 = vunpack.c.h.b16 %v47
    %v114 = vunpack.c.l.b16 %v48
    %v115 = vunpack.c.l.b16 %v49
    %v116 = vunpack.c.h.b16 %v49
    %v117 = vunpack.c.l.b16 %v50
    %v118 = vunpack.c.l.b16 %v51
    %v119 = vunpack.c.h.b16 %v51
    %v120 = vunpack.c.l.b16 %v52
    %v121 = vunpack.c.l.b16 %v53
    %v122 = vunpack.c.h.b16 %v53
    %v123 = vunpack.c.l.b16 %v54
    %v124 = vunpack.c.l.b16 %v55
    %v125 = vunpack.c.h.b16 %v55
    %v126 = vunpack.c.l.b16 %v56
    %v127 = vunpack.c.l.b16 %v57
    %v128 = vunpack.c.h.b16 %v57
    %v129 = vunpack.c.l.b16 %v58
    %v130 = vunpack.c.l.b16 %v59
    %v131 = vunpack.c.h.b16 %v59
    %v132 = vunpack.c.l.b16 %v60
    %v133 = vunpack.c.l.b16 %v61
    %v134 = vunpack.c.h.b16 %v61
    %v135 = vunpack.c.l.b16 %v62
    %v136 = vunpack.c.l.b16 %v63
    %v137 = vunpack.c.h.b16 %v63
    %v138 = vunpack.c.l.b16 %v64
    %v139 = vunpack.c.l.b16 %v65
    %v140 = vunpack.c.h.b16 %v65
    %v141 = vunpack.c.l.b16 %v66
    %v142 = vunpack.c.l.b16 %v67
    %v143 = vunpack.c.h.b16 %v67
    %v144 = vunpack.c.l.b16 %v68
    %v145 = vunpack.c.l.b16 %v69
    %v146 = vunpack.c.h.b16 %v69
    %v147 = vunpack.c.l.b16 %v70
    %v148 = vunpack.c.l.b16 %v71
    %v149 = vunpack.c.h.b16 %v71
    %v150 = vunpack.c.l.b16 %v72
    %v151 = vunpack.c.l.b16 %v73
    %v152 = vunpack.c.h.b16 %v73
    %v153 = vunpack.c.l.b16 %v74
    %v154 = vunpack.c.l.b16 %v75
    %v155 = vunpack.c.h.b16 %v75
    %v156 = vunpack.c.l.b16 %v76
    %v157 = vpack.c.b16 %v112, %v109
    %v158 = vpack.c.b16 %v113, %v110
    %v159 = vpack.c.b16 %v114, %v111
    %v160 = vpack.c.b16 %v118, %v115
    %v161 = vpack.c.b16 %v119, %v116
    %v162 = vpack.c.b16 %v120, %v117
    %v163 = vpack.c.b16 %v124, %v121
    %v164 = vpack.c.b16 %v125, %v122
    %v165 = vpack.c.b16 %v126, %v123
    %v166 = vpack.c.b16 %v130, %v127
    %v167 = vpack.c.b16 %v131, %v128
    %v168 = vpack.c.b16 %v132, %v129
    %v169 = vpack.c.b16 %v136, %v133
    %v170 = vpack.c.b16 %v137, %v134
    %v171 = vpack.c.b16 %v138, %v135
    %v172 = vpack.c.b16 %v142, %v139
    %v173 = vpack.c.b16 %v143, %v140
    %v174 = vpack.c.b16 %v144, %v141
    %v175 = vpack.c.b16 %v148, %v145
    %v176 = vpack.c.b16 %v149, %v146
    %v177 = vpack.c.b16 %v150, %v147
    %v178 = vpack.c.b16 %v154, %v151
    %v179 = vpack.c.b16 %v155, %v152
    %v180 = vpack.c.b16 %v156, %v153
    %205 = vmatprep.subr.bf16.mxu0 %v158
    %206 = vmatpush1.bf16.msra.mxu0 %v157
    %207 = vmatprep.subr.bf16.mxu0 %v161
    %208 = vmatpush1.bf16.msra.mxu0 %v160
    %209 = vmatprep.subr.bf16.mxu0 %v164
    %210 = vmatpush1.bf16.msra.mxu0 %v163
    %211 = vmatprep.subr.bf16.mxu0 %v167
    %212 = vmatpush1.bf16.msra.mxu0 %v166
    %213 = vmatprep.subr.bf16.mxu0 %v170
    %214 = vmatpush1.bf16.msra.mxu0 %v169
    %215 = vmatprep.subr.bf16.mxu0 %v173
    %216 = vmatpush1.bf16.msra.mxu0 %v172
    %217 = vmatprep.subr.bf16.mxu0 %v176
    %218 = vmatpush1.bf16.msra.mxu0 %v175
    %219 = vmatprep.subr.bf16.mxu0 %v179
    %220 = vmatpush1.bf16.msra.mxu0 %v178
    %221 = vmatprep.subr.bf16.mxu0 0
    %222 = vmatpush1.bf16.msra.mxu0 0
    %223 = vmatprep.subr.bf16.mxu0 0
    %224 = vmatpush1.bf16.msra.mxu0 0
    %225 = vmatprep.subr.bf16.mxu0 0
    %226 = vmatpush1.bf16.msra.mxu0 0
    %227 = vmatprep.subr.bf16.mxu0 0
    %228 = vmatpush1.bf16.msra.mxu0 0
    %229 = vmatprep.subr.bf16.mxu0 0
    %230 = vmatpush1.bf16.msra.mxu0 0
    %231 = vmatprep.subr.bf16.mxu0 0
    %232 = vmatpush1.bf16.msra.mxu0 0
    %233 = vmatprep.subr.bf16.mxu0 0
    %234 = vmatpush1.bf16.msra.mxu0 0
    %235 = vmatprep.subr.bf16.mxu0 0
    %236 = vmatpush1.bf16.msra.mxu0 0
    %237 = vmatprep.mubr.bf16.mxu0 0
    %238 = vmatmul.mubr.bf16.gmra.mrb[0].mxu0 %v41
    %v239 = vpop.f32.mrb[0].mxu0
    %v240 = vadd.f32 0.0, %v239
    %v241 = vpop.f32.mrb[0].mxu0
    %v242 = vadd.f32 0.0, %v241
    %v243 = vpop.f32.mrb[0].mxu0
    %v244 = vadd.f32 0.0, %v243
    %v245 = vpop.f32.mrb[0].mxu0
    %v246 = vadd.f32 0.0, %v245
    %247 = vmatprep.mubr.bf16.mxu0 0
    %248 = vmatmul.mubr.bf16.gmra.mrb[0].mxu0 %v42
    %v249 = vpop.f32.mrb[0].mxu0
    %v250 = vadd.f32 0.0, %v249
    %v251 = vpop.f32.mrb[0].mxu0
    %v252 = vadd.f32 0.0, %v251
    %v253 = vpop.f32.mrb[0].mxu0
    %v254 = vadd.f32 0.0, %v253
    %v255 = vpop.f32.mrb[0].mxu0
    %v256 = vadd.f32 0.0, %v255
    %257 = vdwg.mxu0
    %258 = vmatprep.subr.bf16.mxu0 0
    %259 = vmatpush1.bf16.msra.mxu0 %v159
    %260 = vmatprep.subr.bf16.mxu0 0
    %261 = vmatpush1.bf16.msra.mxu0 %v162
    %262 = vmatprep.subr.bf16.mxu0 0
    %263 = vmatpush1.bf16.msra.mxu0 %v165
    %264 = vmatprep.subr.bf16.mxu0 0
    %265 = vmatpush1.bf16.msra.mxu0 %v168
    %266 = vmatprep.subr.bf16.mxu0 0
    %267 = vmatpush1.bf16.msra.mxu0 %v171
    %268 = vmatprep.subr.bf16.mxu0 0
    %269 = vmatpush1.bf16.msra.mxu0 %v174
    %270 = vmatprep.subr.bf16.mxu0 0
    %271 = vmatpush1.bf16.msra.mxu0 %v177
    %272 = vmatprep.subr.bf16.mxu0 0
    %273 = vmatpush1.bf16.msra.mxu0 %v180
    %274 = vmatprep.subr.bf16.mxu0 0
    %275 = vmatpush1.bf16.msra.mxu0 0
    %276 = vmatprep.subr.bf16.mxu0 0
    %277 = vmatpush1.bf16.msra.mxu0 0
    %278 = vmatprep.subr.bf16.mxu0 0
    %279 = vmatpush1.bf16.msra.mxu0 0
    %280 = vmatprep.subr.bf16.mxu0 0
    %281 = vmatpush1.bf16.msra.mxu0 0
    %282 = vmatprep.subr.bf16.mxu0 0
    %283 = vmatpush1.bf16.msra.mxu0 0
    %284 = vmatprep.subr.bf16.mxu0 0
    %285 = vmatpush1.bf16.msra.mxu0 0
    %286 = vmatprep.subr.bf16.mxu0 0
    %287 = vmatpush1.bf16.msra.mxu0 0
    %288 = vmatprep.subr.bf16.mxu0 0
    %289 = vmatpush1.bf16.msra.mxu0 0
    %290 = vmatprep.mubr.bf16.mxu0 0
    %291 = vmatmul.mubr.bf16.gmra.mrb[0].mxu0 %v41
    %v292 = vpop.f32.mrb[0].mxu0
    %v293 = vadd.f32 0.0, %v292
    %v294 = vpop.f32.mrb[0].mxu0
    %v295 = vpop.f32.mrb[0].mxu0
    %v296 = vadd.f32 0.0, %v295
    %v297 = vpop.f32.mrb[0].mxu0
    %298 = vmatprep.mubr.bf16.mxu0 0
    %299 = vmatmul.mubr.bf16.gmra.mrb[0].mxu0 %v42
    %v300 = vpop.f32.mrb[0].mxu0
    %v301 = vadd.f32 0.0, %v300
    %v302 = vpop.f32.mrb[0].mxu0
    %v303 = vpop.f32.mrb[0].mxu0
    %v304 = vadd.f32 0.0, %v303
    %v305 = vpop.f32.mrb[0].mxu0
    %306 = vdwg.mxu0
    %v307 = vlaneseq
    %v308 = vshrl.u32 %v307, 7
    %v309 = vsub.s32 0, %v308
    %v310 = vrot.slane %v43, %v309
    %v311 = vadd.f32 %v240, %v310
    %v312 = vadd.f32 %v244, %v310
    %v313 = vadd.f32 %v250, %v310
    %v314 = vadd.f32 %v254, %v310
    %v315 = vlaneseq
    %v316 = vshrl.u32 %v315, 7
    %v317 = vsub.s32 1, %v316
    %v318 = vrot.slane %v43, %v317
    %v319 = vadd.f32 %v242, %v318
    %v320 = vadd.f32 %v246, %v318
    %v321 = vadd.f32 %v252, %v318
    %v322 = vadd.f32 %v256, %v318
    %v323 = vlaneseq
    %v324 = vshrl.u32 %v323, 7
    %v325 = vsub.s32 2, %v324
    %v326 = vrot.slane %v43, %v325
    %v327 = vadd.f32 %v293, %v326
    %v328 = vadd.f32 %v296, %v326
    %v329 = vadd.f32 %v301, %v326
    %v330 = vadd.f32 %v304, %v326
    %v331 = vpack.c.bf16 %v311, %v311
    %v332 = vpack.c.bf16 %v312, %v312
    %v333 = vpack.c.bf16 %v313, %v313
    %v334 = vpack.c.bf16 %v314, %v314
    %v335 = vpack.c.bf16 %v319, %v319
    %v336 = vpack.c.bf16 %v320, %v320
    %v337 = vpack.c.bf16 %v321, %v321
    %v338 = vpack.c.bf16 %v322, %v322
    %339 = vmatprep.subr.bf16.mxu0 0
    %340 = vmatpush1.bf16.xpose.msra.mxu0 %v335
    %341 = vmatprep.subr.bf16.mxu0 0
    %342 = vmatpush1.bf16.xpose.msra.mxu0 0
    %343 = vmatprep.subr.bf16.mxu0 0
    %344 = vmatpush1.bf16.xpose.msra.mxu0 0
    %345 = vmatprep.subr.bf16.mxu0 0
    %346 = vmatpush1.bf16.xpose.msra.mxu0 0
    %347 = vmatprep.subr.bf16.mxu0 0
    %348 = vmatpush1.bf16.xpose.msra.mxu0 0
    %349 = vmatprep.subr.bf16.mxu0 0
    %350 = vmatpush1.bf16.xpose.msra.mxu0 0
    %351 = vmatprep.subr.bf16.mxu0 0
    %352 = vmatpush1.bf16.xpose.msra.mxu0 0
    %353 = vmatprep.subr.bf16.mxu0 0
    %354 = vmatpush1.bf16.xpose.msra.mxu0 0
    %355 = vmatprep.subr.bf16.mxu0 0
    %356 = vmatpush1.bf16.xpose.msra.mxu0 0
    %357 = vmatprep.subr.bf16.mxu0 0
    %358 = vmatpush1.bf16.xpose.msra.mxu0 0
    %359 = vmatprep.subr.bf16.mxu0 0
    %360 = vmatpush1.bf16.xpose.msra.mxu0 0
    %361 = vmatprep.subr.bf16.mxu0 0
    %362 = vmatpush1.bf16.xpose.msra.mxu0 0
    %363 = vmatprep.subr.bf16.mxu0 0
    %364 = vmatpush1.bf16.xpose.msra.mxu0 0
    %365 = vmatprep.subr.bf16.mxu0 0
    %366 = vmatpush1.bf16.xpose.msra.mxu0 0
    %367 = vmatprep.subr.bf16.mxu0 0
    %368 = vmatpush1.bf16.xpose.msra.mxu0 0
    %369 = vmatprep.subr.bf16.mxu0 0
    %370 = vmatpush1.bf16.xpose.msra.mxu0 0
    %371 = vmatprep.mubr.bf16.mxu0 0
    %372 = vmatmul.mubr.bf16.gmra.mrb[0].mxu0 %v331
    %v373 = vpop.f32.mrb[0].mxu0
    %v374 = vadd.f32 0.0, %v373
    %v375 = vpop.f32.mrb[0].mxu0
    %v376 = vpop.f32.mrb[0].mxu0
    %v377 = vpop.f32.mrb[0].mxu0
    %378 = vdwg.mxu0
    %379 = vmatprep.subr.bf16.mxu0 0
    %380 = vmatpush1.bf16.xpose.msra.mxu0 %v336
    %381 = vmatprep.subr.bf16.mxu0 0
    %382 = vmatpush1.bf16.xpose.msra.mxu0 0
    %383 = vmatprep.subr.bf16.mxu0 0
    %384 = vmatpush1.bf16.xpose.msra.mxu0 0
    %385 = vmatprep.subr.bf16.mxu0 0
    %386 = vmatpush1.bf16.xpose.msra.mxu0 0
    %387 = vmatprep.subr.bf16.mxu0 0
    %388 = vmatpush1.bf16.xpose.msra.mxu0 0
    %389 = vmatprep.subr.bf16.mxu0 0
    %390 = vmatpush1.bf16.xpose.msra.mxu0 0
    %391 = vmatprep.subr.bf16.mxu0 0
    %392 = vmatpush1.bf16.xpose.msra.mxu0 0
    %393 = vmatprep.subr.bf16.mxu0 0
    %394 = vmatpush1.bf16.xpose.msra.mxu0 0
    %395 = vmatprep.subr.bf16.mxu0 0
    %396 = vmatpush1.bf16.xpose.msra.mxu0 0
    %397 = vmatprep.subr.bf16.mxu0 0
    %398 = vmatpush1.bf16.xpose.msra.mxu0 0
    %399 = vmatprep.subr.bf16.mxu0 0
    %400 = vmatpush1.bf16.xpose.msra.mxu0 0
    %401 = vmatprep.subr.bf16.mxu0 0
    %402 = vmatpush1.bf16.xpose.msra.mxu0 0
    %403 = vmatprep.subr.bf16.mxu0 0
    %404 = vmatpush1.bf16.xpose.msra.mxu0 0
    %405 = vmatprep.subr.bf16.mxu0 0
    %406 = vmatpush1.bf16.xpose.msra.mxu0 0
    %407 = vmatprep.subr.bf16.mxu0 0
    %408 = vmatpush1.bf16.xpose.msra.mxu0 0
    %409 = vmatprep.subr.bf16.mxu0 0
    %410 = vmatpush1.bf16.xpose.msra.mxu0 0
    %411 = vmatprep.mubr.bf16.mxu0 0
    %412 = vmatmul.mubr.bf16.gmra.mrb[0].mxu0 %v332
    %v413 = vpop.f32.mrb[0].mxu0
    %v414 = vadd.f32 0.0, %v413
    %v415 = vpop.f32.mrb[0].mxu0
    %v416 = vpop.f32.mrb[0].mxu0
    %v417 = vpop.f32.mrb[0].mxu0
    %418 = vdwg.mxu0
    %419 = vmatprep.subr.bf16.mxu0 0
    %420 = vmatpush1.bf16.xpose.msra.mxu0 %v337
    %421 = vmatprep.subr.bf16.mxu0 0
    %422 = vmatpush1.bf16.xpose.msra.mxu0 0
    %423 = vmatprep.subr.bf16.mxu0 0
    %424 = vmatpush1.bf16.xpose.msra.mxu0 0
    %425 = vmatprep.subr.bf16.mxu0 0
    %426 = vmatpush1.bf16.xpose.msra.mxu0 0
    %427 = vmatprep.subr.bf16.mxu0 0
    %428 = vmatpush1.bf16.xpose.msra.mxu0 0
    %429 = vmatprep.subr.bf16.mxu0 0
    %430 = vmatpush1.bf16.xpose.msra.mxu0 0
    %431 = vmatprep.subr.bf16.mxu0 0
    %432 = vmatpush1.bf16.xpose.msra.mxu0 0
    %433 = vmatprep.subr.bf16.mxu0 0
    %434 = vmatpush1.bf16.xpose.msra.mxu0 0
    %435 = vmatprep.subr.bf16.mxu0 0
    %436 = vmatpush1.bf16.xpose.msra.mxu0 0
    %437 = vmatprep.subr.bf16.mxu0 0
    %438 = vmatpush1.bf16.xpose.msra.mxu0 0
    %439 = vmatprep.subr.bf16.mxu0 0
    %440 = vmatpush1.bf16.xpose.msra.mxu0 0
    %441 = vmatprep.subr.bf16.mxu0 0
    %442 = vmatpush1.bf16.xpose.msra.mxu0 0
    %443 = vmatprep.subr.bf16.mxu0 0
    %444 = vmatpush1.bf16.xpose.msra.mxu0 0
    %445 = vmatprep.subr.bf16.mxu0 0
    %446 = vmatpush1.bf16.xpose.msra.mxu0 0
    %447 = vmatprep.subr.bf16.mxu0 0
    %448 = vmatpush1.bf16.xpose.msra.mxu0 0
    %449 = vmatprep.subr.bf16.mxu0 0
    %450 = vmatpush1.bf16.xpose.msra.mxu0 0
    %451 = vmatprep.mubr.bf16.mxu0 0
    %452 = vmatmul.mubr.bf16.gmra.mrb[0].mxu0 %v333
    %v453 = vpop.f32.mrb[0].mxu0
    %v454 = vadd.f32 0.0, %v453
    %v455 = vpop.f32.mrb[0].mxu0
    %v456 = vpop.f32.mrb[0].mxu0
    %v457 = vpop.f32.mrb[0].mxu0
    %458 = vdwg.mxu0
    %459 = vmatprep.subr.bf16.mxu0 0
    %460 = vmatpush1.bf16.xpose.msra.mxu0 %v338
    %461 = vmatprep.subr.bf16.mxu0 0
    %462 = vmatpush1.bf16.xpose.msra.mxu0 0
    %463 = vmatprep.subr.bf16.mxu0 0
    %464 = vmatpush1.bf16.xpose.msra.mxu0 0
    %465 = vmatprep.subr.bf16.mxu0 0
    %466 = vmatpush1.bf16.xpose.msra.mxu0 0
    %467 = vmatprep.subr.bf16.mxu0 0
    %468 = vmatpush1.bf16.xpose.msra.mxu0 0
    %469 = vmatprep.subr.bf16.mxu0 0
    %470 = vmatpush1.bf16.xpose.msra.mxu0 0
    %471 = vmatprep.subr.bf16.mxu0 0
    %472 = vmatpush1.bf16.xpose.msra.mxu0 0
    %473 = vmatprep.subr.bf16.mxu0 0
    %474 = vmatpush1.bf16.xpose.msra.mxu0 0
    %475 = vmatprep.subr.bf16.mxu0 0
    %476 = vmatpush1.bf16.xpose.msra.mxu0 0
    %477 = vmatprep.subr.bf16.mxu0 0
    %478 = vmatpush1.bf16.xpose.msra.mxu0 0
    %479 = vmatprep.subr.bf16.mxu0 0
    %480 = vmatpush1.bf16.xpose.msra.mxu0 0
    %481 = vmatprep.subr.bf16.mxu0 0
    %482 = vmatpush1.bf16.xpose.msra.mxu0 0
    %483 = vmatprep.subr.bf16.mxu0 0
    %484 = vmatpush1.bf16.xpose.msra.mxu0 0
    %485 = vmatprep.subr.bf16.mxu0 0
    %486 = vmatpush1.bf16.xpose.msra.mxu0 0
    %487 = vmatprep.subr.bf16.mxu0 0
    %488 = vmatpush1.bf16.xpose.msra.mxu0 0
    %489 = vmatprep.subr.bf16.mxu0 0
    %490 = vmatpush1.bf16.xpose.msra.mxu0 0
    %491 = vmatprep.mubr.bf16.mxu0 0
    %492 = vmatmul.mubr.bf16.gmra.mrb[0].mxu0 %v334
    %v493 = vpop.f32.mrb[0].mxu0
    %v494 = vadd.f32 0.0, %v493
    %v495 = vpop.f32.mrb[0].mxu0
    %v496 = vpop.f32.mrb[0].mxu0
    %v497 = vpop.f32.mrb[0].mxu0
    %498 = vdwg.mxu0
    %vm499 = vcmask 64512
    %v500 = vsel %vm499, %v374, -inf
    %501 = vmax.xlane.f32.xlu0 %v500
    %v502 = vpop.xlane.xlu0 %501
    %v503 = vsel %vm499, %v414, -inf
    %504 = vmax.xlane.f32.xlu0 %v503
    %v505 = vpop.xlane.xlu0 %504
    %v506 = vsel %vm499, %v454, -inf
    %507 = vmax.xlane.f32.xlu0 %v506
    %v508 = vpop.xlane.xlu0 %507
    %v509 = vsel %vm499, %v494, -inf
    %510 = vmax.xlane.f32.xlu0 %v509
    %v511 = vpop.xlane.xlu0 %510
    %v512 = vsub.f32 %v374, %v502
    %v513 = vsub.f32 %v414, %v505
    %v514 = vsub.f32 %v454, %v508
    %v515 = vsub.f32 %v494, %v511
    %v516 = vmul.f32 %v512, 1.442695
    %v517 = vpow.pop %v516
    %v518 = vmul.f32 %v513, 1.442695
    %v519 = vpow.pop %v518
    %v520 = vmul.f32 %v514, 1.442695
    %v521 = vpow.pop %v520
    %v522 = vmul.f32 %v515, 1.442695
    %v523 = vpow.pop %v522
    %v524 = vsel %vm499, %v517, 0.0
    %525 = vadd.xlane.f32.xlu0 %v524
    %v526 = vpop.xlane.xlu0 %525
    %v527 = vsel %vm499, %v519, 0.0
    %528 = vadd.xlane.f32.xlu0 %v527
    %v529 = vpop.xlane.xlu0 %528
    %v530 = vsel %vm499, %v521, 0.0
    %531 = vadd.xlane.f32.xlu0 %v530
    %v532 = vpop.xlane.xlu0 %531
    %v533 = vsel %vm499, %v523, 0.0
    %534 = vadd.xlane.f32.xlu0 %v533
    %v535 = vpop.xlane.xlu0 %534
    %v536 = vrcp.pop %v526
    %v537 = vrcp.pop %v529
    %v538 = vrcp.pop %v532
    %v539 = vrcp.pop %v535
    %v540 = vmul.f32 %v517, %v536
    %v541 = vmul.f32 %v519, %v537
    %v542 = vmul.f32 %v521, %v538
    %v543 = vmul.f32 %v523, %v539
    %v544 = vpack.c.bf16 %v540, %v540
    %v545 = vpack.c.bf16 %v541, %v541
    %v546 = vpack.c.bf16 %v542, %v542
    %v547 = vpack.c.bf16 %v543, %v543
    %v548 = vpack.c.bf16 %v327, %v327
    %v549 = vpack.c.bf16 %v328, %v328
    %v550 = vpack.c.bf16 %v329, %v329
    %v551 = vpack.c.bf16 %v330, %v330
    %v553 = vsel %vm499, %v544, 0
    %vm555 = vcmask 1043456
    %v557 = vsel %vm555, %v548, 0
    %559 = vmatprep.subr.bf16.mxu0 0
    %560 = vmatpush1.bf16.msra.mxu0 %v557
    %561 = vmatprep.subr.bf16.mxu0 0
    %562 = vmatpush1.bf16.msra.mxu0 0
    %563 = vmatprep.subr.bf16.mxu0 0
    %564 = vmatpush1.bf16.msra.mxu0 0
    %565 = vmatprep.subr.bf16.mxu0 0
    %566 = vmatpush1.bf16.msra.mxu0 0
    %567 = vmatprep.subr.bf16.mxu0 0
    %568 = vmatpush1.bf16.msra.mxu0 0
    %569 = vmatprep.subr.bf16.mxu0 0
    %570 = vmatpush1.bf16.msra.mxu0 0
    %571 = vmatprep.subr.bf16.mxu0 0
    %572 = vmatpush1.bf16.msra.mxu0 0
    %573 = vmatprep.subr.bf16.mxu0 0
    %574 = vmatpush1.bf16.msra.mxu0 0
    %575 = vmatprep.subr.bf16.mxu0 0
    %576 = vmatpush1.bf16.msra.mxu0 0
    %577 = vmatprep.subr.bf16.mxu0 0
    %578 = vmatpush1.bf16.msra.mxu0 0
    %579 = vmatprep.subr.bf16.mxu0 0
    %580 = vmatpush1.bf16.msra.mxu0 0
    %581 = vmatprep.subr.bf16.mxu0 0
    %582 = vmatpush1.bf16.msra.mxu0 0
    %583 = vmatprep.subr.bf16.mxu0 0
    %584 = vmatpush1.bf16.msra.mxu0 0
    %585 = vmatprep.subr.bf16.mxu0 0
    %586 = vmatpush1.bf16.msra.mxu0 0
    %587 = vmatprep.subr.bf16.mxu0 0
    %588 = vmatpush1.bf16.msra.mxu0 0
    %589 = vmatprep.subr.bf16.mxu0 0
    %590 = vmatpush1.bf16.msra.mxu0 0
    %591 = vmatprep.mubr.bf16.mxu0 0
    %592 = vmatmul.mubr.bf16.gmra.mrb[0].mxu0 %v553
    %v593 = vpop.f32.mrb[0].mxu0
    %v594 = vadd.f32 0.0, %v593
    %v595 = vpop.f32.mrb[0].mxu0
    %v596 = vpop.f32.mrb[0].mxu0
    %v597 = vpop.f32.mrb[0].mxu0
    %598 = vdwg.mxu0
    %v600 = vsel %vm499, %v545, 0
    %v603 = vsel %vm555, %v549, 0
    %605 = vmatprep.subr.bf16.mxu0 0
    %606 = vmatpush1.bf16.msra.mxu0 %v603
    %607 = vmatprep.subr.bf16.mxu0 0
    %608 = vmatpush1.bf16.msra.mxu0 0
    %609 = vmatprep.subr.bf16.mxu0 0
    %610 = vmatpush1.bf16.msra.mxu0 0
    %611 = vmatprep.subr.bf16.mxu0 0
    %612 = vmatpush1.bf16.msra.mxu0 0
    %613 = vmatprep.subr.bf16.mxu0 0
    %614 = vmatpush1.bf16.msra.mxu0 0
    %615 = vmatprep.subr.bf16.mxu0 0
    %616 = vmatpush1.bf16.msra.mxu0 0
    %617 = vmatprep.subr.bf16.mxu0 0
    %618 = vmatpush1.bf16.msra.mxu0 0
    %619 = vmatprep.subr.bf16.mxu0 0
    %620 = vmatpush1.bf16.msra.mxu0 0
    %621 = vmatprep.subr.bf16.mxu0 0
    %622 = vmatpush1.bf16.msra.mxu0 0
    %623 = vmatprep.subr.bf16.mxu0 0
    %624 = vmatpush1.bf16.msra.mxu0 0
    %625 = vmatprep.subr.bf16.mxu0 0
    %626 = vmatpush1.bf16.msra.mxu0 0
    %627 = vmatprep.subr.bf16.mxu0 0
    %628 = vmatpush1.bf16.msra.mxu0 0
    %629 = vmatprep.subr.bf16.mxu0 0
    %630 = vmatpush1.bf16.msra.mxu0 0
    %631 = vmatprep.subr.bf16.mxu0 0
    %632 = vmatpush1.bf16.msra.mxu0 0
    %633 = vmatprep.subr.bf16.mxu0 0
    %634 = vmatpush1.bf16.msra.mxu0 0
    %635 = vmatprep.subr.bf16.mxu0 0
    %636 = vmatpush1.bf16.msra.mxu0 0
    %637 = vmatprep.mubr.bf16.mxu0 0
    %638 = vmatmul.mubr.bf16.gmra.mrb[0].mxu0 %v600
    %v639 = vpop.f32.mrb[0].mxu0
    %v640 = vadd.f32 0.0, %v639
    %v641 = vpop.f32.mrb[0].mxu0
    %v642 = vpop.f32.mrb[0].mxu0
    %v643 = vpop.f32.mrb[0].mxu0
    %644 = vdwg.mxu0
    %v646 = vsel %vm499, %v546, 0
    %v649 = vsel %vm555, %v550, 0
    %651 = vmatprep.subr.bf16.mxu0 0
    %652 = vmatpush1.bf16.msra.mxu0 %v649
    %653 = vmatprep.subr.bf16.mxu0 0
    %654 = vmatpush1.bf16.msra.mxu0 0
    %655 = vmatprep.subr.bf16.mxu0 0
    %656 = vmatpush1.bf16.msra.mxu0 0
    %657 = vmatprep.subr.bf16.mxu0 0
    %658 = vmatpush1.bf16.msra.mxu0 0
    %659 = vmatprep.subr.bf16.mxu0 0
    %660 = vmatpush1.bf16.msra.mxu0 0
    %661 = vmatprep.subr.bf16.mxu0 0
    %662 = vmatpush1.bf16.msra.mxu0 0
    %663 = vmatprep.subr.bf16.mxu0 0
    %664 = vmatpush1.bf16.msra.mxu0 0
    %665 = vmatprep.subr.bf16.mxu0 0
    %666 = vmatpush1.bf16.msra.mxu0 0
    %667 = vmatprep.subr.bf16.mxu0 0
    %668 = vmatpush1.bf16.msra.mxu0 0
    %669 = vmatprep.subr.bf16.mxu0 0
    %670 = vmatpush1.bf16.msra.mxu0 0
    %671 = vmatprep.subr.bf16.mxu0 0
    %672 = vmatpush1.bf16.msra.mxu0 0
    %673 = vmatprep.subr.bf16.mxu0 0
    %674 = vmatpush1.bf16.msra.mxu0 0
    %675 = vmatprep.subr.bf16.mxu0 0
    %676 = vmatpush1.bf16.msra.mxu0 0
    %677 = vmatprep.subr.bf16.mxu0 0
    %678 = vmatpush1.bf16.msra.mxu0 0
    %679 = vmatprep.subr.bf16.mxu0 0
    %680 = vmatpush1.bf16.msra.mxu0 0
    %681 = vmatprep.subr.bf16.mxu0 0
    %682 = vmatpush1.bf16.msra.mxu0 0
    %683 = vmatprep.mubr.bf16.mxu0 0
    %684 = vmatmul.mubr.bf16.gmra.mrb[0].mxu0 %v646
    %v685 = vpop.f32.mrb[0].mxu0
    %v686 = vadd.f32 0.0, %v685
    %v687 = vpop.f32.mrb[0].mxu0
    %v688 = vpop.f32.mrb[0].mxu0
    %v689 = vpop.f32.mrb[0].mxu0
    %690 = vdwg.mxu0
    %v692 = vsel %vm499, %v547, 0
    %v695 = vsel %vm555, %v551, 0
    %697 = vmatprep.subr.bf16.mxu0 0
    %698 = vmatpush1.bf16.msra.mxu0 %v695
    %699 = vmatprep.subr.bf16.mxu0 0
    %700 = vmatpush1.bf16.msra.mxu0 0
    %701 = vmatprep.subr.bf16.mxu0 0
    %702 = vmatpush1.bf16.msra.mxu0 0
    %703 = vmatprep.subr.bf16.mxu0 0
    %704 = vmatpush1.bf16.msra.mxu0 0
    %705 = vmatprep.subr.bf16.mxu0 0
    %706 = vmatpush1.bf16.msra.mxu0 0
    %707 = vmatprep.subr.bf16.mxu0 0
    %708 = vmatpush1.bf16.msra.mxu0 0
    %709 = vmatprep.subr.bf16.mxu0 0
    %710 = vmatpush1.bf16.msra.mxu0 0
    %711 = vmatprep.subr.bf16.mxu0 0
    %712 = vmatpush1.bf16.msra.mxu0 0
    %713 = vmatprep.subr.bf16.mxu0 0
    %714 = vmatpush1.bf16.msra.mxu0 0
    %715 = vmatprep.subr.bf16.mxu0 0
    %716 = vmatpush1.bf16.msra.mxu0 0
    %717 = vmatprep.subr.bf16.mxu0 0
    %718 = vmatpush1.bf16.msra.mxu0 0
    %719 = vmatprep.subr.bf16.mxu0 0
    %720 = vmatpush1.bf16.msra.mxu0 0
    %721 = vmatprep.subr.bf16.mxu0 0
    %722 = vmatpush1.bf16.msra.mxu0 0
    %723 = vmatprep.subr.bf16.mxu0 0
    %724 = vmatpush1.bf16.msra.mxu0 0
    %725 = vmatprep.subr.bf16.mxu0 0
    %726 = vmatpush1.bf16.msra.mxu0 0
    %727 = vmatprep.subr.bf16.mxu0 0
    %728 = vmatpush1.bf16.msra.mxu0 0
    %729 = vmatprep.mubr.bf16.mxu0 0
    %730 = vmatmul.mubr.bf16.gmra.mrb[0].mxu0 %v692
    %v731 = vpop.f32.mrb[0].mxu0
    %v732 = vadd.f32 0.0, %v731
    %v733 = vpop.f32.mrb[0].mxu0
    %v734 = vpop.f32.mrb[0].mxu0
    %v735 = vpop.f32.mrb[0].mxu0
    %736 = vdwg.mxu0
    %v737 = vstv %s36
    %v738 = vmul.f32 %v37, %v737
    %v739 = vmul.f32 %v38, %v737
    %v740 = vmul.f32 %v39, %v737
    %v741 = vmul.f32 %v40, %v737
    %s742 = ssub.f32 1.0, %s36
    %v743 = vstv %s742
    %v744 = vmul.f32 %v594, %v743
    %v745 = vmul.f32 %v640, %v743
    %v746 = vmul.f32 %v686, %v743
    %v747 = vmul.f32 %v732, %v743
    %v748 = vadd.f32 %v738, %v744
    %v749 = vadd.f32 %v739, %v745
    %v750 = vadd.f32 %v740, %v746
    %v751 = vadd.f32 %v741, %v747
    %752 = vadd.xlane.f32.xlu0 %v748
    %v753 = vpop.xlane.xlu0 %752
    %754 = vadd.xlane.f32.xlu0 %v749
    %v755 = vpop.xlane.xlu0 %754
    %756 = vadd.xlane.f32.xlu0 %v750
    %v757 = vpop.xlane.xlu0 %756
    %758 = vadd.xlane.f32.xlu0 %v751
    %v759 = vpop.xlane.xlu0 %758
    %v760 = vrcp.pop 128.0
    %v761 = vmul.f32 %v753, %v760
    %v762 = vmul.f32 %v755, %v760
    %v763 = vmul.f32 %v757, %v760
    %v764 = vmul.f32 %v759, %v760
    %v765 = vsub.f32 %v748, %v761
    %v766 = vsub.f32 %v749, %v762
    %v767 = vsub.f32 %v750, %v763
    %v768 = vsub.f32 %v751, %v764
    %v769 = vmul.f32 %v765, %v765
    %v770 = vmul.f32 %v766, %v766
    %v771 = vmul.f32 %v767, %v767
    %v772 = vmul.f32 %v768, %v768
    %773 = vadd.xlane.f32.xlu0 %v769
    %v774 = vpop.xlane.xlu0 %773
    %775 = vadd.xlane.f32.xlu0 %v770
    %v776 = vpop.xlane.xlu0 %775
    %777 = vadd.xlane.f32.xlu0 %v771
    %v778 = vpop.xlane.xlu0 %777
    %779 = vadd.xlane.f32.xlu0 %v772
    %v780 = vpop.xlane.xlu0 %779
    %v781 = vmul.f32 %v774, %v760
    %v782 = vmul.f32 %v776, %v760
    %v783 = vmul.f32 %v778, %v760
    %v784 = vmul.f32 %v780, %v760
    %v785 = vadd.f32 %v781, 1e-05
    %v786 = vadd.f32 %v782, 1e-05
    %v787 = vadd.f32 %v783, 1e-05
    %v788 = vadd.f32 %v784, 1e-05
    %v789 = vrsqrt.pop %v785
    %v790 = vrsqrt.pop %v786
    %v791 = vrsqrt.pop %v787
    %v792 = vrsqrt.pop %v788
    %v793 = vmul.f32 %v765, %v789
    %v794 = vmul.f32 %v766, %v790
    %v795 = vmul.f32 %v767, %v791
    %v796 = vmul.f32 %v768, %v792
    %v797 = vlaneseq
    %v798 = vshrl.u32 %v797, 7
    %v799 = vsub.s32 5, %v798
    %v800 = vrot.slane %v43, %v799
    %v801 = vmul.f32 %v793, %v800
    %v802 = vmul.f32 %v794, %v800
    %v803 = vmul.f32 %v795, %v800
    %v804 = vmul.f32 %v796, %v800
    %v805 = vlaneseq
    %v806 = vshrl.u32 %v805, 7
    %v807 = vsub.s32 6, %v806
    %v808 = vrot.slane %v43, %v807
    %v809 = vadd.f32 %v801, %v808
    %v810 = vadd.f32 %v802, %v808
    %v811 = vadd.f32 %v803, %v808
    %v812 = vadd.f32 %v804, %v808
    %v813 = vpack.c.bf16 %v810, %v809
    %v814 = vpack.c.bf16 %v812, %v811
    %v815 = vld [vmem:[#allocation3 + $0xc] sm:$0xf]
    %v816 = vld [vmem:[#allocation3 + $0x20] sm:$0xf]
    %v817 = vld [vmem:[#allocation3 + $0x34] sm:$0xf]
    %v818 = vld [vmem:[#allocation3 + $0x48] sm:$0xf]
    %v819 = vld [vmem:[#allocation3 + $0x5c] sm:$0xf]
    %v820 = vld [vmem:[#allocation3 + $0x70] sm:$0xf]
    %v821 = vld [vmem:[#allocation3 + $0x84] sm:$0xf]
    %v822 = vld [vmem:[#allocation3 + $0x98] sm:$0xf]
    %v823 = vld [vmem:[#allocation3 + $0xac] sm:$0xf]
    %v824 = vld [vmem:[#allocation3 + $0xc0] sm:$0xf]
    %v825 = vld [vmem:[#allocation3 + $0xd4] sm:$0xf]
    %v826 = vld [vmem:[#allocation3 + $0xe8] sm:$0xf]
    %v827 = vld [vmem:[#allocation3 + $0xfc] sm:$0xf]
    %v828 = vld [vmem:[#allocation3 + $0x110] sm:$0xf]
    %v829 = vld [vmem:[#allocation3 + $0x124] sm:$0xf]
    %v830 = vld [vmem:[#allocation3 + $0x138] sm:$0xf]
    %v831 = vlaneseq
    %v832 = vshrl.u32 %v831, 7
    %v833 = vsub.s32 3, %v832
    %v834 = vrot.slane %v43, %v833
    %v851 = vunpack.c.l.b16 %v815
    %v852 = vunpack.c.l.b16 %v816
    %v853 = vunpack.c.l.b16 %v817
    %v854 = vunpack.c.l.b16 %v818
    %v855 = vunpack.c.l.b16 %v819
    %v856 = vunpack.c.l.b16 %v820
    %v857 = vunpack.c.l.b16 %v821
    %v858 = vunpack.c.l.b16 %v822
    %v859 = vunpack.c.l.b16 %v823
    %v860 = vunpack.c.l.b16 %v824
    %v861 = vunpack.c.l.b16 %v825
    %v862 = vunpack.c.l.b16 %v826
    %v863 = vunpack.c.l.b16 %v827
    %v864 = vunpack.c.l.b16 %v828
    %v865 = vunpack.c.l.b16 %v829
    %v866 = vunpack.c.l.b16 %v830
    %v867 = vpack.c.b16 %v852, %v851
    %v868 = vpack.c.b16 %v854, %v853
    %v869 = vpack.c.b16 %v856, %v855
    %v870 = vpack.c.b16 %v858, %v857
    %v871 = vpack.c.b16 %v860, %v859
    %v872 = vpack.c.b16 %v862, %v861
    %v873 = vpack.c.b16 %v864, %v863
    %v874 = vpack.c.b16 %v866, %v865
    %883 = vmatprep.subr.bf16.mxu0 0
    %884 = vmatpush1.bf16.msra.mxu0 %v867
    %885 = vmatprep.subr.bf16.mxu0 0
    %886 = vmatpush1.bf16.msra.mxu0 %v868
    %887 = vmatprep.subr.bf16.mxu0 0
    %888 = vmatpush1.bf16.msra.mxu0 %v869
    %889 = vmatprep.subr.bf16.mxu0 0
    %890 = vmatpush1.bf16.msra.mxu0 %v870
    %891 = vmatprep.subr.bf16.mxu0 0
    %892 = vmatpush1.bf16.msra.mxu0 %v871
    %893 = vmatprep.subr.bf16.mxu0 0
    %894 = vmatpush1.bf16.msra.mxu0 %v872
    %895 = vmatprep.subr.bf16.mxu0 0
    %896 = vmatpush1.bf16.msra.mxu0 %v873
    %897 = vmatprep.subr.bf16.mxu0 0
    %898 = vmatpush1.bf16.msra.mxu0 %v874
    %899 = vmatprep.subr.bf16.mxu0 0
    %900 = vmatpush1.bf16.msra.mxu0 0
    %901 = vmatprep.subr.bf16.mxu0 0
    %902 = vmatpush1.bf16.msra.mxu0 0
    %903 = vmatprep.subr.bf16.mxu0 0
    %904 = vmatpush1.bf16.msra.mxu0 0
    %905 = vmatprep.subr.bf16.mxu0 0
    %906 = vmatpush1.bf16.msra.mxu0 0
    %907 = vmatprep.subr.bf16.mxu0 0
    %908 = vmatpush1.bf16.msra.mxu0 0
    %909 = vmatprep.subr.bf16.mxu0 0
    %910 = vmatpush1.bf16.msra.mxu0 0
    %911 = vmatprep.subr.bf16.mxu0 0
    %912 = vmatpush1.bf16.msra.mxu0 0
    %913 = vmatprep.subr.bf16.mxu0 0
    %914 = vmatpush1.bf16.msra.mxu0 0
    %915 = vmatprep.mubr.bf16.mxu0 0
    %916 = vmatmul.mubr.bf16.gmra.mrb[0].mxu0 %v813
    %v917 = vpop.f32.mrb[0].mxu0
    %v918 = vadd.f32 %v834, %v917
    %v919 = vpop.f32.mrb[0].mxu0
    %v920 = vpop.f32.mrb[0].mxu0
    %v921 = vadd.f32 %v834, %v920
    %v922 = vpop.f32.mrb[0].mxu0
    %923 = vmatprep.mubr.bf16.mxu0 0
    %924 = vmatmul.mubr.bf16.gmra.mrb[0].mxu0 %v814
    %v925 = vpop.f32.mrb[0].mxu0
    %v926 = vadd.f32 %v834, %v925
    %v927 = vpop.f32.mrb[0].mxu0
    %v928 = vpop.f32.mrb[0].mxu0
    %v929 = vadd.f32 %v834, %v928
    %v930 = vpop.f32.mrb[0].mxu0
    %931 = vdwg.mxu0
    %v932 = vadd.f32 %v809, %v918
    %v933 = vadd.f32 %v810, %v921
    %v934 = vadd.f32 %v811, %v926
    %v935 = vadd.f32 %v812, %v929
    %936 = vadd.xlane.f32.xlu0 %v932
    %v937 = vpop.xlane.xlu0 %936
    %938 = vadd.xlane.f32.xlu0 %v933
    %v939 = vpop.xlane.xlu0 %938
    %940 = vadd.xlane.f32.xlu0 %v934
    %v941 = vpop.xlane.xlu0 %940
    %942 = vadd.xlane.f32.xlu0 %v935
    %v943 = vpop.xlane.xlu0 %942
    %v944 = vmul.f32 %v937, %v760
    %v945 = vmul.f32 %v939, %v760
    %v946 = vmul.f32 %v941, %v760
    %v947 = vmul.f32 %v943, %v760
    %v948 = vsub.f32 %v932, %v944
    %v949 = vsub.f32 %v933, %v945
    %v950 = vsub.f32 %v934, %v946
    %v951 = vsub.f32 %v935, %v947
    %v952 = vmul.f32 %v948, %v948
    %v953 = vmul.f32 %v949, %v949
    %v954 = vmul.f32 %v950, %v950
    %v955 = vmul.f32 %v951, %v951
    %956 = vadd.xlane.f32.xlu0 %v952
    %v957 = vpop.xlane.xlu0 %956
    %958 = vadd.xlane.f32.xlu0 %v953
    %v959 = vpop.xlane.xlu0 %958
    %960 = vadd.xlane.f32.xlu0 %v954
    %v961 = vpop.xlane.xlu0 %960
    %962 = vadd.xlane.f32.xlu0 %v955
    %v963 = vpop.xlane.xlu0 %962
    %v964 = vmul.f32 %v957, %v760
    %v965 = vmul.f32 %v959, %v760
    %v966 = vmul.f32 %v961, %v760
    %v967 = vmul.f32 %v963, %v760
    %v968 = vadd.f32 %v964, 1e-05
    %v969 = vadd.f32 %v965, 1e-05
    %v970 = vadd.f32 %v966, 1e-05
    %v971 = vadd.f32 %v967, 1e-05
    %v972 = vrsqrt.pop %v968
    %v973 = vrsqrt.pop %v969
    %v974 = vrsqrt.pop %v970
    %v975 = vrsqrt.pop %v971
    %v976 = vmul.f32 %v948, %v972
    %v977 = vmul.f32 %v949, %v973
    %v978 = vmul.f32 %v950, %v974
    %v979 = vmul.f32 %v951, %v975
    %v980 = vlaneseq
    %v981 = vshrl.u32 %v980, 7
    %v982 = vsub.s32 7, %v981
    %v983 = vrot.slane %v43, %v982
    %v984 = vmul.f32 %v976, %v983
    %v985 = vmul.f32 %v977, %v983
    %v986 = vmul.f32 %v978, %v983
    %v987 = vmul.f32 %v979, %v983
    %v988 = vlaneseq
    %v989 = vshrl.u32 %v988, 7
    %v990 = vsub.s32 0, %v989
    %v991 = vrot.slane %v44, %v990
    %v992 = vadd.f32 %v984, %v991
    %v993 = vadd.f32 %v985, %v991
    %v994 = vadd.f32 %v986, %v991
    %v995 = vadd.f32 %v987, %v991
    %v996 = vpack.c.bf16 %v993, %v992
    %v997 = vpack.c.bf16 %v995, %v994
    %v998 = vld [vmem:[#allocation3 + $0x10] sm:$0xf]
    %v999 = vld [vmem:[#allocation3 + $0x24] sm:$0xf]
    %v1000 = vld [vmem:[#allocation3 + $0x38] sm:$0xf]
    %v1001 = vld [vmem:[#allocation3 + $0x4c] sm:$0xf]
    %v1002 = vld [vmem:[#allocation3 + $0x60] sm:$0xf]
    %v1003 = vld [vmem:[#allocation3 + $0x74] sm:$0xf]
    %v1004 = vld [vmem:[#allocation3 + $0x88] sm:$0xf]
    %v1005 = vld [vmem:[#allocation3 + $0x9c] sm:$0xf]
    %v1006 = vld [vmem:[#allocation3 + $0xb0] sm:$0xf]
    %v1007 = vld [vmem:[#allocation3 + $0xc4] sm:$0xf]
    %v1008 = vld [vmem:[#allocation3 + $0xd8] sm:$0xf]
    %v1009 = vld [vmem:[#allocation3 + $0xec] sm:$0xf]
    %v1010 = vld [vmem:[#allocation3 + $0x100] sm:$0xf]
    %v1011 = vld [vmem:[#allocation3 + $0x114] sm:$0xf]
    %v1012 = vld [vmem:[#allocation3 + $0x128] sm:$0xf]
    %v1013 = vld [vmem:[#allocation3 + $0x13c] sm:$0xf]
    %v1014 = vlaneseq
    %v1015 = vshrl.u32 %v1014, 7
    %v1016 = vsub.s32 4, %v1015
    %v1017 = vrot.slane %v43, %v1016
    %v1034 = vunpack.c.l.b16 %v998
    %v1035 = vunpack.c.l.b16 %v999
    %v1036 = vunpack.c.l.b16 %v1000
    %v1037 = vunpack.c.l.b16 %v1001
    %v1038 = vunpack.c.l.b16 %v1002
    %v1039 = vunpack.c.l.b16 %v1003
    %v1040 = vunpack.c.l.b16 %v1004
    %v1041 = vunpack.c.l.b16 %v1005
    %v1042 = vunpack.c.l.b16 %v1006
    %v1043 = vunpack.c.l.b16 %v1007
    %v1044 = vunpack.c.l.b16 %v1008
    %v1045 = vunpack.c.l.b16 %v1009
    %v1046 = vunpack.c.l.b16 %v1010
    %v1047 = vunpack.c.l.b16 %v1011
    %v1048 = vunpack.c.l.b16 %v1012
    %v1049 = vunpack.c.l.b16 %v1013
    %v1050 = vpack.c.b16 %v1035, %v1034
    %v1051 = vpack.c.b16 %v1037, %v1036
    %v1052 = vpack.c.b16 %v1039, %v1038
    %v1053 = vpack.c.b16 %v1041, %v1040
    %v1054 = vpack.c.b16 %v1043, %v1042
    %v1055 = vpack.c.b16 %v1045, %v1044
    %v1056 = vpack.c.b16 %v1047, %v1046
    %v1057 = vpack.c.b16 %v1049, %v1048
    %1066 = vmatprep.subr.bf16.mxu0 0
    %1067 = vmatpush1.bf16.msra.mxu0 %v1050
    %1068 = vmatprep.subr.bf16.mxu0 0
    %1069 = vmatpush1.bf16.msra.mxu0 %v1051
    %1070 = vmatprep.subr.bf16.mxu0 0
    %1071 = vmatpush1.bf16.msra.mxu0 %v1052
    %1072 = vmatprep.subr.bf16.mxu0 0
    %1073 = vmatpush1.bf16.msra.mxu0 %v1053
    %1074 = vmatprep.subr.bf16.mxu0 0
    %1075 = vmatpush1.bf16.msra.mxu0 %v1054
    %1076 = vmatprep.subr.bf16.mxu0 0
    %1077 = vmatpush1.bf16.msra.mxu0 %v1055
    %1078 = vmatprep.subr.bf16.mxu0 0
    %1079 = vmatpush1.bf16.msra.mxu0 %v1056
    %1080 = vmatprep.subr.bf16.mxu0 0
    %1081 = vmatpush1.bf16.msra.mxu0 %v1057
    %1082 = vmatprep.subr.bf16.mxu0 0
    %1083 = vmatpush1.bf16.msra.mxu0 0
    %1084 = vmatprep.subr.bf16.mxu0 0
    %1085 = vmatpush1.bf16.msra.mxu0 0
    %1086 = vmatprep.subr.bf16.mxu0 0
    %1087 = vmatpush1.bf16.msra.mxu0 0
    %1088 = vmatprep.subr.bf16.mxu0 0
    %1089 = vmatpush1.bf16.msra.mxu0 0
    %1090 = vmatprep.subr.bf16.mxu0 0
    %1091 = vmatpush1.bf16.msra.mxu0 0
    %1092 = vmatprep.subr.bf16.mxu0 0
    %1093 = vmatpush1.bf16.msra.mxu0 0
    %1094 = vmatprep.subr.bf16.mxu0 0
    %1095 = vmatpush1.bf16.msra.mxu0 0
    %1096 = vmatprep.subr.bf16.mxu0 0
    %1097 = vmatpush1.bf16.msra.mxu0 0
    %1098 = vmatprep.mubr.bf16.mxu0 0
    %1099 = vmatmul.mubr.bf16.gmra.mrb[0].mxu0 %v996
    %v1100 = vpop.f32.mrb[0].mxu0
    %v1101 = vadd.f32 %v1017, %v1100
    %v1102 = vpop.f32.mrb[0].mxu0
    %v1103 = vpop.f32.mrb[0].mxu0
    %v1104 = vadd.f32 %v1017, %v1103
    %v1105 = vpop.f32.mrb[0].mxu0
    %1106 = vmatprep.mubr.bf16.mxu0 0
    %1107 = vmatmul.mubr.bf16.gmra.mrb[0].mxu0 %v997
    %v1108 = vpop.f32.mrb[0].mxu0
    %v1109 = vadd.f32 %v1017, %v1108
    %v1110 = vpop.f32.mrb[0].mxu0
    %v1111 = vpop.f32.mrb[0].mxu0
    %v1112 = vadd.f32 %v1017, %v1111
    %v1113 = vpop.f32.mrb[0].mxu0
    %1114 = vdwg.mxu0
    %1115 = vst [vmem:[%s4] sm:$0xff] %v1101
    %1116 = vst [vmem:[%s4 + $0x8] sm:$0xff] %v1104
    %1117 = vst [vmem:[%s4 + $0x10] sm:$0xff] %v1109
    %1118 = vst [vmem:[%s4 + $0x18] sm:$0xff] %v1112
    %v1119 = vrot.slane %v37, 4
    %v1120 = vadd.f32 %v37, %v1119
    %v1121 = vrot.slane %v1120, 2
    %v1122 = vadd.f32 %v1120, %v1121
    %v1123 = vrot.slane %v1122, 1
    %v1124 = vadd.f32 %v1122, %v1123
    %v1125 = vrot.slane %v38, 4
    %v1126 = vadd.f32 %v38, %v1125
    %v1127 = vrot.slane %v1126, 2
    %v1128 = vadd.f32 %v1126, %v1127
    %v1129 = vrot.slane %v1128, 1
    %v1130 = vadd.f32 %v1128, %v1129
    %v1131 = vrot.slane %v39, 4
    %v1132 = vadd.f32 %v39, %v1131
    %v1133 = vrot.slane %v1132, 2
    %v1134 = vadd.f32 %v1132, %v1133
    %v1135 = vrot.slane %v1134, 1
    %v1136 = vadd.f32 %v1134, %v1135
    %v1137 = vrot.slane %v40, 4
    %v1138 = vadd.f32 %v40, %v1137
    %v1139 = vrot.slane %v1138, 2
    %v1140 = vadd.f32 %v1138, %v1139
    %v1141 = vrot.slane %v1140, 1
    %v1142 = vadd.f32 %v1140, %v1141
    %v1143 = vrcp.pop 8.0
    %v1144 = vmul.f32 %v1124, %v1143
    %v1145 = vmul.f32 %v1130, %v1143
    %v1146 = vmul.f32 %v1136, %v1143
    %v1147 = vmul.f32 %v1142, %v1143
    %vm1152 = vcmask 1041409
    %v1153 = vsel %vm1152, %v1145, %v1144
    %vm1154 = vcmask 1042434
    %v1155 = vsel %vm1154, %v1146, %v1153
    %vm1156 = vcmask 1043459
    %v1157 = vsel %vm1156, %v1147, %v1155
    %1159 = vst [vmem:[%s5] sm:$0xf] %v1157
    %v1160 = vrot.slane %v1101, 4
    %v1161 = vadd.f32 %v1101, %v1160
    %v1162 = vrot.slane %v1161, 2
    %v1163 = vadd.f32 %v1161, %v1162
    %v1164 = vrot.slane %v1163, 1
    %v1165 = vadd.f32 %v1163, %v1164
    %v1166 = vrot.slane %v1104, 4
    %v1167 = vadd.f32 %v1104, %v1166
    %v1168 = vrot.slane %v1167, 2
    %v1169 = vadd.f32 %v1167, %v1168
    %v1170 = vrot.slane %v1169, 1
    %v1171 = vadd.f32 %v1169, %v1170
    %v1172 = vrot.slane %v1109, 4
    %v1173 = vadd.f32 %v1109, %v1172
    %v1174 = vrot.slane %v1173, 2
    %v1175 = vadd.f32 %v1173, %v1174
    %v1176 = vrot.slane %v1175, 1
    %v1177 = vadd.f32 %v1175, %v1176
    %v1178 = vrot.slane %v1112, 4
    %v1179 = vadd.f32 %v1112, %v1178
    %v1180 = vrot.slane %v1179, 2
    %v1181 = vadd.f32 %v1179, %v1180
    %v1182 = vrot.slane %v1181, 1
    %v1183 = vadd.f32 %v1181, %v1182
    %v1184 = vmul.f32 %v1165, %v1143
    %v1185 = vmul.f32 %v1171, %v1143
    %v1186 = vmul.f32 %v1177, %v1143
    %v1187 = vmul.f32 %v1183, %v1143
    %v1192 = vsel %vm1152, %v1185, %v1184
    %v1193 = vsel %vm1154, %v1186, %v1192
    %v1194 = vsel %vm1156, %v1187, %v1193
    %1196 = vst [vmem:[%s6] sm:$0xf] %v1194
    // Predicated region
    $region22: #{transformer_forward.3} parent=1 // pred_check
      _
    $region23: #{transformer_forward.3} parent=1 // pred_check_branch
      %1198 = sbr.rel (0) target = $region25
    $region24: #{transformer_forward.3} parent=1 // pred_region
      _
    $region25: #{transformer_forward.3} parent=1 // pred_fallthru
      _
    // Predicated region
    $region26: #{transformer_forward.3} parent=1 // pred_check
      _
    $region27: #{transformer_forward.3} parent=1 // pred_check_branch
      %1200 = sbr.rel (0) target = $region29
    $region28: #{transformer_forward.3} parent=1 // pred_region
      _
    $region29: #{transformer_forward.3} parent=1 // pred_fallthru
      _
    // Predicated region
    $region30: #{transformer_forward.3} parent=1 // pred_check
      _
    $region31: #{transformer_forward.3} parent=1 // pred_check_branch
      %1202 = sbr.rel (0) target = $region33
    $region32: #{transformer_forward.3} parent=1 // pred_region
      _
    $region33: #{transformer_forward.3} parent=1 // pred_fallthru
      _
    // Predicated region
    $region34: #{transformer_forward.3} parent=1 // pred_check
      _
    $region35: #{transformer_forward.3} parent=1 // pred_check_branch
      %1204 = sbr.rel (0) target = $region37
    $region36: #{transformer_forward.3} parent=1 // pred_region
      _
    $region37: #{transformer_forward.3} parent=1 // pred_fallthru
      _
    // Predicated region
    $region38: #{transformer_forward.3} parent=1 // pred_check
      _
    $region39: #{transformer_forward.3} parent=1 // pred_check_branch
      %1206 = sbr.rel (0) target = $region41
    $region40: #{transformer_forward.3} parent=1 // pred_region
      _
    $region41: #{transformer_forward.3} parent=1 // pred_fallthru
      _
    // Predicated region
    $region42: #{transformer_forward.3} parent=1 // pred_check
      _
    $region43: #{transformer_forward.3} parent=1 // pred_check_branch
      %1208 = sbr.rel (0) target = $region45
    $region44: #{transformer_forward.3} parent=1 // pred_region
      _
    $region45: #{transformer_forward.3} parent=1 // pred_fallthru
      _
    %1209 = vsyncpa [#allocation4], 1

// kernel: transformer_forward.5
$region0: #{transformer_forward.5}
  #allocation0 [shape = 'u32[]', space=smem, size = 0x4, offset = 0x4, fixed_abs, tag = 'smem constant byte address 0x4 - core index']
  #allocation1 [shape = 'u32[144,128]{1,0:T(1,128)}', space=vmem, size = 0x12000, scoped, tag = 'internal scratch']
  %s0 = inlined_call_operand.vmem [shape: f32[4,4,128], index: 0, kind: input, shape index: {}]
  %s1 = inlined_call_operand.vmem [shape: bf16[4,128,128], index: 1, kind: input, shape index: {}]
  %s2 = inlined_call_operand.vmem [shape: f32[4,1,128], index: 2, kind: input, shape index: {}]
  %s3 = inlined_call_operand.vmem [shape: bf16[4,128,128], index: 3, kind: input, shape index: {}]
  %s4 = inlined_call_operand.vmem [shape: f32[4,1,128], index: 4, kind: input, shape index: {}]
  %s5 = inlined_call_operand.hbm [shape: f32[4,128], index: 5, kind: output, shape index: {}]
  %s6 = sld [smem:[#allocation0]]
  $region30: #{transformer_forward.5} parent=0
    _
  %s8 = ssub.s32 1, %s6
  %s9 = scalar_select 0, %s8, %s6
  $region1: #{transformer_forward.5} parent=0
    #allocation2 [shape = 'u8[2048]{0}', space=vmem, size = 0x800, scoped, tag = 'output window, operand 0, single buffered']
    #allocation3 [shape = 's32[1]{0}', space=sflag, size = 0x4, scoped, tag = 'scoped memory for transformer_forward.5']
    %10 = vsyncpa [#allocation3], 0
    // Predicated region
    $region2: #{transformer_forward.5} parent=1 // pred_check
      _
    $region3: #{transformer_forward.5} parent=1 // pred_check_branch
      %12 = sbr.rel (0) target = $region5
    $region4: #{transformer_forward.5} parent=1 // pred_region
      _
    $region5: #{transformer_forward.5} parent=1 // pred_fallthru
      _
    // Predicated region
    $region6: #{transformer_forward.5} parent=1 // pred_check
      _
    $region7: #{transformer_forward.5} parent=1 // pred_check_branch
      %14 = sbr.rel (0) target = $region9
    $region8: #{transformer_forward.5} parent=1 // pred_region
      _
    $region9: #{transformer_forward.5} parent=1 // pred_fallthru
      _
    // Predicated region
    $region10: #{transformer_forward.5} parent=1 // pred_check
      _
    $region11: #{transformer_forward.5} parent=1 // pred_check_branch
      %16 = sbr.rel (0) target = $region13
    $region12: #{transformer_forward.5} parent=1 // pred_region
      _
    $region13: #{transformer_forward.5} parent=1 // pred_fallthru
      _
    // Predicated region
    $region14: #{transformer_forward.5} parent=1 // pred_check
      _
    $region15: #{transformer_forward.5} parent=1 // pred_check_branch
      %18 = sbr.rel (0) target = $region17
    $region16: #{transformer_forward.5} parent=1 // pred_region
      _
    $region17: #{transformer_forward.5} parent=1 // pred_fallthru
      _
    // Predicated region
    $region18: #{transformer_forward.5} parent=1 // pred_check
      _
    $region19: #{transformer_forward.5} parent=1 // pred_check_branch
      %20 = sbr.rel (0) target = $region21
    $region20: #{transformer_forward.5} parent=1 // pred_region
      _
    $region21: #{transformer_forward.5} parent=1 // pred_fallthru
      _
    %v22 = vld [vmem:[%s0] sm:$0xf]
    %v23 = vld [vmem:[%s0 + $0x4] sm:$0xf]
    %v24 = vld [vmem:[%s0 + $0x8] sm:$0xf]
    %v25 = vld [vmem:[%s0 + $0xc] sm:$0xf]
    %v26 = vpack.c.bf16 %v22, %v22
    %v27 = vpack.c.bf16 %v23, %v23
    %v28 = vpack.c.bf16 %v24, %v24
    %v29 = vpack.c.bf16 %v25, %v25
    %v30 = vld [vmem:[%s1] sm:$0xf]
    %v31 = vld [vmem:[%s1 + $0x4] sm:$0xf]
    %v32 = vld [vmem:[%s1 + $0x8] sm:$0xf]
    %v33 = vld [vmem:[%s1 + $0xc] sm:$0xf]
    %v34 = vld [vmem:[%s1 + $0x10] sm:$0xf]
    %v35 = vld [vmem:[%s1 + $0x14] sm:$0xf]
    %v36 = vld [vmem:[%s1 + $0x18] sm:$0xf]
    %v37 = vld [vmem:[%s1 + $0x1c] sm:$0xf]
    %v38 = vld [vmem:[%s1 + $0x20] sm:$0xf]
    %v39 = vld [vmem:[%s1 + $0x24] sm:$0xf]
    %v40 = vld [vmem:[%s1 + $0x28] sm:$0xf]
    %v41 = vld [vmem:[%s1 + $0x2c] sm:$0xf]
    %v42 = vld [vmem:[%s1 + $0x30] sm:$0xf]
    %v43 = vld [vmem:[%s1 + $0x34] sm:$0xf]
    %v44 = vld [vmem:[%s1 + $0x38] sm:$0xf]
    %v45 = vld [vmem:[%s1 + $0x3c] sm:$0xf]
    %v46 = vld [vmem:[%s1 + $0x40] sm:$0xf]
    %v47 = vld [vmem:[%s1 + $0x44] sm:$0xf]
    %v48 = vld [vmem:[%s1 + $0x48] sm:$0xf]
    %v49 = vld [vmem:[%s1 + $0x4c] sm:$0xf]
    %v50 = vld [vmem:[%s1 + $0x50] sm:$0xf]
    %v51 = vld [vmem:[%s1 + $0x54] sm:$0xf]
    %v52 = vld [vmem:[%s1 + $0x58] sm:$0xf]
    %v53 = vld [vmem:[%s1 + $0x5c] sm:$0xf]
    %v54 = vld [vmem:[%s1 + $0x60] sm:$0xf]
    %v55 = vld [vmem:[%s1 + $0x64] sm:$0xf]
    %v56 = vld [vmem:[%s1 + $0x68] sm:$0xf]
    %v57 = vld [vmem:[%s1 + $0x6c] sm:$0xf]
    %v58 = vld [vmem:[%s1 + $0x70] sm:$0xf]
    %v59 = vld [vmem:[%s1 + $0x74] sm:$0xf]
    %v60 = vld [vmem:[%s1 + $0x78] sm:$0xf]
    %v61 = vld [vmem:[%s1 + $0x7c] sm:$0xf]
    %v62 = vld [vmem:[%s1 + $0x80] sm:$0xf]
    %v63 = vld [vmem:[%s1 + $0x84] sm:$0xf]
    %v64 = vld [vmem:[%s1 + $0x88] sm:$0xf]
    %v65 = vld [vmem:[%s1 + $0x8c] sm:$0xf]
    %v66 = vld [vmem:[%s1 + $0x90] sm:$0xf]
    %v67 = vld [vmem:[%s1 + $0x94] sm:$0xf]
    %v68 = vld [vmem:[%s1 + $0x98] sm:$0xf]
    %v69 = vld [vmem:[%s1 + $0x9c] sm:$0xf]
    %v70 = vld [vmem:[%s1 + $0xa0] sm:$0xf]
    %v71 = vld [vmem:[%s1 + $0xa4] sm:$0xf]
    %v72 = vld [vmem:[%s1 + $0xa8] sm:$0xf]
    %v73 = vld [vmem:[%s1 + $0xac] sm:$0xf]
    %v74 = vld [vmem:[%s1 + $0xb0] sm:$0xf]
    %v75 = vld [vmem:[%s1 + $0xb4] sm:$0xf]
    %v76 = vld [vmem:[%s1 + $0xb8] sm:$0xf]
    %v77 = vld [vmem:[%s1 + $0xbc] sm:$0xf]
    %v78 = vld [vmem:[%s1 + $0xc0] sm:$0xf]
    %v79 = vld [vmem:[%s1 + $0xc4] sm:$0xf]
    %v80 = vld [vmem:[%s1 + $0xc8] sm:$0xf]
    %v81 = vld [vmem:[%s1 + $0xcc] sm:$0xf]
    %v82 = vld [vmem:[%s1 + $0xd0] sm:$0xf]
    %v83 = vld [vmem:[%s1 + $0xd4] sm:$0xf]
    %v84 = vld [vmem:[%s1 + $0xd8] sm:$0xf]
    %v85 = vld [vmem:[%s1 + $0xdc] sm:$0xf]
    %v86 = vld [vmem:[%s1 + $0xe0] sm:$0xf]
    %v87 = vld [vmem:[%s1 + $0xe4] sm:$0xf]
    %v88 = vld [vmem:[%s1 + $0xe8] sm:$0xf]
    %v89 = vld [vmem:[%s1 + $0xec] sm:$0xf]
    %v90 = vld [vmem:[%s1 + $0xf0] sm:$0xf]
    %v91 = vld [vmem:[%s1 + $0xf4] sm:$0xf]
    %v92 = vld [vmem:[%s1 + $0xf8] sm:$0xf]
    %v93 = vld [vmem:[%s1 + $0xfc] sm:$0xf]
    %v94 = vld [vmem:[%s2] sm:$0x1]
    %v95 = vld [vmem:[%s2 + $0x1] sm:$0x1]
    %v96 = vld [vmem:[%s2 + $0x2] sm:$0x1]
    %v97 = vld [vmem:[%s2 + $0x3] sm:$0x1]
    %v102 = vlaneseq
    %v103 = vshrl.u32 %v102, 7
    %v104 = vsub.s32 0, %v103
    %v105 = vrot.slane %v94, %v104
    %v106 = vlaneseq
    %v107 = vshrl.u32 %v106, 7
    %v108 = vsub.s32 0, %v107
    %v109 = vrot.slane %v95, %v108
    %v110 = vlaneseq
    %v111 = vshrl.u32 %v110, 7
    %v112 = vsub.s32 0, %v111
    %v113 = vrot.slane %v96, %v112
    %v114 = vlaneseq
    %v115 = vshrl.u32 %v114, 7
    %v116 = vsub.s32 0, %v115
    %v117 = vrot.slane %v97, %v116
    %v138 = vunpack.c.l.b16 %v30
    %v139 = vunpack.c.l.b16 %v31
    %v140 = vunpack.c.l.b16 %v32
    %v141 = vunpack.c.l.b16 %v33
    %v142 = vunpack.c.l.b16 %v34
    %v143 = vunpack.c.l.b16 %v35
    %v144 = vunpack.c.l.b16 %v36
    %v145 = vunpack.c.l.b16 %v37
    %v146 = vunpack.c.l.b16 %v38
    %v147 = vunpack.c.l.b16 %v39
    %v148 = vunpack.c.l.b16 %v40
    %v149 = vunpack.c.l.b16 %v41
    %v150 = vunpack.c.l.b16 %v42
    %v151 = vunpack.c.l.b16 %v43
    %v152 = vunpack.c.l.b16 %v44
    %v153 = vunpack.c.l.b16 %v45
    %v154 = vpack.c.b16 %v139, %v138
    %v155 = vpack.c.b16 %v141, %v140
    %v156 = vpack.c.b16 %v143, %v142
    %v157 = vpack.c.b16 %v145, %v144
    %v158 = vpack.c.b16 %v147, %v146
    %v159 = vpack.c.b16 %v149, %v148
    %v160 = vpack.c.b16 %v151, %v150
    %v161 = vpack.c.b16 %v153, %v152
    %170 = vmatprep.subr.bf16.mxu0 0
    %171 = vmatpush1.bf16.msra.mxu0 %v154
    %172 = vmatprep.subr.bf16.mxu0 0
    %173 = vmatpush1.bf16.msra.mxu0 %v155
    %174 = vmatprep.subr.bf16.mxu0 0
    %175 = vmatpush1.bf16.msra.mxu0 %v156
    %176 = vmatprep.subr.bf16.mxu0 0
    %177 = vmatpush1.bf16.msra.mxu0 %v157
    %178 = vmatprep.subr.bf16.mxu0 0
    %179 = vmatpush1.bf16.msra.mxu0 %v158
    %180 = vmatprep.subr.bf16.mxu0 0
    %181 = vmatpush1.bf16.msra.mxu0 %v159
    %182 = vmatprep.subr.bf16.mxu0 0
    %183 = vmatpush1.bf16.msra.mxu0 %v160
    %184 = vmatprep.subr.bf16.mxu0 0
    %185 = vmatpush1.bf16.msra.mxu0 %v161
    %186 = vmatprep.subr.bf16.mxu0 0
    %187 = vmatpush1.bf16.msra.mxu0 0
    %188 = vmatprep.subr.bf16.mxu0 0
    %189 = vmatpush1.bf16.msra.mxu0 0
    %190 = vmatprep.subr.bf16.mxu0 0
    %191 = vmatpush1.bf16.msra.mxu0 0
    %192 = vmatprep.subr.bf16.mxu0 0
    %193 = vmatpush1.bf16.msra.mxu0 0
    %194 = vmatprep.subr.bf16.mxu0 0
    %195 = vmatpush1.bf16.msra.mxu0 0
    %196 = vmatprep.subr.bf16.mxu0 0
    %197 = vmatpush1.bf16.msra.mxu0 0
    %198 = vmatprep.subr.bf16.mxu0 0
    %199 = vmatpush1.bf16.msra.mxu0 0
    %200 = vmatprep.subr.bf16.mxu0 0
    %201 = vmatpush1.bf16.msra.mxu0 0
    %202 = vmatprep.mubr.bf16.mxu0 0
    %203 = vmatmul.mubr.bf16.gmra.mrb[0].mxu0 %v26
    %v204 = vpop.f32.mrb[0].mxu0
    %v205 = vadd.f32 %v105, %v204
    %v206 = vpop.f32.mrb[0].mxu0
    %v207 = vpop.f32.mrb[0].mxu0
    %v208 = vpop.f32.mrb[0].mxu0
    %209 = vdwg.mxu0
    %v226 = vunpack.c.l.b16 %v46
    %v227 = vunpack.c.l.b16 %v47
    %v228 = vunpack.c.l.b16 %v48
    %v229 = vunpack.c.l.b16 %v49
    %v230 = vunpack.c.l.b16 %v50
    %v231 = vunpack.c.l.b16 %v51
    %v232 = vunpack.c.l.b16 %v52
    %v233 = vunpack.c.l.b16 %v53
    %v234 = vunpack.c.l.b16 %v54
    %v235 = vunpack.c.l.b16 %v55
    %v236 = vunpack.c.l.b16 %v56
    %v237 = vunpack.c.l.b16 %v57
    %v238 = vunpack.c.l.b16 %v58
    %v239 = vunpack.c.l.b16 %v59
    %v240 = vunpack.c.l.b16 %v60
    %v241 = vunpack.c.l.b16 %v61
    %v242 = vpack.c.b16 %v227, %v226
    %v243 = vpack.c.b16 %v229, %v228
    %v244 = vpack.c.b16 %v231, %v230
    %v245 = vpack.c.b16 %v233, %v232
    %v246 = vpack.c.b16 %v235, %v234
    %v247 = vpack.c.b16 %v237, %v236
    %v248 = vpack.c.b16 %v239, %v238
    %v249 = vpack.c.b16 %v241, %v240
    %258 = vmatprep.subr.bf16.mxu0 0
    %259 = vmatpush1.bf16.msra.mxu0 %v242
    %260 = vmatprep.subr.bf16.mxu0 0
    %261 = vmatpush1.bf16.msra.mxu0 %v243
    %262 = vmatprep.subr.bf16.mxu0 0
    %263 = vmatpush1.bf16.msra.mxu0 %v244
    %264 = vmatprep.subr.bf16.mxu0 0
    %265 = vmatpush1.bf16.msra.mxu0 %v245
    %266 = vmatprep.subr.bf16.mxu0 0
    %267 = vmatpush1.bf16.msra.mxu0 %v246
    %268 = vmatprep.subr.bf16.mxu0 0
    %269 = vmatpush1.bf16.msra.mxu0 %v247
    %270 = vmatprep.subr.bf16.mxu0 0
    %271 = vmatpush1.bf16.msra.mxu0 %v248
    %272 = vmatprep.subr.bf16.mxu0 0
    %273 = vmatpush1.bf16.msra.mxu0 %v249
    %274 = vmatprep.subr.bf16.mxu0 0
    %275 = vmatpush1.bf16.msra.mxu0 0
    %276 = vmatprep.subr.bf16.mxu0 0
    %277 = vmatpush1.bf16.msra.mxu0 0
    %278 = vmatprep.subr.bf16.mxu0 0
    %279 = vmatpush1.bf16.msra.mxu0 0
    %280 = vmatprep.subr.bf16.mxu0 0
    %281 = vmatpush1.bf16.msra.mxu0 0
    %282 = vmatprep.subr.bf16.mxu0 0
    %283 = vmatpush1.bf16.msra.mxu0 0
    %284 = vmatprep.subr.bf16.mxu0 0
    %285 = vmatpush1.bf16.msra.mxu0 0
    %286 = vmatprep.subr.bf16.mxu0 0
    %287 = vmatpush1.bf16.msra.mxu0 0
    %288 = vmatprep.subr.bf16.mxu0 0
    %289 = vmatpush1.bf16.msra.mxu0 0
    %290 = vmatprep.mubr.bf16.mxu0 0
    %291 = vmatmul.mubr.bf16.gmra.mrb[0].mxu0 %v27
    %v292 = vpop.f32.mrb[0].mxu0
    %v293 = vadd.f32 %v109, %v292
    %v294 = vpop.f32.mrb[0].mxu0
    %v295 = vpop.f32.mrb[0].mxu0
    %v296 = vpop.f32.mrb[0].mxu0
    %297 = vdwg.mxu0
    %v314 = vunpack.c.l.b16 %v62
    %v315 = vunpack.c.l.b16 %v63
    %v316 = vunpack.c.l.b16 %v64
    %v317 = vunpack.c.l.b16 %v65
    %v318 = vunpack.c.l.b16 %v66
    %v319 = vunpack.c.l.b16 %v67
    %v320 = vunpack.c.l.b16 %v68
    %v321 = vunpack.c.l.b16 %v69
    %v322 = vunpack.c.l.b16 %v70
    %v323 = vunpack.c.l.b16 %v71
    %v324 = vunpack.c.l.b16 %v72
    %v325 = vunpack.c.l.b16 %v73
    %v326 = vunpack.c.l.b16 %v74
    %v327 = vunpack.c.l.b16 %v75
    %v328 = vunpack.c.l.b16 %v76
    %v329 = vunpack.c.l.b16 %v77
    %v330 = vpack.c.b16 %v315, %v314
    %v331 = vpack.c.b16 %v317, %v316
    %v332 = vpack.c.b16 %v319, %v318
    %v333 = vpack.c.b16 %v321, %v320
    %v334 = vpack.c.b16 %v323, %v322
    %v335 = vpack.c.b16 %v325, %v324
    %v336 = vpack.c.b16 %v327, %v326
    %v337 = vpack.c.b16 %v329, %v328
    %346 = vmatprep.subr.bf16.mxu0 0
    %347 = vmatpush1.bf16.msra.mxu0 %v330
    %348 = vmatprep.subr.bf16.mxu0 0
    %349 = vmatpush1.bf16.msra.mxu0 %v331
    %350 = vmatprep.subr.bf16.mxu0 0
    %351 = vmatpush1.bf16.msra.mxu0 %v332
    %352 = vmatprep.subr.bf16.mxu0 0
    %353 = vmatpush1.bf16.msra.mxu0 %v333
    %354 = vmatprep.subr.bf16.mxu0 0
    %355 = vmatpush1.bf16.msra.mxu0 %v334
    %356 = vmatprep.subr.bf16.mxu0 0
    %357 = vmatpush1.bf16.msra.mxu0 %v335
    %358 = vmatprep.subr.bf16.mxu0 0
    %359 = vmatpush1.bf16.msra.mxu0 %v336
    %360 = vmatprep.subr.bf16.mxu0 0
    %361 = vmatpush1.bf16.msra.mxu0 %v337
    %362 = vmatprep.subr.bf16.mxu0 0
    %363 = vmatpush1.bf16.msra.mxu0 0
    %364 = vmatprep.subr.bf16.mxu0 0
    %365 = vmatpush1.bf16.msra.mxu0 0
    %366 = vmatprep.subr.bf16.mxu0 0
    %367 = vmatpush1.bf16.msra.mxu0 0
    %368 = vmatprep.subr.bf16.mxu0 0
    %369 = vmatpush1.bf16.msra.mxu0 0
    %370 = vmatprep.subr.bf16.mxu0 0
    %371 = vmatpush1.bf16.msra.mxu0 0
    %372 = vmatprep.subr.bf16.mxu0 0
    %373 = vmatpush1.bf16.msra.mxu0 0
    %374 = vmatprep.subr.bf16.mxu0 0
    %375 = vmatpush1.bf16.msra.mxu0 0
    %376 = vmatprep.subr.bf16.mxu0 0
    %377 = vmatpush1.bf16.msra.mxu0 0
    %378 = vmatprep.mubr.bf16.mxu0 0
    %379 = vmatmul.mubr.bf16.gmra.mrb[0].mxu0 %v28
    %v380 = vpop.f32.mrb[0].mxu0
    %v381 = vadd.f32 %v113, %v380
    %v382 = vpop.f32.mrb[0].mxu0
    %v383 = vpop.f32.mrb[0].mxu0
    %v384 = vpop.f32.mrb[0].mxu0
    %385 = vdwg.mxu0
    %v402 = vunpack.c.l.b16 %v78
    %v403 = vunpack.c.l.b16 %v79
    %v404 = vunpack.c.l.b16 %v80
    %v405 = vunpack.c.l.b16 %v81
    %v406 = vunpack.c.l.b16 %v82
    %v407 = vunpack.c.l.b16 %v83
    %v408 = vunpack.c.l.b16 %v84
    %v409 = vunpack.c.l.b16 %v85
    %v410 = vunpack.c.l.b16 %v86
    %v411 = vunpack.c.l.b16 %v87
    %v412 = vunpack.c.l.b16 %v88
    %v413 = vunpack.c.l.b16 %v89
    %v414 = vunpack.c.l.b16 %v90
    %v415 = vunpack.c.l.b16 %v91
    %v416 = vunpack.c.l.b16 %v92
    %v417 = vunpack.c.l.b16 %v93
    %v418 = vpack.c.b16 %v403, %v402
    %v419 = vpack.c.b16 %v405, %v404
    %v420 = vpack.c.b16 %v407, %v406
    %v421 = vpack.c.b16 %v409, %v408
    %v422 = vpack.c.b16 %v411, %v410
    %v423 = vpack.c.b16 %v413, %v412
    %v424 = vpack.c.b16 %v415, %v414
    %v425 = vpack.c.b16 %v417, %v416
    %434 = vmatprep.subr.bf16.mxu0 0
    %435 = vmatpush1.bf16.msra.mxu0 %v418
    %436 = vmatprep.subr.bf16.mxu0 0
    %437 = vmatpush1.bf16.msra.mxu0 %v419
    %438 = vmatprep.subr.bf16.mxu0 0
    %439 = vmatpush1.bf16.msra.mxu0 %v420
    %440 = vmatprep.subr.bf16.mxu0 0
    %441 = vmatpush1.bf16.msra.mxu0 %v421
    %442 = vmatprep.subr.bf16.mxu0 0
    %443 = vmatpush1.bf16.msra.mxu0 %v422
    %444 = vmatprep.subr.bf16.mxu0 0
    %445 = vmatpush1.bf16.msra.mxu0 %v423
    %446 = vmatprep.subr.bf16.mxu0 0
    %447 = vmatpush1.bf16.msra.mxu0 %v424
    %448 = vmatprep.subr.bf16.mxu0 0
    %449 = vmatpush1.bf16.msra.mxu0 %v425
    %450 = vmatprep.subr.bf16.mxu0 0
    %451 = vmatpush1.bf16.msra.mxu0 0
    %452 = vmatprep.subr.bf16.mxu0 0
    %453 = vmatpush1.bf16.msra.mxu0 0
    %454 = vmatprep.subr.bf16.mxu0 0
    %455 = vmatpush1.bf16.msra.mxu0 0
    %456 = vmatprep.subr.bf16.mxu0 0
    %457 = vmatpush1.bf16.msra.mxu0 0
    %458 = vmatprep.subr.bf16.mxu0 0
    %459 = vmatpush1.bf16.msra.mxu0 0
    %460 = vmatprep.subr.bf16.mxu0 0
    %461 = vmatpush1.bf16.msra.mxu0 0
    %462 = vmatprep.subr.bf16.mxu0 0
    %463 = vmatpush1.bf16.msra.mxu0 0
    %464 = vmatprep.subr.bf16.mxu0 0
    %465 = vmatpush1.bf16.msra.mxu0 0
    %466 = vmatprep.mubr.bf16.mxu0 0
    %467 = vmatmul.mubr.bf16.gmra.mrb[0].mxu0 %v29
    %v468 = vpop.f32.mrb[0].mxu0
    %v469 = vadd.f32 %v117, %v468
    %v470 = vpop.f32.mrb[0].mxu0
    %v471 = vpop.f32.mrb[0].mxu0
    %v472 = vpop.f32.mrb[0].mxu0
    %473 = vdwg.mxu0
    %v474 = vmax.f32 %v205, 0.0
    %v475 = vmax.f32 %v293, 0.0
    %v476 = vmax.f32 %v381, 0.0
    %v477 = vmax.f32 %v469, 0.0
    %v478 = vpack.c.bf16 %v474, %v474
    %v479 = vpack.c.bf16 %v475, %v475
    %v480 = vpack.c.bf16 %v476, %v476
    %v481 = vpack.c.bf16 %v477, %v477
    %v482 = vld [vmem:[%s3] sm:$0xf]
    %v483 = vld [vmem:[%s3 + $0x4] sm:$0xf]
    %v484 = vld [vmem:[%s3 + $0x8] sm:$0xf]
    %v485 = vld [vmem:[%s3 + $0xc] sm:$0xf]
    %v486 = vld [vmem:[%s3 + $0x10] sm:$0xf]
    %v487 = vld [vmem:[%s3 + $0x14] sm:$0xf]
    %v488 = vld [vmem:[%s3 + $0x18] sm:$0xf]
    %v489 = vld [vmem:[%s3 + $0x1c] sm:$0xf]
    %v490 = vld [vmem:[%s3 + $0x20] sm:$0xf]
    %v491 = vld [vmem:[%s3 + $0x24] sm:$0xf]
    %v492 = vld [vmem:[%s3 + $0x28] sm:$0xf]
    %v493 = vld [vmem:[%s3 + $0x2c] sm:$0xf]
    %v494 = vld [vmem:[%s3 + $0x30] sm:$0xf]
    %v495 = vld [vmem:[%s3 + $0x34] sm:$0xf]
    %v496 = vld [vmem:[%s3 + $0x38] sm:$0xf]
    %v497 = vld [vmem:[%s3 + $0x3c] sm:$0xf]
    %v498 = vld [vmem:[%s3 + $0x40] sm:$0xf]
    %v499 = vld [vmem:[%s3 + $0x44] sm:$0xf]
    %v500 = vld [vmem:[%s3 + $0x48] sm:$0xf]
    %v501 = vld [vmem:[%s3 + $0x4c] sm:$0xf]
    %v502 = vld [vmem:[%s3 + $0x50] sm:$0xf]
    %v503 = vld [vmem:[%s3 + $0x54] sm:$0xf]
    %v504 = vld [vmem:[%s3 + $0x58] sm:$0xf]
    %v505 = vld [vmem:[%s3 + $0x5c] sm:$0xf]
    %v506 = vld [vmem:[%s3 + $0x60] sm:$0xf]
    %v507 = vld [vmem:[%s3 + $0x64] sm:$0xf]
    %v508 = vld [vmem:[%s3 + $0x68] sm:$0xf]
    %v509 = vld [vmem:[%s3 + $0x6c] sm:$0xf]
    %v510 = vld [vmem:[%s3 + $0x70] sm:$0xf]
    %v511 = vld [vmem:[%s3 + $0x74] sm:$0xf]
    %v512 = vld [vmem:[%s3 + $0x78] sm:$0xf]
    %v513 = vld [vmem:[%s3 + $0x7c] sm:$0xf]
    %v514 = vld [vmem:[%s3 + $0x80] sm:$0xf]
    %v515 = vld [vmem:[%s3 + $0x84] sm:$0xf]
    %v516 = vld [vmem:[%s3 + $0x88] sm:$0xf]
    %v517 = vld [vmem:[%s3 + $0x8c] sm:$0xf]
    %v518 = vld [vmem:[%s3 + $0x90] sm:$0xf]
    %v519 = vld [vmem:[%s3 + $0x94] sm:$0xf]
    %v520 = vld [vmem:[%s3 + $0x98] sm:$0xf]
    %v521 = vld [vmem:[%s3 + $0x9c] sm:$0xf]
    %v522 = vld [vmem:[%s3 + $0xa0] sm:$0xf]
    %v523 = vld [vmem:[%s3 + $0xa4] sm:$0xf]
    %v524 = vld [vmem:[%s3 + $0xa8] sm:$0xf]
    %v525 = vld [vmem:[%s3 + $0xac] sm:$0xf]
    %v526 = vld [vmem:[%s3 + $0xb0] sm:$0xf]
    %v527 = vld [vmem:[%s3 + $0xb4] sm:$0xf]
    %v528 = vld [vmem:[%s3 + $0xb8] sm:$0xf]
    %v529 = vld [vmem:[%s3 + $0xbc] sm:$0xf]
    %v530 = vld [vmem:[%s3 + $0xc0] sm:$0xf]
    %v531 = vld [vmem:[%s3 + $0xc4] sm:$0xf]
    %v532 = vld [vmem:[%s3 + $0xc8] sm:$0xf]
    %v533 = vld [vmem:[%s3 + $0xcc] sm:$0xf]
    %v534 = vld [vmem:[%s3 + $0xd0] sm:$0xf]
    %v535 = vld [vmem:[%s3 + $0xd4] sm:$0xf]
    %v536 = vld [vmem:[%s3 + $0xd8] sm:$0xf]
    %v537 = vld [vmem:[%s3 + $0xdc] sm:$0xf]
    %v538 = vld [vmem:[%s3 + $0xe0] sm:$0xf]
    %v539 = vld [vmem:[%s3 + $0xe4] sm:$0xf]
    %v540 = vld [vmem:[%s3 + $0xe8] sm:$0xf]
    %v541 = vld [vmem:[%s3 + $0xec] sm:$0xf]
    %v542 = vld [vmem:[%s3 + $0xf0] sm:$0xf]
    %v543 = vld [vmem:[%s3 + $0xf4] sm:$0xf]
    %v544 = vld [vmem:[%s3 + $0xf8] sm:$0xf]
    %v545 = vld [vmem:[%s3 + $0xfc] sm:$0xf]
    %v546 = vld [vmem:[%s4] sm:$0x1]
    %v547 = vld [vmem:[%s4 + $0x1] sm:$0x1]
    %v548 = vld [vmem:[%s4 + $0x2] sm:$0x1]
    %v549 = vld [vmem:[%s4 + $0x3] sm:$0x1]
    %v554 = vlaneseq
    %v555 = vshrl.u32 %v554, 7
    %v556 = vsub.s32 0, %v555
    %v557 = vrot.slane %v546, %v556
    %v558 = vlaneseq
    %v559 = vshrl.u32 %v558, 7
    %v560 = vsub.s32 0, %v559
    %v561 = vrot.slane %v547, %v560
    %v562 = vlaneseq
    %v563 = vshrl.u32 %v562, 7
    %v564 = vsub.s32 0, %v563
    %v565 = vrot.slane %v548, %v564
    %v566 = vlaneseq
    %v567 = vshrl.u32 %v566, 7
    %v568 = vsub.s32 0, %v567
    %v569 = vrot.slane %v549, %v568
    %v590 = vunpack.c.l.b16 %v482
    %v591 = vunpack.c.l.b16 %v483
    %v592 = vunpack.c.l.b16 %v484
    %v593 = vunpack.c.l.b16 %v485
    %v594 = vunpack.c.l.b16 %v486
    %v595 = vunpack.c.l.b16 %v487
    %v596 = vunpack.c.l.b16 %v488
    %v597 = vunpack.c.l.b16 %v489
    %v598 = vunpack.c.l.b16 %v490
    %v599 = vunpack.c.l.b16 %v491
    %v600 = vunpack.c.l.b16 %v492
    %v601 = vunpack.c.l.b16 %v493
    %v602 = vunpack.c.l.b16 %v494
    %v603 = vunpack.c.l.b16 %v495
    %v604 = vunpack.c.l.b16 %v496
    %v605 = vunpack.c.l.b16 %v497
    %v606 = vpack.c.b16 %v591, %v590
    %v607 = vpack.c.b16 %v593, %v592
    %v608 = vpack.c.b16 %v595, %v594
    %v609 = vpack.c.b16 %v597, %v596
    %v610 = vpack.c.b16 %v599, %v598
    %v611 = vpack.c.b16 %v601, %v600
    %v612 = vpack.c.b16 %v603, %v602
    %v613 = vpack.c.b16 %v605, %v604
    %622 = vmatprep.subr.bf16.mxu0 0
    %623 = vmatpush1.bf16.msra.mxu0 %v606
    %624 = vmatprep.subr.bf16.mxu0 0
    %625 = vmatpush1.bf16.msra.mxu0 %v607
    %626 = vmatprep.subr.bf16.mxu0 0
    %627 = vmatpush1.bf16.msra.mxu0 %v608
    %628 = vmatprep.subr.bf16.mxu0 0
    %629 = vmatpush1.bf16.msra.mxu0 %v609
    %630 = vmatprep.subr.bf16.mxu0 0
    %631 = vmatpush1.bf16.msra.mxu0 %v610
    %632 = vmatprep.subr.bf16.mxu0 0
    %633 = vmatpush1.bf16.msra.mxu0 %v611
    %634 = vmatprep.subr.bf16.mxu0 0
    %635 = vmatpush1.bf16.msra.mxu0 %v612
    %636 = vmatprep.subr.bf16.mxu0 0
    %637 = vmatpush1.bf16.msra.mxu0 %v613
    %638 = vmatprep.subr.bf16.mxu0 0
    %639 = vmatpush1.bf16.msra.mxu0 0
    %640 = vmatprep.subr.bf16.mxu0 0
    %641 = vmatpush1.bf16.msra.mxu0 0
    %642 = vmatprep.subr.bf16.mxu0 0
    %643 = vmatpush1.bf16.msra.mxu0 0
    %644 = vmatprep.subr.bf16.mxu0 0
    %645 = vmatpush1.bf16.msra.mxu0 0
    %646 = vmatprep.subr.bf16.mxu0 0
    %647 = vmatpush1.bf16.msra.mxu0 0
    %648 = vmatprep.subr.bf16.mxu0 0
    %649 = vmatpush1.bf16.msra.mxu0 0
    %650 = vmatprep.subr.bf16.mxu0 0
    %651 = vmatpush1.bf16.msra.mxu0 0
    %652 = vmatprep.subr.bf16.mxu0 0
    %653 = vmatpush1.bf16.msra.mxu0 0
    %654 = vmatprep.mubr.bf16.mxu0 0
    %655 = vmatmul.mubr.bf16.gmra.mrb[0].mxu0 %v478
    %v656 = vpop.f32.mrb[0].mxu0
    %v657 = vadd.f32 %v557, %v656
    %v658 = vpop.f32.mrb[0].mxu0
    %v659 = vpop.f32.mrb[0].mxu0
    %v660 = vpop.f32.mrb[0].mxu0
    %661 = vdwg.mxu0
    %v678 = vunpack.c.l.b16 %v498
    %v679 = vunpack.c.l.b16 %v499
    %v680 = vunpack.c.l.b16 %v500
    %v681 = vunpack.c.l.b16 %v501
    %v682 = vunpack.c.l.b16 %v502
    %v683 = vunpack.c.l.b16 %v503
    %v684 = vunpack.c.l.b16 %v504
    %v685 = vunpack.c.l.b16 %v505
    %v686 = vunpack.c.l.b16 %v506
    %v687 = vunpack.c.l.b16 %v507
    %v688 = vunpack.c.l.b16 %v508
    %v689 = vunpack.c.l.b16 %v509
    %v690 = vunpack.c.l.b16 %v510
    %v691 = vunpack.c.l.b16 %v511
    %v692 = vunpack.c.l.b16 %v512
    %v693 = vunpack.c.l.b16 %v513
    %v694 = vpack.c.b16 %v679, %v678
    %v695 = vpack.c.b16 %v681, %v680
    %v696 = vpack.c.b16 %v683, %v682
    %v697 = vpack.c.b16 %v685, %v684
    %v698 = vpack.c.b16 %v687, %v686
    %v699 = vpack.c.b16 %v689, %v688
    %v700 = vpack.c.b16 %v691, %v690
    %v701 = vpack.c.b16 %v693, %v692
    %710 = vmatprep.subr.bf16.mxu0 0
    %711 = vmatpush1.bf16.msra.mxu0 %v694
    %712 = vmatprep.subr.bf16.mxu0 0
    %713 = vmatpush1.bf16.msra.mxu0 %v695
    %714 = vmatprep.subr.bf16.mxu0 0
    %715 = vmatpush1.bf16.msra.mxu0 %v696
    %716 = vmatprep.subr.bf16.mxu0 0
    %717 = vmatpush1.bf16.msra.mxu0 %v697
    %718 = vmatprep.subr.bf16.mxu0 0
    %719 = vmatpush1.bf16.msra.mxu0 %v698
    %720 = vmatprep.subr.bf16.mxu0 0
    %721 = vmatpush1.bf16.msra.mxu0 %v699
    %722 = vmatprep.subr.bf16.mxu0 0
    %723 = vmatpush1.bf16.msra.mxu0 %v700
    %724 = vmatprep.subr.bf16.mxu0 0
    %725 = vmatpush1.bf16.msra.mxu0 %v701
    %726 = vmatprep.subr.bf16.mxu0 0
    %727 = vmatpush1.bf16.msra.mxu0 0
    %728 = vmatprep.subr.bf16.mxu0 0
    %729 = vmatpush1.bf16.msra.mxu0 0
    %730 = vmatprep.subr.bf16.mxu0 0
    %731 = vmatpush1.bf16.msra.mxu0 0
    %732 = vmatprep.subr.bf16.mxu0 0
    %733 = vmatpush1.bf16.msra.mxu0 0
    %734 = vmatprep.subr.bf16.mxu0 0
    %735 = vmatpush1.bf16.msra.mxu0 0
    %736 = vmatprep.subr.bf16.mxu0 0
    %737 = vmatpush1.bf16.msra.mxu0 0
    %738 = vmatprep.subr.bf16.mxu0 0
    %739 = vmatpush1.bf16.msra.mxu0 0
    %740 = vmatprep.subr.bf16.mxu0 0
    %741 = vmatpush1.bf16.msra.mxu0 0
    %742 = vmatprep.mubr.bf16.mxu0 0
    %743 = vmatmul.mubr.bf16.gmra.mrb[0].mxu0 %v479
    %v744 = vpop.f32.mrb[0].mxu0
    %v745 = vadd.f32 %v561, %v744
    %v746 = vpop.f32.mrb[0].mxu0
    %v747 = vpop.f32.mrb[0].mxu0
    %v748 = vpop.f32.mrb[0].mxu0
    %749 = vdwg.mxu0
    %v766 = vunpack.c.l.b16 %v514
    %v767 = vunpack.c.l.b16 %v515
    %v768 = vunpack.c.l.b16 %v516
    %v769 = vunpack.c.l.b16 %v517
    %v770 = vunpack.c.l.b16 %v518
    %v771 = vunpack.c.l.b16 %v519
    %v772 = vunpack.c.l.b16 %v520
    %v773 = vunpack.c.l.b16 %v521
    %v774 = vunpack.c.l.b16 %v522
    %v775 = vunpack.c.l.b16 %v523
    %v776 = vunpack.c.l.b16 %v524
    %v777 = vunpack.c.l.b16 %v525
    %v778 = vunpack.c.l.b16 %v526
    %v779 = vunpack.c.l.b16 %v527
    %v780 = vunpack.c.l.b16 %v528
    %v781 = vunpack.c.l.b16 %v529
    %v782 = vpack.c.b16 %v767, %v766
    %v783 = vpack.c.b16 %v769, %v768
    %v784 = vpack.c.b16 %v771, %v770
    %v785 = vpack.c.b16 %v773, %v772
    %v786 = vpack.c.b16 %v775, %v774
    %v787 = vpack.c.b16 %v777, %v776
    %v788 = vpack.c.b16 %v779, %v778
    %v789 = vpack.c.b16 %v781, %v780
    %798 = vmatprep.subr.bf16.mxu0 0
    %799 = vmatpush1.bf16.msra.mxu0 %v782
    %800 = vmatprep.subr.bf16.mxu0 0
    %801 = vmatpush1.bf16.msra.mxu0 %v783
    %802 = vmatprep.subr.bf16.mxu0 0
    %803 = vmatpush1.bf16.msra.mxu0 %v784
    %804 = vmatprep.subr.bf16.mxu0 0
    %805 = vmatpush1.bf16.msra.mxu0 %v785
    %806 = vmatprep.subr.bf16.mxu0 0
    %807 = vmatpush1.bf16.msra.mxu0 %v786
    %808 = vmatprep.subr.bf16.mxu0 0
    %809 = vmatpush1.bf16.msra.mxu0 %v787
    %810 = vmatprep.subr.bf16.mxu0 0
    %811 = vmatpush1.bf16.msra.mxu0 %v788
    %812 = vmatprep.subr.bf16.mxu0 0
    %813 = vmatpush1.bf16.msra.mxu0 %v789
    %814 = vmatprep.subr.bf16.mxu0 0
    %815 = vmatpush1.bf16.msra.mxu0 0
    %816 = vmatprep.subr.bf16.mxu0 0
    %817 = vmatpush1.bf16.msra.mxu0 0
    %818 = vmatprep.subr.bf16.mxu0 0
    %819 = vmatpush1.bf16.msra.mxu0 0
    %820 = vmatprep.subr.bf16.mxu0 0
    %821 = vmatpush1.bf16.msra.mxu0 0
    %822 = vmatprep.subr.bf16.mxu0 0
    %823 = vmatpush1.bf16.msra.mxu0 0
    %824 = vmatprep.subr.bf16.mxu0 0
    %825 = vmatpush1.bf16.msra.mxu0 0
    %826 = vmatprep.subr.bf16.mxu0 0
    %827 = vmatpush1.bf16.msra.mxu0 0
    %828 = vmatprep.subr.bf16.mxu0 0
    %829 = vmatpush1.bf16.msra.mxu0 0
    %830 = vmatprep.mubr.bf16.mxu0 0
    %831 = vmatmul.mubr.bf16.gmra.mrb[0].mxu0 %v480
    %v832 = vpop.f32.mrb[0].mxu0
    %v833 = vadd.f32 %v565, %v832
    %v834 = vpop.f32.mrb[0].mxu0
    %v835 = vpop.f32.mrb[0].mxu0
    %v836 = vpop.f32.mrb[0].mxu0
    %837 = vdwg.mxu0
    %v854 = vunpack.c.l.b16 %v530
    %v855 = vunpack.c.l.b16 %v531
    %v856 = vunpack.c.l.b16 %v532
    %v857 = vunpack.c.l.b16 %v533
    %v858 = vunpack.c.l.b16 %v534
    %v859 = vunpack.c.l.b16 %v535
    %v860 = vunpack.c.l.b16 %v536
    %v861 = vunpack.c.l.b16 %v537
    %v862 = vunpack.c.l.b16 %v538
    %v863 = vunpack.c.l.b16 %v539
    %v864 = vunpack.c.l.b16 %v540
    %v865 = vunpack.c.l.b16 %v541
    %v866 = vunpack.c.l.b16 %v542
    %v867 = vunpack.c.l.b16 %v543
    %v868 = vunpack.c.l.b16 %v544
    %v869 = vunpack.c.l.b16 %v545
    %v870 = vpack.c.b16 %v855, %v854
    %v871 = vpack.c.b16 %v857, %v856
    %v872 = vpack.c.b16 %v859, %v858
    %v873 = vpack.c.b16 %v861, %v860
    %v874 = vpack.c.b16 %v863, %v862
    %v875 = vpack.c.b16 %v865, %v864
    %v876 = vpack.c.b16 %v867, %v866
    %v877 = vpack.c.b16 %v869, %v868
    %886 = vmatprep.subr.bf16.mxu0 0
    %887 = vmatpush1.bf16.msra.mxu0 %v870
    %888 = vmatprep.subr.bf16.mxu0 0
    %889 = vmatpush1.bf16.msra.mxu0 %v871
    %890 = vmatprep.subr.bf16.mxu0 0
    %891 = vmatpush1.bf16.msra.mxu0 %v872
    %892 = vmatprep.subr.bf16.mxu0 0
    %893 = vmatpush1.bf16.msra.mxu0 %v873
    %894 = vmatprep.subr.bf16.mxu0 0
    %895 = vmatpush1.bf16.msra.mxu0 %v874
    %896 = vmatprep.subr.bf16.mxu0 0
    %897 = vmatpush1.bf16.msra.mxu0 %v875
    %898 = vmatprep.subr.bf16.mxu0 0
    %899 = vmatpush1.bf16.msra.mxu0 %v876
    %900 = vmatprep.subr.bf16.mxu0 0
    %901 = vmatpush1.bf16.msra.mxu0 %v877
    %902 = vmatprep.subr.bf16.mxu0 0
    %903 = vmatpush1.bf16.msra.mxu0 0
    %904 = vmatprep.subr.bf16.mxu0 0
    %905 = vmatpush1.bf16.msra.mxu0 0
    %906 = vmatprep.subr.bf16.mxu0 0
    %907 = vmatpush1.bf16.msra.mxu0 0
    %908 = vmatprep.subr.bf16.mxu0 0
    %909 = vmatpush1.bf16.msra.mxu0 0
    %910 = vmatprep.subr.bf16.mxu0 0
    %911 = vmatpush1.bf16.msra.mxu0 0
    %912 = vmatprep.subr.bf16.mxu0 0
    %913 = vmatpush1.bf16.msra.mxu0 0
    %914 = vmatprep.subr.bf16.mxu0 0
    %915 = vmatpush1.bf16.msra.mxu0 0
    %916 = vmatprep.subr.bf16.mxu0 0
    %917 = vmatpush1.bf16.msra.mxu0 0
    %918 = vmatprep.mubr.bf16.mxu0 0
    %919 = vmatmul.mubr.bf16.gmra.mrb[0].mxu0 %v481
    %v920 = vpop.f32.mrb[0].mxu0
    %v921 = vadd.f32 %v569, %v920
    %v922 = vpop.f32.mrb[0].mxu0
    %v923 = vpop.f32.mrb[0].mxu0
    %v924 = vpop.f32.mrb[0].mxu0
    %925 = vdwg.mxu0
    %vm926 = vcmask 1043456
    %v927 = vsel %vm926, %v657, -inf
    %928 = vmax.xlane.f32.xlu0 %v927
    %v929 = vpop.xlane.xlu0 %928
    %v930 = vsel %vm926, %v745, -inf
    %931 = vmax.xlane.f32.xlu0 %v930
    %v932 = vpop.xlane.xlu0 %931
    %v933 = vsel %vm926, %v833, -inf
    %934 = vmax.xlane.f32.xlu0 %v933
    %v935 = vpop.xlane.xlu0 %934
    %v936 = vsel %vm926, %v921, -inf
    %937 = vmax.xlane.f32.xlu0 %v936
    %v938 = vpop.xlane.xlu0 %937
    %v939 = vsub.f32 %v657, %v929
    %v940 = vsub.f32 %v745, %v932
    %v941 = vsub.f32 %v833, %v935
    %v942 = vsub.f32 %v921, %v938
    %v943 = vmul.f32 %v939, 1.442695
    %v944 = vpow.pop %v943
    %v945 = vmul.f32 %v940, 1.442695
    %v946 = vpow.pop %v945
    %v947 = vmul.f32 %v941, 1.442695
    %v948 = vpow.pop %v947
    %v949 = vmul.f32 %v942, 1.442695
    %v950 = vpow.pop %v949
    %v951 = vsel %vm926, %v944, 0.0
    %952 = vadd.xlane.f32.xlu0 %v951
    %v953 = vpop.xlane.xlu0 %952
    %v954 = vsel %vm926, %v946, 0.0
    %955 = vadd.xlane.f32.xlu0 %v954
    %v956 = vpop.xlane.xlu0 %955
    %v957 = vsel %vm926, %v948, 0.0
    %958 = vadd.xlane.f32.xlu0 %v957
    %v959 = vpop.xlane.xlu0 %958
    %v960 = vsel %vm926, %v950, 0.0
    %961 = vadd.xlane.f32.xlu0 %v960
    %v962 = vpop.xlane.xlu0 %961
    %v963 = vrcp.pop %v953
    %v964 = vrcp.pop %v956
    %v965 = vrcp.pop %v959
    %v966 = vrcp.pop %v962
    %v967 = vmul.f32 %v944, %v963
    %v968 = vmul.f32 %v946, %v964
    %v969 = vmul.f32 %v948, %v965
    %v970 = vmul.f32 %v950, %v966
    %v971 = vsel %vm926, %v967, 0.0
    %v972 = vsel %vm926, %v968, 0.0
    %v973 = vadd.f32 %v971, %v972
    %v974 = vsel %vm926, %v969, 0.0
    %v975 = vadd.f32 %v973, %v974
    %v976 = vsel %vm926, %v970, 0.0
    %v977 = vadd.f32 %v975, %v976
    %v978 = vmul.f32 %v977, 0.25
    %979 = vst [vmem:[#allocation2] sm:$0xf] %v978
    // Predicated region
    $region22: #{transformer_forward.5} parent=1 // pred_check
      _
    $region23: #{transformer_forward.5} parent=1 // pred_check_branch
      %981 = sbr.rel (0) target = $region25
    $region24: #{transformer_forward.5} parent=1 // pred_region
      %s983 = ssub.s32 64, 64
      %984 = vsyncadd [#allocation3], %s983
      %s986 = sshll.u32 [#allocation2], 4
      %s987 = int_to_ptr.vmem [resolvable:$true] %s986
      %989 = dma.vmem_to_hbm [thread:$0]  %s987, 64, %s5, [#allocation3]
    $region25: #{transformer_forward.5} parent=1 // pred_fallthru
      _
    // Predicated region
    $region26: #{transformer_forward.5} parent=1 // pred_check
      _
    $region27: #{transformer_forward.5} parent=1 // pred_check_branch
      %991 = sbr.rel (0) target = $region29
    $region28: #{transformer_forward.5} parent=1 // pred_region
      %992 = dma.done [#allocation3], 64
    $region29: #{transformer_forward.5} parent=1 // pred_fallthru
      _
    %993 = vsyncpa [#allocation3], 1

// kernel: transformer_forward.4
$region0: #{transformer_forward.4}
  #allocation0 [shape = 'u32[]', space=smem, size = 0x4, offset = 0x4, fixed_abs, tag = 'smem constant byte address 0x4 - core index']
  #allocation1 [shape = 'u32[144,128]{1,0:T(1,128)}', space=vmem, size = 0x12000, scoped, tag = 'internal scratch']
  #allocation2 [shape = 'f32[4,8,128]{2,1,0:T(8,128)}', space=vmem, size = 0x4000, scoped, tag = 'scratch operand']
  %s0 = inlined_call_operand.vmem [shape: f32[2], index: 0, kind: input, shape index: {}]
  %s1 = inlined_call_operand.vmem [shape: f32[4,8,128], index: 1, kind: input, shape index: {}]
  %s2 = inlined_call_operand.vmem [shape: f32[4,8,128], index: 2, kind: input, shape index: {}]
  %s3 = inlined_call_operand.hbm [shape: bf16[2,128,1024], index: 3, kind: input, shape index: {}]
  %s4 = inlined_call_operand.vmem [shape: f32[2,12,128], index: 4, kind: input, shape index: {}]
  %s5 = inlined_call_operand.vmem [shape: f32[2,1,4,128], index: 5, kind: output, shape index: {}]
  %s6 = sld [smem:[#allocation0]]
  $region65: #{transformer_forward.4} parent=0
    _
  %s8 = ssub.s32 1, %s6
  %s9 = scalar_select 0, %s8, %s6
  $region1: #{transformer_forward.4} parent=0
    #allocation3 [shape = 'u8[512]{0}', space=smem, size = 0x200, scoped, tag = 'input window, operand 0, single buffered']
    #allocation4 [shape = 's32[2]{0}', space=sflag, size = 0x8, scoped, tag = 'scoped memory for transformer_forward.4']
    #allocation5 [shape = 's32[2]{0}', space=sflag, size = 0x8, scoped, tag = 'scoped memory for transformer_forward.4']
    #allocation6 [shape = 'u8[524288]{0}', space=vmem, size = 0x80000, scoped, tag = 'input window, operand 3']
    %10 = vsyncpa [#allocation5], 0
    %11 = vsyncpa [#allocation4], 0
    %s12 = scalar_lea.sflag [#allocation4], 1
    %13 = vsyncpa %s12, 0
    loop: start=0, step=1, limit=4
    $region2: #{transformer_forward.4} parent=1 // loop_pre_header
      _
    $region3: #{transformer_forward.4} parent=1 // loop_header
      %s15 = sphi 0, %s19
      %p16 = scmp.ge.s32.totalorder %s15, 4
      %s22 = sphi 0, %s34
      %s23 = sphi 0, %s30
      %s24 = sphi 0, %s22
      %s25 = sphi 0, %s23
      %s26 = sphi 0, %s24
      %s27 = sphi 0, %s25
      %s35 = sphi 0, %s35
      %s37 = sphi 0, %s35
      %s38 = sphi 0, %s37
      %s52 = sphi 0, %s38
      %s58 = sphi 0, %s60
      %s61 = sphi 0, %s58
      %s62 = sphi 0, %s61
      %s78 = sphi 0, %s62
      %s84 = sphi 0, %s86
      %s87 = sphi 0, %s84
      %s88 = sphi 0, %s87
      %s104 = sphi 0, %s88
      %s110 = sphi 0, %s112
      %s113 = sphi 0, %s110
      %s114 = sphi 0, %s113
      %s130 = sphi 0, %s114
      %s136 = sphi 0, %s138
      %s139 = sphi 0, %s136
      %s140 = sphi 0, %s139
      %s156 = sphi 0, %s140
      %s164 = sphi 0, %s166
      %s167 = sphi 0, %s164
      %s168 = sphi 0, %s167
      %s184 = sphi 0, %s168
    $region4: #{transformer_forward.4} parent=1 // loop_header_branch
      %18 = sbr.rel (%p16) target = $region8
    $region5: #{transformer_forward.4} parent=1 // loop_body
      %s20 = ssub.s32 %s15, 1
      %s21 = ssub.s32 %s15, 2
      %s28 = sadd.s32 1, %s23
      %p29 = scmp.ge.s32.totalorder %s28, 2
      %s30 = scalar_select %p29, 0, %s28
      %s31 = sadd.s32 1, %s22
      %s32 = scalar_select %p29, %s31, %s22
      %p33 = scmp.ge.s32.totalorder %s32, 1
      %s34 = scalar_select %p33, 0, %s32
      %s36 = sadd.s32 %s35, 1
      %p39 = scmp.eq.s32.totalorder %s15, 1
      %p40 = scmp.ne.s32.totalorder %s35, %s37
      %p41 = scmp.eq.s32.totalorder %s15, 0
      %p42 = por %p40, %p41
      %p43 = scmp.ne.s32.totalorder %s35, %s37
      %p44 = scmp.eq.s32.totalorder %s20, 1
      %p45 = por %p43, %p44
      %p46 = scmp.ne.s32.totalorder %s37, %s38
      %p47 = scmp.eq.s32.totalorder %s20, 0
      %p48 = por %p46, %p47
      %p49 = scmp.ne.s32.totalorder %s37, %s38
      %p50 = scmp.eq.s32.totalorder %s21, 1
      %p51 = por %p49, %p50
      %p53 = scmp.ne.s32.totalorder %s38, %s52
      %p54 = scmp.eq.s32.totalorder %s21, 0
      %p55 = por %p53, %p54
      %s56 = ssub.s32 %s22, %s34
      %p57 = scmp.eq.s32.totalorder %s56, 0
      %s59 = sadd.s32 %s58, 1
      %s60 = scalar_select %p57, %s58, %s59
      %p63 = pneg %p57
      %p64 = scmp.eq.s32.totalorder %s15, 1
      %p65 = por %p63, %p64
      %p66 = scmp.ne.s32.totalorder %s58, %s61
      %p67 = scmp.eq.s32.totalorder %s15, 0
      %p68 = por %p66, %p67
      %p69 = scmp.ne.s32.totalorder %s58, %s61
      %p70 = scmp.eq.s32.totalorder %s20, 1
      %p71 = por %p69, %p70
      %p72 = scmp.ne.s32.totalorder %s61, %s62
      %p73 = scmp.eq.s32.totalorder %s20, 0
      %p74 = por %p72, %p73
      %p75 = scmp.ne.s32.totalorder %s61, %s62
      %p76 = scmp.eq.s32.totalorder %s21, 1
      %p77 = por %p75, %p76
      %p79 = scmp.ne.s32.totalorder %s62, %s78
      %p80 = scmp.eq.s32.totalorder %s21, 0
      %p81 = por %p79, %p80
      %s82 = ssub.s32 %s22, %s34
      %p83 = scmp.eq.s32.totalorder %s82, 0
      %s85 = sadd.s32 %s84, 1
      %s86 = scalar_select %p83, %s84, %s85
      %p89 = pneg %p83
      %p90 = scmp.eq.s32.totalorder %s15, 1
      %p91 = por %p89, %p90
      %p92 = scmp.ne.s32.totalorder %s84, %s87
      %p93 = scmp.eq.s32.totalorder %s15, 0
      %p94 = por %p92, %p93
      %p95 = scmp.ne.s32.totalorder %s84, %s87
      %p96 = scmp.eq.s32.totalorder %s20, 1
      %p97 = por %p95, %p96
      %p98 = scmp.ne.s32.totalorder %s87, %s88
      %p99 = scmp.eq.s32.totalorder %s20, 0
      %p100 = por %p98, %p99
      %p101 = scmp.ne.s32.totalorder %s87, %s88
      %p102 = scmp.eq.s32.totalorder %s21, 1
      %p103 = por %p101, %p102
      %p105 = scmp.ne.s32.totalorder %s88, %s104
      %p106 = scmp.eq.s32.totalorder %s21, 0
      %p107 = por %p105, %p106
      %s108 = ssub.s32 %s23, %s30
      %p109 = scmp.eq.s32.totalorder %s108, 0
      %s111 = sadd.s32 %s110, 1
      %s112 = scalar_select %p109, %s110, %s111
      %p115 = pneg %p109
      %p116 = scmp.eq.s32.totalorder %s15, 1
      %p117 = por %p115, %p116
      %p118 = scmp.ne.s32.totalorder %s110, %s113
      %p119 = scmp.eq.s32.totalorder %s15, 0
      %p120 = por %p118, %p119
      %p121 = scmp.ne.s32.totalorder %s110, %s113
      %p122 = scmp.eq.s32.totalorder %s20, 1
      %p123 = por %p121, %p122
      %p124 = scmp.ne.s32.totalorder %s113, %s114
      %p125 = scmp.eq.s32.totalorder %s20, 0
      %p126 = por %p124, %p125
      %p127 = scmp.ne.s32.totalorder %s113, %s114
      %p128 = scmp.eq.s32.totalorder %s21, 1
      %p129 = por %p127, %p128
      %p131 = scmp.ne.s32.totalorder %s114, %s130
      %p132 = scmp.eq.s32.totalorder %s21, 0
      %p133 = por %p131, %p132
      %s134 = ssub.s32 %s23, %s30
      %p135 = scmp.eq.s32.totalorder %s134, 0
      %s137 = sadd.s32 %s136, 1
      %s138 = scalar_select %p135, %s136, %s137
      %p141 = pneg %p135
      %p142 = scmp.eq.s32.totalorder %s15, 1
      %p143 = por %p141, %p142
      %p144 = scmp.ne.s32.totalorder %s136, %s139
      %p145 = scmp.eq.s32.totalorder %s15, 0
      %p146 = por %p144, %p145
      %p147 = scmp.ne.s32.totalorder %s136, %s139
      %p148 = scmp.eq.s32.totalorder %s20, 1
      %p149 = por %p147, %p148
      %p150 = scmp.ne.s32.totalorder %s139, %s140
      %p151 = scmp.eq.s32.totalorder %s20, 0
      %p152 = por %p150, %p151
      %p153 = scmp.ne.s32.totalorder %s139, %s140
      %p154 = scmp.eq.s32.totalorder %s21, 1
      %p155 = por %p153, %p154
      %p157 = scmp.ne.s32.totalorder %s140, %s156
      %p158 = scmp.eq.s32.totalorder %s21, 0
      %p159 = por %p157, %p158
      %s160 = ssub.s32 %s23, %s30
      %s161 = ssub.s32 %s22, %s34
      %s162 = sor.u32 %s160, %s161
      %p163 = scmp.eq.s32.totalorder %s162, 0
      %s165 = sadd.s32 %s164, 1
      %s166 = scalar_select %p163, %s164, %s165
      %p169 = pneg %p163
      %p170 = scmp.eq.s32.totalorder %s15, 1
      %p171 = por %p169, %p170
      %p172 = scmp.ne.s32.totalorder %s164, %s167
      %p173 = scmp.eq.s32.totalorder %s15, 0
      %p174 = por %p172, %p173
      %p175 = scmp.ne.s32.totalorder %s164, %s167
      %p176 = scmp.eq.s32.totalorder %s20, 1
      %p177 = por %p175, %p176
      %p178 = scmp.ne.s32.totalorder %s167, %s168
      %p179 = scmp.eq.s32.totalorder %s20, 0
      %p180 = por %p178, %p179
      %p181 = scmp.ne.s32.totalorder %s167, %s168
      %p182 = scmp.eq.s32.totalorder %s21, 1
      %p183 = por %p181, %p182
      %p185 = scmp.ne.s32.totalorder %s168, %s184
      %p186 = scmp.eq.s32.totalorder %s21, 0
      %p187 = por %p185, %p186
      %p188 = scmp.le.s32.totalorder 1, %s15
      %p189 = scmp.lt.s32.totalorder %s15, 3
      %p190 = pnand %p188, %p189
      %p191 = pneg %p190
      // Predicated region
      $region9: #{transformer_forward.4} parent=5 // pred_check
        _
      $region10: #{transformer_forward.4} parent=5 // pred_check_branch
        %193 = sbr.rel (%p190) target = $region12
      $region11: #{transformer_forward.4} parent=5 // pred_region
        %s194 = ssub.s32 %s15, 1
        // Predicated region
        $region13: #{transformer_forward.4} parent=11 // pred_check
          %p195 = pneg %p48
        $region14: #{transformer_forward.4} parent=11 // pred_check_branch
          %197 = sbr.rel (%p195) target = $region16
        $region15: #{transformer_forward.4} parent=11 // pred_region
          %s199 = ssub.s32 16, 16
          %200 = vsyncadd [#allocation5], %s199
          %s202 = sshll.u32 %s0, 4
          %s203 = int_to_ptr.vmem [resolvable:$true] %s202
          %205 = dma.vmem_to_smem %s203, 16, [#allocation3], [#allocation5]
        $region16: #{transformer_forward.4} parent=11 // pred_fallthru
          _
        // Predicated region
        $region17: #{transformer_forward.4} parent=11 // pred_check
          %p206 = pneg %p74
        $region18: #{transformer_forward.4} parent=11 // pred_check_branch
          %208 = sbr.rel (%p206) target = $region20
        $region19: #{transformer_forward.4} parent=11 // pred_region
          %s209 = smul.u32 4, %s24
          %p210 = scmp.lt.s32.totalorder %s209, 3
          %s211 = scalar_select %p210, %s209, 3
          %s212 = smul.addr %s211, 8
          %s213 = scalar_lea.vmem %s1, %s212
          %s214 = smul.u32 4, %s24
        $region20: #{transformer_forward.4} parent=11 // pred_fallthru
          _
        // Predicated region
        $region21: #{transformer_forward.4} parent=11 // pred_check
          %p215 = pneg %p100
        $region22: #{transformer_forward.4} parent=11 // pred_check_branch
          %217 = sbr.rel (%p215) target = $region24
        $region23: #{transformer_forward.4} parent=11 // pred_region
          %s218 = smul.u32 4, %s24
          %p219 = scmp.lt.s32.totalorder %s218, 3
          %s220 = scalar_select %p219, %s218, 3
          %s221 = smul.addr %s220, 8
          %s222 = scalar_lea.vmem %s2, %s221
          %s223 = smul.u32 4, %s24
        $region24: #{transformer_forward.4} parent=11 // pred_fallthru
          _
      $region12: #{transformer_forward.4} parent=5 // pred_fallthru
        _
      %p224 = scmp.lt.s32.totalorder %s15, 2
      // Predicated region
      $region25: #{transformer_forward.4} parent=5 // pred_check
        %p225 = pneg %p224
      $region26: #{transformer_forward.4} parent=5 // pred_check_branch
        %227 = sbr.rel (%p225) target = $region28
      $region27: #{transformer_forward.4} parent=5 // pred_region
        // Predicated region
        $region29: #{transformer_forward.4} parent=27 // pred_check
          %p228 = pneg %p120
        $region30: #{transformer_forward.4} parent=27 // pred_check_branch
          %230 = sbr.rel (%p228) target = $region32
        $region31: #{transformer_forward.4} parent=27 // pred_region
          %s231 = sand.u32 %s110, 1
          %s232 = scalar_lea.sflag [#allocation4], %s231
          %s233 = sand.u32 %s110, 1
          %s234 = smul.addr %s233, 512
          %s235 = scalar_lea.vmem [#allocation6], %s234
          %s237 = ssub.s32 8192, 8192
          %238 = vsyncadd %s232, %s237
          %s239 = smul.addr %s23, 128
          %s240 = smul.addr %s239, 64
          %s241 = scalar_lea.hbm %s3, %s240
          %s242 = sshll.u32 %s235, 4
          %s243 = int_to_ptr.vmem [resolvable:$true] %s242
          %248 = dma.hbm_to_vmem [thread:$0]  %s241, 8192, %s243, %s232, 512, 512, 32
        $region32: #{transformer_forward.4} parent=27 // pred_fallthru
          _
        // Predicated region
        $region33: #{transformer_forward.4} parent=27 // pred_check
          %p249 = pneg %p146
        $region34: #{transformer_forward.4} parent=27 // pred_check_branch
          %251 = sbr.rel (%p249) target = $region36
        $region35: #{transformer_forward.4} parent=27 // pred_region
          %p252 = scmp.lt.s32.totalorder %s23, 1
          %s253 = scalar_select %p252, %s23, 1
          %s254 = smul.addr %s253, 2
          %s255 = smul.addr %s254, 8
          %s256 = scalar_lea.vmem %s4, %s255
        $region36: #{transformer_forward.4} parent=27 // pred_fallthru
          _
      $region28: #{transformer_forward.4} parent=5 // pred_fallthru
        _
      %p257 = scmp.le.s32.totalorder 1, %s15
      %p258 = scmp.lt.s32.totalorder %s15, 3
      %p259 = pnand %p257, %p258
      %p260 = pneg %p259
      // Predicated region
      $region37: #{transformer_forward.4} parent=5 // pred_check
        _
      $region38: #{transformer_forward.4} parent=5 // pred_check_branch
        %262 = sbr.rel (%p259) target = $region40
      $region39: #{transformer_forward.4} parent=5 // pred_region
        %s263 = ssub.s32 %s15, 1
        // Predicated region
        $region41: #{transformer_forward.4} parent=39 // pred_check
          %p264 = pneg %p48
        $region42: #{transformer_forward.4} parent=39 // pred_check_branch
          %266 = sbr.rel (%p264) target = $region44
        $region43: #{transformer_forward.4} parent=39 // pred_region
          %267 = dma.done [#allocation5], 16
        $region44: #{transformer_forward.4} parent=39 // pred_fallthru
          _
        %s268 = sand.u32 %s113, 1
        %s269 = scalar_lea.sflag [#allocation4], %s268
        %s270 = sand.u32 %s113, 1
        %s271 = smul.addr %s270, 512
        %s272 = scalar_lea.vmem [#allocation6], %s271
        // Predicated region
        $region45: #{transformer_forward.4} parent=39 // pred_check
          %p273 = pneg %p126
        $region46: #{transformer_forward.4} parent=39 // pred_check_branch
          %275 = sbr.rel (%p273) target = $region48
        $region47: #{transformer_forward.4} parent=39 // pred_region
          %276 = dma.done %s269, 8192
        $region48: #{transformer_forward.4} parent=39 // pred_fallthru
          _
        %277 = sfence
        %p278 = pneg %p48
        %p279 = pneg %p45
        %s280 = smul.u32 4, %s24
        %p281 = scmp.lt.s32.totalorder %s280, 3
        %s282 = scalar_select %p281, %s280, 3
        %s283 = smul.addr %s282, 8
        %s284 = scalar_lea.vmem %s1, %s283
        %p285 = pneg %p74
        %p286 = pneg %p71
        %s287 = smul.u32 4, %s24
        %p288 = scmp.lt.s32.totalorder %s287, 3
        %s289 = scalar_select %p288, %s287, 3
        %s290 = smul.addr %s289, 8
        %s291 = scalar_lea.vmem %s2, %s290
        %p292 = pneg %p100
        %p293 = pneg %p97
        %s294 = sand.u32 %s113, 1
        %s295 = scalar_lea.sflag [#allocation4], %s294
        %s296 = sand.u32 %s113, 1
        %s297 = smul.addr %s296, 512
        %s298 = scalar_lea.vmem [#allocation6], %s297
        %p299 = pneg %p126
        %p300 = pneg %p123
        %p301 = scmp.lt.s32.totalorder %s25, 1
        %s302 = scalar_select %p301, %s25, 1
        %s303 = smul.addr %s302, 2
        %s304 = smul.addr %s303, 8
        %s305 = scalar_lea.vmem %s4, %s304
        %p306 = pneg %p152
        %p307 = pneg %p149
        %p308 = pneg %p180
        %p309 = pneg %p177
        %p310 = scmp.lt.s32.totalorder %s25, 1
        %s311 = scalar_select %p310, %s25, 1
        %p312 = scmp.lt.s32.totalorder %s24, 0
        %s313 = scalar_select %p312, %s24, 0
        %s314 = sadd.s32 %s313, %s311
        %s315 = smul.addr %s314, 4
        %s316 = scalar_lea.vmem %s5, %s315
        %s317 = smul.u32 4, %s24
        %p318 = scmp.lt.s32.totalorder %s317, 3
        %s319 = scalar_select %p318, %s317, 3
        %s320 = smul.addr %s319, 8
        %s321 = scalar_lea.vmem %s1, %s320
        %s322 = smul.u32 4, %s24
        %s323 = smul.u32 4, %s24
        %p324 = scmp.lt.s32.totalorder %s323, 3
        %s325 = scalar_select %p324, %s323, 3
        %s326 = smul.addr %s325, 8
        %s327 = scalar_lea.vmem %s2, %s326
        %s328 = smul.u32 4, %s24
        %p329 = scmp.lt.s32.totalorder %s25, 1
        %s330 = scalar_select %p329, %s25, 1
        %s331 = smul.addr %s330, 2
        %s332 = smul.addr %s331, 8
        %s333 = scalar_lea.vmem %s4, %s332
        %p334 = scmp.lt.s32.totalorder %s25, 1
        %s335 = scalar_select %p334, %s25, 1
        %p336 = scmp.lt.s32.totalorder %s24, 0
        %s337 = scalar_select %p336, %s24, 0
        %s338 = sadd.s32 %s337, %s335
        %s339 = smul.addr %s338, 4
        %s340 = scalar_lea.vmem %s5, %s339
        %p342 = scmp.eq.s32.totalorder %s25, 0
        // Predicated region
        $region49: #{transformer_forward.4} parent=39 // pred_check
          %p343 = pneg %p342
        $region50: #{transformer_forward.4} parent=39 // pred_check_branch
          %345 = sbr.rel (%p343) target = $region52
        $region51: #{transformer_forward.4} parent=39 // pred_region
          %v346 = vld [vmem:[%s327] sm:$0xff]
          %v347 = vld [vmem:[%s327 + $0x8] sm:$0xff]
          %v348 = vld [vmem:[%s327 + $0x10] sm:$0xff]
          %v349 = vld [vmem:[%s327 + $0x18] sm:$0xff]
          %350 = vst [vmem:[#allocation2] sm:$0xff] %v346
          %351 = vst [vmem:[#allocation2 + $0x8] sm:$0xff] %v347
          %352 = vst [vmem:[#allocation2 + $0x10] sm:$0xff] %v348
          %353 = vst [vmem:[#allocation2 + $0x18] sm:$0xff] %v349
        $region52: #{transformer_forward.4} parent=39 // pred_fallthru
          _
        %s354 = sld [smem:[#allocation3 + %s25]]
        %v355 = vld [vmem:[%s321] sm:$0xff]
        %v356 = vld [vmem:[%s321 + $0x8] sm:$0xff]
        %v357 = vld [vmem:[%s321 + $0x10] sm:$0xff]
        %v358 = vld [vmem:[%s321 + $0x18] sm:$0xff]
        %v359 = vpack.c.bf16 %v356, %v355
        %v360 = vpack.c.bf16 %v358, %v357
        %v361 = vld [vmem:[#allocation2] sm:$0xff]
        %v362 = vld [vmem:[#allocation2 + $0x8] sm:$0xff]
        %v363 = vld [vmem:[#allocation2 + $0x10] sm:$0xff]
        %v364 = vld [vmem:[#allocation2 + $0x18] sm:$0xff]
        %v365 = vpack.c.bf16 %v362, %v361
        %v366 = vpack.c.bf16 %v364, %v363
        %v367 = vld [vmem:[%s333] sm:$0xff]
        %v368 = vld [vmem:[%s333 + $0x8] sm:$0xf]
        %v369 = vld [vmem:[%s272] sm:$0xff]
        %v370 = vld [vmem:[%s272 + $0x8] sm:$0xff]
        %v371 = vld [vmem:[%s272 + $0x20] sm:$0xff]
        %v372 = vld [vmem:[%s272 + $0x28] sm:$0xff]
        %v373 = vld [vmem:[%s272 + $0x40] sm:$0xff]
        %v374 = vld [vmem:[%s272 + $0x48] sm:$0xff]
        %v375 = vld [vmem:[%s272 + $0x60] sm:$0xff]
        %v376 = vld [vmem:[%s272 + $0x68] sm:$0xff]
        %v377 = vld [vmem:[%s272 + $0x80] sm:$0xff]
        %v378 = vld [vmem:[%s272 + $0x88] sm:$0xff]
        %v379 = vld [vmem:[%s272 + $0xa0] sm:$0xff]
        %v380 = vld [vmem:[%s272 + $0xa8] sm:$0xff]
        %v381 = vld [vmem:[%s272 + $0xc0] sm:$0xff]
        %v382 = vld [vmem:[%s272 + $0xc8] sm:$0xff]
        %v383 = vld [vmem:[%s272 + $0xe0] sm:$0xff]
        %v384 = vld [vmem:[%s272 + $0xe8] sm:$0xff]
        %v385 = vld [vmem:[%s272 + $0x100] sm:$0xff]
        %v386 = vld [vmem:[%s272 + $0x108] sm:$0xff]
        %v387 = vld [vmem:[%s272 + $0x120] sm:$0xff]
        %v388 = vld [vmem:[%s272 + $0x128] sm:$0xff]
        %v389 = vld [vmem:[%s272 + $0x140] sm:$0xff]
        %v390 = vld [vmem:[%s272 + $0x148] sm:$0xff]
        %v391 = vld [vmem:[%s272 + $0x160] sm:$0xff]
        %v392 = vld [vmem:[%s272 + $0x168] sm:$0xff]
        %v393 = vld [vmem:[%s272 + $0x180] sm:$0xff]
        %v394 = vld [vmem:[%s272 + $0x188] sm:$0xff]
        %v395 = vld [vmem:[%s272 + $0x1a0] sm:$0xff]
        %v396 = vld [vmem:[%s272 + $0x1a8] sm:$0xff]
        %v397 = vld [vmem:[%s272 + $0x1c0] sm:$0xff]
        %v398 = vld [vmem:[%s272 + $0x1c8] sm:$0xff]
        %v399 = vld [vmem:[%s272 + $0x1e0] sm:$0xff]
        %v400 = vld [vmem:[%s272 + $0x1e8] sm:$0xff]
        %v433 = vunpack.c.l.b16 %v369
        %v434 = vunpack.c.h.b16 %v369
        %v435 = vunpack.c.l.b16 %v370
        %v436 = vunpack.c.h.b16 %v370
        %v437 = vunpack.c.l.b16 %v371
        %v438 = vunpack.c.h.b16 %v371
        %v439 = vunpack.c.l.b16 %v372
        %v440 = vunpack.c.h.b16 %v372
        %v441 = vunpack.c.l.b16 %v373
        %v442 = vunpack.c.h.b16 %v373
        %v443 = vunpack.c.l.b16 %v374
        %v444 = vunpack.c.h.b16 %v374
        %v445 = vunpack.c.l.b16 %v375
        %v446 = vunpack.c.h.b16 %v375
        %v447 = vunpack.c.l.b16 %v376
        %v448 = vunpack.c.h.b16 %v376
        %v449 = vunpack.c.l.b16 %v377
        %v450 = vunpack.c.h.b16 %v377
        %v451 = vunpack.c.l.b16 %v378
        %v452 = vunpack.c.h.b16 %v378
        %v453 = vunpack.c.l.b16 %v379
        %v454 = vunpack.c.h.b16 %v379
        %v455 = vunpack.c.l.b16 %v380
        %v456 = vunpack.c.h.b16 %v380
        %v457 = vunpack.c.l.b16 %v381
        %v458 = vunpack.c.h.b16 %v381
        %v459 = vunpack.c.l.b16 %v382
        %v460 = vunpack.c.h.b16 %v382
        %v461 = vunpack.c.l.b16 %v383
        %v462 = vunpack.c.h.b16 %v383
        %v463 = vunpack.c.l.b16 %v384
        %v464 = vunpack.c.h.b16 %v384
        %v465 = vunpack.c.l.b16 %v385
        %v466 = vunpack.c.h.b16 %v385
        %v467 = vunpack.c.l.b16 %v386
        %v468 = vunpack.c.h.b16 %v386
        %v469 = vunpack.c.l.b16 %v387
        %v470 = vunpack.c.h.b16 %v387
        %v471 = vunpack.c.l.b16 %v388
        %v472 = vunpack.c.h.b16 %v388
        %v473 = vunpack.c.l.b16 %v389
        %v474 = vunpack.c.h.b16 %v389
        %v475 = vunpack.c.l.b16 %v390
        %v476 = vunpack.c.h.b16 %v390
        %v477 = vunpack.c.l.b16 %v391
        %v478 = vunpack.c.h.b16 %v391
        %v479 = vunpack.c.l.b16 %v392
        %v480 = vunpack.c.h.b16 %v392
        %v481 = vunpack.c.l.b16 %v393
        %v482 = vunpack.c.h.b16 %v393
        %v483 = vunpack.c.l.b16 %v394
        %v484 = vunpack.c.h.b16 %v394
        %v485 = vunpack.c.l.b16 %v395
        %v486 = vunpack.c.h.b16 %v395
        %v487 = vunpack.c.l.b16 %v396
        %v488 = vunpack.c.h.b16 %v396
        %v489 = vunpack.c.l.b16 %v397
        %v490 = vunpack.c.h.b16 %v397
        %v491 = vunpack.c.l.b16 %v398
        %v492 = vunpack.c.h.b16 %v398
        %v493 = vunpack.c.l.b16 %v399
        %v494 = vunpack.c.h.b16 %v399
        %v495 = vunpack.c.l.b16 %v400
        %v496 = vunpack.c.h.b16 %v400
        %v497 = vpack.c.b16 %v437, %v433
        %v498 = vpack.c.b16 %v438, %v434
        %v499 = vpack.c.b16 %v439, %v435
        %v500 = vpack.c.b16 %v440, %v436
        %v501 = vpack.c.b16 %v445, %v441
        %v502 = vpack.c.b16 %v446, %v442
        %v503 = vpack.c.b16 %v447, %v443
        %v504 = vpack.c.b16 %v448, %v444
        %v505 = vpack.c.b16 %v453, %v449
        %v506 = vpack.c.b16 %v454, %v450
        %v507 = vpack.c.b16 %v455, %v451
        %v508 = vpack.c.b16 %v456, %v452
        %v509 = vpack.c.b16 %v461, %v457
        %v510 = vpack.c.b16 %v462, %v458
        %v511 = vpack.c.b16 %v463, %v459
        %v512 = vpack.c.b16 %v464, %v460
        %v513 = vpack.c.b16 %v469, %v465
        %v514 = vpack.c.b16 %v470, %v466
        %v515 = vpack.c.b16 %v471, %v467
        %v516 = vpack.c.b16 %v472, %v468
        %v517 = vpack.c.b16 %v477, %v473
        %v518 = vpack.c.b16 %v478, %v474
        %v519 = vpack.c.b16 %v479, %v475
        %v520 = vpack.c.b16 %v480, %v476
        %v521 = vpack.c.b16 %v485, %v481
        %v522 = vpack.c.b16 %v486, %v482
        %v523 = vpack.c.b16 %v487, %v483
        %v524 = vpack.c.b16 %v488, %v484
        %v525 = vpack.c.b16 %v493, %v489
        %v526 = vpack.c.b16 %v494, %v490
        %v527 = vpack.c.b16 %v495, %v491
        %v528 = vpack.c.b16 %v496, %v492
        %561 = vmatprep.subr.bf16.mxu0 %v498
        %562 = vmatpush1.bf16.msra.mxu0 %v497
        %563 = vmatprep.subr.bf16.mxu0 %v502
        %564 = vmatpush1.bf16.msra.mxu0 %v501
        %565 = vmatprep.subr.bf16.mxu0 %v506
        %566 = vmatpush1.bf16.msra.mxu0 %v505
        %567 = vmatprep.subr.bf16.mxu0 %v510
        %568 = vmatpush1.bf16.msra.mxu0 %v509
        %569 = vmatprep.subr.bf16.mxu0 %v514
        %570 = vmatpush1.bf16.msra.mxu0 %v513
        %571 = vmatprep.subr.bf16.mxu0 %v518
        %572 = vmatpush1.bf16.msra.mxu0 %v517
        %573 = vmatprep.subr.bf16.mxu0 %v522
        %574 = vmatpush1.bf16.msra.mxu0 %v521
        %575 = vmatprep.subr.bf16.mxu0 %v526
        %576 = vmatpush1.bf16.msra.mxu0 %v525
        %577 = vmatprep.subr.bf16.mxu0 0
        %578 = vmatpush1.bf16.msra.mxu0 0
        %579 = vmatprep.subr.bf16.mxu0 0
        %580 = vmatpush1.bf16.msra.mxu0 0
        %581 = vmatprep.subr.bf16.mxu0 0
        %582 = vmatpush1.bf16.msra.mxu0 0
        %583 = vmatprep.subr.bf16.mxu0 0
        %584 = vmatpush1.bf16.msra.mxu0 0
        %585 = vmatprep.subr.bf16.mxu0 0
        %586 = vmatpush1.bf16.msra.mxu0 0
        %587 = vmatprep.subr.bf16.mxu0 0
        %588 = vmatpush1.bf16.msra.mxu0 0
        %589 = vmatprep.subr.bf16.mxu0 0
        %590 = vmatpush1.bf16.msra.mxu0 0
        %591 = vmatprep.subr.bf16.mxu0 0
        %592 = vmatpush1.bf16.msra.mxu0 0
        %593 = vmatprep.mubr.bf16.mxu0 0
        %594 = vmatmul.mubr.bf16.gmra.mrb[0].mxu0 %v359
        %v595 = vpop.f32.mrb[0].mxu0
        %v596 = vadd.f32 0.0, %v595
        %v597 = vpop.f32.mrb[0].mxu0
        %v598 = vadd.f32 0.0, %v597
        %v599 = vpop.f32.mrb[0].mxu0
        %v600 = vadd.f32 0.0, %v599
        %v601 = vpop.f32.mrb[0].mxu0
        %v602 = vadd.f32 0.0, %v601
        %603 = vmatprep.mubr.bf16.mxu0 0
        %604 = vmatmul.mubr.bf16.gmra.mrb[0].mxu0 %v360
        %v605 = vpop.f32.mrb[0].mxu0
        %v606 = vadd.f32 0.0, %v605
        %v607 = vpop.f32.mrb[0].mxu0
        %v608 = vadd.f32 0.0, %v607
        %v609 = vpop.f32.mrb[0].mxu0
        %v610 = vadd.f32 0.0, %v609
        %v611 = vpop.f32.mrb[0].mxu0
        %v612 = vadd.f32 0.0, %v611
        %613 = vdwg.mxu0
        %614 = vmatprep.subr.bf16.mxu0 %v500
        %615 = vmatpush1.bf16.msra.mxu0 %v499
        %616 = vmatprep.subr.bf16.mxu0 %v504
        %617 = vmatpush1.bf16.msra.mxu0 %v503
        %618 = vmatprep.subr.bf16.mxu0 %v508
        %619 = vmatpush1.bf16.msra.mxu0 %v507
        %620 = vmatprep.subr.bf16.mxu0 %v512
        %621 = vmatpush1.bf16.msra.mxu0 %v511
        %622 = vmatprep.subr.bf16.mxu0 %v516
        %623 = vmatpush1.bf16.msra.mxu0 %v515
        %624 = vmatprep.subr.bf16.mxu0 %v520
        %625 = vmatpush1.bf16.msra.mxu0 %v519
        %626 = vmatprep.subr.bf16.mxu0 %v524
        %627 = vmatpush1.bf16.msra.mxu0 %v523
        %628 = vmatprep.subr.bf16.mxu0 %v528
        %629 = vmatpush1.bf16.msra.mxu0 %v527
        %630 = vmatprep.subr.bf16.mxu0 0
        %631 = vmatpush1.bf16.msra.mxu0 0
        %632 = vmatprep.subr.bf16.mxu0 0
        %633 = vmatpush1.bf16.msra.mxu0 0
        %634 = vmatprep.subr.bf16.mxu0 0
        %635 = vmatpush1.bf16.msra.mxu0 0
        %636 = vmatprep.subr.bf16.mxu0 0
        %637 = vmatpush1.bf16.msra.mxu0 0
        %638 = vmatprep.subr.bf16.mxu0 0
        %639 = vmatpush1.bf16.msra.mxu0 0
        %640 = vmatprep.subr.bf16.mxu0 0
        %641 = vmatpush1.bf16.msra.mxu0 0
        %642 = vmatprep.subr.bf16.mxu0 0
        %643 = vmatpush1.bf16.msra.mxu0 0
        %644 = vmatprep.subr.bf16.mxu0 0
        %645 = vmatpush1.bf16.msra.mxu0 0
        %646 = vmatprep.mubr.bf16.mxu0 0
        %647 = vmatmul.mubr.bf16.gmra.mrb[0].mxu0 %v359
        %v648 = vpop.f32.mrb[0].mxu0
        %v649 = vadd.f32 0.0, %v648
        %v650 = vpop.f32.mrb[0].mxu0
        %v651 = vadd.f32 0.0, %v650
        %v652 = vpop.f32.mrb[0].mxu0
        %v653 = vadd.f32 0.0, %v652
        %v654 = vpop.f32.mrb[0].mxu0
        %v655 = vadd.f32 0.0, %v654
        %656 = vmatprep.mubr.bf16.mxu0 0
        %657 = vmatmul.mubr.bf16.gmra.mrb[0].mxu0 %v360
        %v658 = vpop.f32.mrb[0].mxu0
        %v659 = vadd.f32 0.0, %v658
        %v660 = vpop.f32.mrb[0].mxu0
        %v661 = vadd.f32 0.0, %v660
        %v662 = vpop.f32.mrb[0].mxu0
        %v663 = vadd.f32 0.0, %v662
        %v664 = vpop.f32.mrb[0].mxu0
        %v665 = vadd.f32 0.0, %v664
        %666 = vdwg.mxu0
        %v667 = vld [vmem:[%s272 + $0x10] sm:$0xff]
        %v668 = vld [vmem:[%s272 + $0x30] sm:$0xff]
        %v669 = vld [vmem:[%s272 + $0x50] sm:$0xff]
        %v670 = vld [vmem:[%s272 + $0x70] sm:$0xff]
        %v671 = vld [vmem:[%s272 + $0x90] sm:$0xff]
        %v672 = vld [vmem:[%s272 + $0xb0] sm:$0xff]
        %v673 = vld [vmem:[%s272 + $0xd0] sm:$0xff]
        %v674 = vld [vmem:[%s272 + $0xf0] sm:$0xff]
        %v675 = vld [vmem:[%s272 + $0x110] sm:$0xff]
        %v676 = vld [vmem:[%s272 + $0x130] sm:$0xff]
        %v677 = vld [vmem:[%s272 + $0x150] sm:$0xff]
        %v678 = vld [vmem:[%s272 + $0x170] sm:$0xff]
        %v679 = vld [vmem:[%s272 + $0x190] sm:$0xff]
        %v680 = vld [vmem:[%s272 + $0x1b0] sm:$0xff]
        %v681 = vld [vmem:[%s272 + $0x1d0] sm:$0xff]
        %v682 = vld [vmem:[%s272 + $0x1f0] sm:$0xff]
        %v699 = vunpack.c.l.b16 %v667
        %v700 = vunpack.c.h.b16 %v667
        %v701 = vunpack.c.l.b16 %v668
        %v702 = vunpack.c.h.b16 %v668
        %v703 = vunpack.c.l.b16 %v669
        %v704 = vunpack.c.h.b16 %v669
        %v705 = vunpack.c.l.b16 %v670
        %v706 = vunpack.c.h.b16 %v670
        %v707 = vunpack.c.l.b16 %v671
        %v708 = vunpack.c.h.b16 %v671
        %v709 = vunpack.c.l.b16 %v672
        %v710 = vunpack.c.h.b16 %v672
        %v711 = vunpack.c.l.b16 %v673
        %v712 = vunpack.c.h.b16 %v673
        %v713 = vunpack.c.l.b16 %v674
        %v714 = vunpack.c.h.b16 %v674
        %v715 = vunpack.c.l.b16 %v675
        %v716 = vunpack.c.h.b16 %v675
        %v717 = vunpack.c.l.b16 %v676
        %v718 = vunpack.c.h.b16 %v676
        %v719 = vunpack.c.l.b16 %v677
        %v720 = vunpack.c.h.b16 %v677
        %v721 = vunpack.c.l.b16 %v678
        %v722 = vunpack.c.h.b16 %v678
        %v723 = vunpack.c.l.b16 %v679
        %v724 = vunpack.c.h.b16 %v679
        %v725 = vunpack.c.l.b16 %v680
        %v726 = vunpack.c.h.b16 %v680
        %v727 = vunpack.c.l.b16 %v681
        %v728 = vunpack.c.h.b16 %v681
        %v729 = vunpack.c.l.b16 %v682
        %v730 = vunpack.c.h.b16 %v682
        %v731 = vpack.c.b16 %v701, %v699
        %v732 = vpack.c.b16 %v702, %v700
        %v733 = vpack.c.b16 %v705, %v703
        %v734 = vpack.c.b16 %v706, %v704
        %v735 = vpack.c.b16 %v709, %v707
        %v736 = vpack.c.b16 %v710, %v708
        %v737 = vpack.c.b16 %v713, %v711
        %v738 = vpack.c.b16 %v714, %v712
        %v739 = vpack.c.b16 %v717, %v715
        %v740 = vpack.c.b16 %v718, %v716
        %v741 = vpack.c.b16 %v721, %v719
        %v742 = vpack.c.b16 %v722, %v720
        %v743 = vpack.c.b16 %v725, %v723
        %v744 = vpack.c.b16 %v726, %v724
        %v745 = vpack.c.b16 %v729, %v727
        %v746 = vpack.c.b16 %v730, %v728
        %763 = vmatprep.subr.bf16.mxu0 %v732
        %764 = vmatpush1.bf16.msra.mxu0 %v731
        %765 = vmatprep.subr.bf16.mxu0 %v734
        %766 = vmatpush1.bf16.msra.mxu0 %v733
        %767 = vmatprep.subr.bf16.mxu0 %v736
        %768 = vmatpush1.bf16.msra.mxu0 %v735
        %769 = vmatprep.subr.bf16.mxu0 %v738
        %770 = vmatpush1.bf16.msra.mxu0 %v737
        %771 = vmatprep.subr.bf16.mxu0 %v740
        %772 = vmatpush1.bf16.msra.mxu0 %v739
        %773 = vmatprep.subr.bf16.mxu0 %v742
        %774 = vmatpush1.bf16.msra.mxu0 %v741
        %775 = vmatprep.subr.bf16.mxu0 %v744
        %776 = vmatpush1.bf16.msra.mxu0 %v743
        %777 = vmatprep.subr.bf16.mxu0 %v746
        %778 = vmatpush1.bf16.msra.mxu0 %v745
        %779 = vmatprep.subr.bf16.mxu0 0
        %780 = vmatpush1.bf16.msra.mxu0 0
        %781 = vmatprep.subr.bf16.mxu0 0
        %782 = vmatpush1.bf16.msra.mxu0 0
        %783 = vmatprep.subr.bf16.mxu0 0
        %784 = vmatpush1.bf16.msra.mxu0 0
        %785 = vmatprep.subr.bf16.mxu0 0
        %786 = vmatpush1.bf16.msra.mxu0 0
        %787 = vmatprep.subr.bf16.mxu0 0
        %788 = vmatpush1.bf16.msra.mxu0 0
        %789 = vmatprep.subr.bf16.mxu0 0
        %790 = vmatpush1.bf16.msra.mxu0 0
        %791 = vmatprep.subr.bf16.mxu0 0
        %792 = vmatpush1.bf16.msra.mxu0 0
        %793 = vmatprep.subr.bf16.mxu0 0
        %794 = vmatpush1.bf16.msra.mxu0 0
        %795 = vmatprep.mubr.bf16.mxu0 0
        %796 = vmatmul.mubr.bf16.gmra.mrb[0].mxu0 %v365
        %v797 = vpop.f32.mrb[0].mxu0
        %v798 = vadd.f32 0.0, %v797
        %v799 = vpop.f32.mrb[0].mxu0
        %v800 = vadd.f32 0.0, %v799
        %v801 = vpop.f32.mrb[0].mxu0
        %v802 = vadd.f32 0.0, %v801
        %v803 = vpop.f32.mrb[0].mxu0
        %v804 = vadd.f32 0.0, %v803
        %805 = vmatprep.mubr.bf16.mxu0 0
        %806 = vmatmul.mubr.bf16.gmra.mrb[0].mxu0 %v366
        %v807 = vpop.f32.mrb[0].mxu0
        %v808 = vadd.f32 0.0, %v807
        %v809 = vpop.f32.mrb[0].mxu0
        %v810 = vadd.f32 0.0, %v809
        %v811 = vpop.f32.mrb[0].mxu0
        %v812 = vadd.f32 0.0, %v811
        %v813 = vpop.f32.mrb[0].mxu0
        %v814 = vadd.f32 0.0, %v813
        %815 = vdwg.mxu0
        %v816 = vlaneseq
        %v817 = vshrl.u32 %v816, 7
        %v818 = vsub.s32 0, %v817
        %v819 = vrot.slane %v367, %v818
        %v820 = vadd.f32 %v596, %v819
        %v821 = vadd.f32 %v600, %v819
        %v822 = vadd.f32 %v606, %v819
        %v823 = vadd.f32 %v610, %v819
        %v824 = vlaneseq
        %v825 = vshrl.u32 %v824, 7
        %v826 = vsub.s32 1, %v825
        %v827 = vrot.slane %v367, %v826
        %v828 = vadd.f32 %v598, %v827
        %v829 = vadd.f32 %v602, %v827
        %v830 = vadd.f32 %v608, %v827
        %v831 = vadd.f32 %v612, %v827
        %v832 = vlaneseq
        %v833 = vshrl.u32 %v832, 7
        %v834 = vsub.s32 2, %v833
        %v835 = vrot.slane %v367, %v834
        %v836 = vadd.f32 %v649, %v835
        %v837 = vadd.f32 %v653, %v835
        %v838 = vadd.f32 %v659, %v835
        %v839 = vadd.f32 %v663, %v835
        %v840 = vlaneseq
        %v841 = vshrl.u32 %v840, 7
        %v842 = vsub.s32 3, %v841
        %v843 = vrot.slane %v367, %v842
        %v844 = vadd.f32 %v651, %v843
        %v845 = vadd.f32 %v655, %v843
        %v846 = vadd.f32 %v661, %v843
        %v847 = vadd.f32 %v665, %v843
        %v848 = vlaneseq
        %v849 = vshrl.u32 %v848, 7
        %v850 = vsub.s32 4, %v849
        %v851 = vrot.slane %v367, %v850
        %v852 = vadd.f32 %v798, %v851
        %v853 = vadd.f32 %v802, %v851
        %v854 = vadd.f32 %v808, %v851
        %v855 = vadd.f32 %v812, %v851
        %v856 = vlaneseq
        %v857 = vshrl.u32 %v856, 7
        %v858 = vsub.s32 5, %v857
        %v859 = vrot.slane %v367, %v858
        %v860 = vadd.f32 %v800, %v859
        %v861 = vadd.f32 %v804, %v859
        %v862 = vadd.f32 %v810, %v859
        %v863 = vadd.f32 %v814, %v859
        %v864 = vpack.c.bf16 %v820, %v820
        %v865 = vpack.c.bf16 %v821, %v821
        %v866 = vpack.c.bf16 %v822, %v822
        %v867 = vpack.c.bf16 %v823, %v823
        %v868 = vpack.c.bf16 %v828, %v828
        %v869 = vpack.c.bf16 %v829, %v829
        %v870 = vpack.c.bf16 %v830, %v830
        %v871 = vpack.c.bf16 %v831, %v831
        %872 = vmatprep.subr.bf16.mxu0 0
        %873 = vmatpush1.bf16.xpose.msra.mxu0 %v868
        %874 = vmatprep.subr.bf16.mxu0 0
        %875 = vmatpush1.bf16.xpose.msra.mxu0 0
        %876 = vmatprep.subr.bf16.mxu0 0
        %877 = vmatpush1.bf16.xpose.msra.mxu0 0
        %878 = vmatprep.subr.bf16.mxu0 0
        %879 = vmatpush1.bf16.xpose.msra.mxu0 0
        %880 = vmatprep.subr.bf16.mxu0 0
        %881 = vmatpush1.bf16.xpose.msra.mxu0 0
        %882 = vmatprep.subr.bf16.mxu0 0
        %883 = vmatpush1.bf16.xpose.msra.mxu0 0
        %884 = vmatprep.subr.bf16.mxu0 0
        %885 = vmatpush1.bf16.xpose.msra.mxu0 0
        %886 = vmatprep.subr.bf16.mxu0 0
        %887 = vmatpush1.bf16.xpose.msra.mxu0 0
        %888 = vmatprep.subr.bf16.mxu0 0
        %889 = vmatpush1.bf16.xpose.msra.mxu0 0
        %890 = vmatprep.subr.bf16.mxu0 0
        %891 = vmatpush1.bf16.xpose.msra.mxu0 0
        %892 = vmatprep.subr.bf16.mxu0 0
        %893 = vmatpush1.bf16.xpose.msra.mxu0 0
        %894 = vmatprep.subr.bf16.mxu0 0
        %895 = vmatpush1.bf16.xpose.msra.mxu0 0
        %896 = vmatprep.subr.bf16.mxu0 0
        %897 = vmatpush1.bf16.xpose.msra.mxu0 0
        %898 = vmatprep.subr.bf16.mxu0 0
        %899 = vmatpush1.bf16.xpose.msra.mxu0 0
        %900 = vmatprep.subr.bf16.mxu0 0
        %901 = vmatpush1.bf16.xpose.msra.mxu0 0
        %902 = vmatprep.subr.bf16.mxu0 0
        %903 = vmatpush1.bf16.xpose.msra.mxu0 0
        %904 = vmatprep.mubr.bf16.mxu0 0
        %905 = vmatmul.mubr.bf16.gmra.mrb[0].mxu0 %v864
        %v906 = vpop.f32.mrb[0].mxu0
        %v907 = vadd.f32 0.0, %v906
        %v908 = vpop.f32.mrb[0].mxu0
        %v909 = vpop.f32.mrb[0].mxu0
        %v910 = vpop.f32.mrb[0].mxu0
        %911 = vdwg.mxu0
        %912 = vmatprep.subr.bf16.mxu0 0
        %913 = vmatpush1.bf16.xpose.msra.mxu0 %v869
        %914 = vmatprep.subr.bf16.mxu0 0
        %915 = vmatpush1.bf16.xpose.msra.mxu0 0
        %916 = vmatprep.subr.bf16.mxu0 0
        %917 = vmatpush1.bf16.xpose.msra.mxu0 0
        %918 = vmatprep.subr.bf16.mxu0 0
        %919 = vmatpush1.bf16.xpose.msra.mxu0 0
        %920 = vmatprep.subr.bf16.mxu0 0
        %921 = vmatpush1.bf16.xpose.msra.mxu0 0
        %922 = vmatprep.subr.bf16.mxu0 0
        %923 = vmatpush1.bf16.xpose.msra.mxu0 0
        %924 = vmatprep.subr.bf16.mxu0 0
        %925 = vmatpush1.bf16.xpose.msra.mxu0 0
        %926 = vmatprep.subr.bf16.mxu0 0
        %927 = vmatpush1.bf16.xpose.msra.mxu0 0
        %928 = vmatprep.subr.bf16.mxu0 0
        %929 = vmatpush1.bf16.xpose.msra.mxu0 0
        %930 = vmatprep.subr.bf16.mxu0 0
        %931 = vmatpush1.bf16.xpose.msra.mxu0 0
        %932 = vmatprep.subr.bf16.mxu0 0
        %933 = vmatpush1.bf16.xpose.msra.mxu0 0
        %934 = vmatprep.subr.bf16.mxu0 0
        %935 = vmatpush1.bf16.xpose.msra.mxu0 0
        %936 = vmatprep.subr.bf16.mxu0 0
        %937 = vmatpush1.bf16.xpose.msra.mxu0 0
        %938 = vmatprep.subr.bf16.mxu0 0
        %939 = vmatpush1.bf16.xpose.msra.mxu0 0
        %940 = vmatprep.subr.bf16.mxu0 0
        %941 = vmatpush1.bf16.xpose.msra.mxu0 0
        %942 = vmatprep.subr.bf16.mxu0 0
        %943 = vmatpush1.bf16.xpose.msra.mxu0 0
        %944 = vmatprep.mubr.bf16.mxu0 0
        %945 = vmatmul.mubr.bf16.gmra.mrb[0].mxu0 %v865
        %v946 = vpop.f32.mrb[0].mxu0
        %v947 = vadd.f32 0.0, %v946
        %v948 = vpop.f32.mrb[0].mxu0
        %v949 = vpop.f32.mrb[0].mxu0
        %v950 = vpop.f32.mrb[0].mxu0
        %951 = vdwg.mxu0
        %952 = vmatprep.subr.bf16.mxu0 0
        %953 = vmatpush1.bf16.xpose.msra.mxu0 %v870
        %954 = vmatprep.subr.bf16.mxu0 0
        %955 = vmatpush1.bf16.xpose.msra.mxu0 0
        %956 = vmatprep.subr.bf16.mxu0 0
        %957 = vmatpush1.bf16.xpose.msra.mxu0 0
        %958 = vmatprep.subr.bf16.mxu0 0
        %959 = vmatpush1.bf16.xpose.msra.mxu0 0
        %960 = vmatprep.subr.bf16.mxu0 0
        %961 = vmatpush1.bf16.xpose.msra.mxu0 0
        %962 = vmatprep.subr.bf16.mxu0 0
        %963 = vmatpush1.bf16.xpose.msra.mxu0 0
        %964 = vmatprep.subr.bf16.mxu0 0
        %965 = vmatpush1.bf16.xpose.msra.mxu0 0
        %966 = vmatprep.subr.bf16.mxu0 0
        %967 = vmatpush1.bf16.xpose.msra.mxu0 0
        %968 = vmatprep.subr.bf16.mxu0 0
        %969 = vmatpush1.bf16.xpose.msra.mxu0 0
        %970 = vmatprep.subr.bf16.mxu0 0
        %971 = vmatpush1.bf16.xpose.msra.mxu0 0
        %972 = vmatprep.subr.bf16.mxu0 0
        %973 = vmatpush1.bf16.xpose.msra.mxu0 0
        %974 = vmatprep.subr.bf16.mxu0 0
        %975 = vmatpush1.bf16.xpose.msra.mxu0 0
        %976 = vmatprep.subr.bf16.mxu0 0
        %977 = vmatpush1.bf16.xpose.msra.mxu0 0
        %978 = vmatprep.subr.bf16.mxu0 0
        %979 = vmatpush1.bf16.xpose.msra.mxu0 0
        %980 = vmatprep.subr.bf16.mxu0 0
        %981 = vmatpush1.bf16.xpose.msra.mxu0 0
        %982 = vmatprep.subr.bf16.mxu0 0
        %983 = vmatpush1.bf16.xpose.msra.mxu0 0
        %984 = vmatprep.mubr.bf16.mxu0 0
        %985 = vmatmul.mubr.bf16.gmra.mrb[0].mxu0 %v866
        %v986 = vpop.f32.mrb[0].mxu0
        %v987 = vadd.f32 0.0, %v986
        %v988 = vpop.f32.mrb[0].mxu0
        %v989 = vpop.f32.mrb[0].mxu0
        %v990 = vpop.f32.mrb[0].mxu0
        %991 = vdwg.mxu0
        %992 = vmatprep.subr.bf16.mxu0 0
        %993 = vmatpush1.bf16.xpose.msra.mxu0 %v871
        %994 = vmatprep.subr.bf16.mxu0 0
        %995 = vmatpush1.bf16.xpose.msra.mxu0 0
        %996 = vmatprep.subr.bf16.mxu0 0
        %997 = vmatpush1.bf16.xpose.msra.mxu0 0
        %998 = vmatprep.subr.bf16.mxu0 0
        %999 = vmatpush1.bf16.xpose.msra.mxu0 0
        %1000 = vmatprep.subr.bf16.mxu0 0
        %1001 = vmatpush1.bf16.xpose.msra.mxu0 0
        %1002 = vmatprep.subr.bf16.mxu0 0
        %1003 = vmatpush1.bf16.xpose.msra.mxu0 0
        %1004 = vmatprep.subr.bf16.mxu0 0
        %1005 = vmatpush1.bf16.xpose.msra.mxu0 0
        %1006 = vmatprep.subr.bf16.mxu0 0
        %1007 = vmatpush1.bf16.xpose.msra.mxu0 0
        %1008 = vmatprep.subr.bf16.mxu0 0
        %1009 = vmatpush1.bf16.xpose.msra.mxu0 0
        %1010 = vmatprep.subr.bf16.mxu0 0
        %1011 = vmatpush1.bf16.xpose.msra.mxu0 0
        %1012 = vmatprep.subr.bf16.mxu0 0
        %1013 = vmatpush1.bf16.xpose.msra.mxu0 0
        %1014 = vmatprep.subr.bf16.mxu0 0
        %1015 = vmatpush1.bf16.xpose.msra.mxu0 0
        %1016 = vmatprep.subr.bf16.mxu0 0
        %1017 = vmatpush1.bf16.xpose.msra.mxu0 0
        %1018 = vmatprep.subr.bf16.mxu0 0
        %1019 = vmatpush1.bf16.xpose.msra.mxu0 0
        %1020 = vmatprep.subr.bf16.mxu0 0
        %1021 = vmatpush1.bf16.xpose.msra.mxu0 0
        %1022 = vmatprep.subr.bf16.mxu0 0
        %1023 = vmatpush1.bf16.xpose.msra.mxu0 0
        %1024 = vmatprep.mubr.bf16.mxu0 0
        %1025 = vmatmul.mubr.bf16.gmra.mrb[0].mxu0 %v867
        %v1026 = vpop.f32.mrb[0].mxu0
        %v1027 = vadd.f32 0.0, %v1026
        %v1028 = vpop.f32.mrb[0].mxu0
        %v1029 = vpop.f32.mrb[0].mxu0
        %v1030 = vpop.f32.mrb[0].mxu0
        %1031 = vdwg.mxu0
        %vm1032 = vcmask 64512
        %v1033 = vsel %vm1032, %v907, -inf
        %1034 = vmax.xlane.f32.xlu0 %v1033
        %v1035 = vpop.xlane.xlu0 %1034
        %v1036 = vsel %vm1032, %v947, -inf
        %1037 = vmax.xlane.f32.xlu0 %v1036
        %v1038 = vpop.xlane.xlu0 %1037
        %v1039 = vsel %vm1032, %v987, -inf
        %1040 = vmax.xlane.f32.xlu0 %v1039
        %v1041 = vpop.xlane.xlu0 %1040
        %v1042 = vsel %vm1032, %v1027, -inf
        %1043 = vmax.xlane.f32.xlu0 %v1042
        %v1044 = vpop.xlane.xlu0 %1043
        %v1045 = vsub.f32 %v907, %v1035
        %v1046 = vsub.f32 %v947, %v1038
        %v1047 = vsub.f32 %v987, %v1041
        %v1048 = vsub.f32 %v1027, %v1044
        %v1049 = vmul.f32 %v1045, 1.442695
        %v1050 = vpow.pop %v1049
        %v1051 = vmul.f32 %v1046, 1.442695
        %v1052 = vpow.pop %v1051
        %v1053 = vmul.f32 %v1047, 1.442695
        %v1054 = vpow.pop %v1053
        %v1055 = vmul.f32 %v1048, 1.442695
        %v1056 = vpow.pop %v1055
        %v1057 = vsel %vm1032, %v1050, 0.0
        %1058 = vadd.xlane.f32.xlu0 %v1057
        %v1059 = vpop.xlane.xlu0 %1058
        %v1060 = vsel %vm1032, %v1052, 0.0
        %1061 = vadd.xlane.f32.xlu0 %v1060
        %v1062 = vpop.xlane.xlu0 %1061
        %v1063 = vsel %vm1032, %v1054, 0.0
        %1064 = vadd.xlane.f32.xlu0 %v1063
        %v1065 = vpop.xlane.xlu0 %1064
        %v1066 = vsel %vm1032, %v1056, 0.0
        %1067 = vadd.xlane.f32.xlu0 %v1066
        %v1068 = vpop.xlane.xlu0 %1067
        %v1069 = vrcp.pop %v1059
        %v1070 = vrcp.pop %v1062
        %v1071 = vrcp.pop %v1065
        %v1072 = vrcp.pop %v1068
        %v1073 = vmul.f32 %v1050, %v1069
        %v1074 = vmul.f32 %v1052, %v1070
        %v1075 = vmul.f32 %v1054, %v1071
        %v1076 = vmul.f32 %v1056, %v1072
        %v1077 = vpack.c.bf16 %v1073, %v1073
        %v1078 = vpack.c.bf16 %v1074, %v1074
        %v1079 = vpack.c.bf16 %v1075, %v1075
        %v1080 = vpack.c.bf16 %v1076, %v1076
        %v1081 = vpack.c.bf16 %v836, %v836
        %v1082 = vpack.c.bf16 %v837, %v837
        %v1083 = vpack.c.bf16 %v838, %v838
        %v1084 = vpack.c.bf16 %v839, %v839
        %v1086 = vsel %vm1032, %v1077, 0
        %vm1088 = vcmask 1043456
        %v1090 = vsel %vm1088, %v1081, 0
        %1092 = vmatprep.subr.bf16.mxu0 0
        %1093 = vmatpush1.bf16.msra.mxu0 %v1090
        %1094 = vmatprep.subr.bf16.mxu0 0
        %1095 = vmatpush1.bf16.msra.mxu0 0
        %1096 = vmatprep.subr.bf16.mxu0 0
        %1097 = vmatpush1.bf16.msra.mxu0 0
        %1098 = vmatprep.subr.bf16.mxu0 0
        %1099 = vmatpush1.bf16.msra.mxu0 0
        %1100 = vmatprep.subr.bf16.mxu0 0
        %1101 = vmatpush1.bf16.msra.mxu0 0
        %1102 = vmatprep.subr.bf16.mxu0 0
        %1103 = vmatpush1.bf16.msra.mxu0 0
        %1104 = vmatprep.subr.bf16.mxu0 0
        %1105 = vmatpush1.bf16.msra.mxu0 0
        %1106 = vmatprep.subr.bf16.mxu0 0
        %1107 = vmatpush1.bf16.msra.mxu0 0
        %1108 = vmatprep.subr.bf16.mxu0 0
        %1109 = vmatpush1.bf16.msra.mxu0 0
        %1110 = vmatprep.subr.bf16.mxu0 0
        %1111 = vmatpush1.bf16.msra.mxu0 0
        %1112 = vmatprep.subr.bf16.mxu0 0
        %1113 = vmatpush1.bf16.msra.mxu0 0
        %1114 = vmatprep.subr.bf16.mxu0 0
        %1115 = vmatpush1.bf16.msra.mxu0 0
        %1116 = vmatprep.subr.bf16.mxu0 0
        %1117 = vmatpush1.bf16.msra.mxu0 0
        %1118 = vmatprep.subr.bf16.mxu0 0
        %1119 = vmatpush1.bf16.msra.mxu0 0
        %1120 = vmatprep.subr.bf16.mxu0 0
        %1121 = vmatpush1.bf16.msra.mxu0 0
        %1122 = vmatprep.subr.bf16.mxu0 0
        %1123 = vmatpush1.bf16.msra.mxu0 0
        %1124 = vmatprep.mubr.bf16.mxu0 0
        %1125 = vmatmul.mubr.bf16.gmra.mrb[0].mxu0 %v1086
        %v1126 = vpop.f32.mrb[0].mxu0
        %v1127 = vadd.f32 0.0, %v1126
        %v1128 = vpop.f32.mrb[0].mxu0
        %v1129 = vpop.f32.mrb[0].mxu0
        %v1130 = vpop.f32.mrb[0].mxu0
        %1131 = vdwg.mxu0
        %v1133 = vsel %vm1032, %v1078, 0
        %v1136 = vsel %vm1088, %v1082, 0
        %1138 = vmatprep.subr.bf16.mxu0 0
        %1139 = vmatpush1.bf16.msra.mxu0 %v1136
        %1140 = vmatprep.subr.bf16.mxu0 0
        %1141 = vmatpush1.bf16.msra.mxu0 0
        %1142 = vmatprep.subr.bf16.mxu0 0
        %1143 = vmatpush1.bf16.msra.mxu0 0
        %1144 = vmatprep.subr.bf16.mxu0 0
        %1145 = vmatpush1.bf16.msra.mxu0 0
        %1146 = vmatprep.subr.bf16.mxu0 0
        %1147 = vmatpush1.bf16.msra.mxu0 0
        %1148 = vmatprep.subr.bf16.mxu0 0
        %1149 = vmatpush1.bf16.msra.mxu0 0
        %1150 = vmatprep.subr.bf16.mxu0 0
        %1151 = vmatpush1.bf16.msra.mxu0 0
        %1152 = vmatprep.subr.bf16.mxu0 0
        %1153 = vmatpush1.bf16.msra.mxu0 0
        %1154 = vmatprep.subr.bf16.mxu0 0
        %1155 = vmatpush1.bf16.msra.mxu0 0
        %1156 = vmatprep.subr.bf16.mxu0 0
        %1157 = vmatpush1.bf16.msra.mxu0 0
        %1158 = vmatprep.subr.bf16.mxu0 0
        %1159 = vmatpush1.bf16.msra.mxu0 0
        %1160 = vmatprep.subr.bf16.mxu0 0
        %1161 = vmatpush1.bf16.msra.mxu0 0
        %1162 = vmatprep.subr.bf16.mxu0 0
        %1163 = vmatpush1.bf16.msra.mxu0 0
        %1164 = vmatprep.subr.bf16.mxu0 0
        %1165 = vmatpush1.bf16.msra.mxu0 0
        %1166 = vmatprep.subr.bf16.mxu0 0
        %1167 = vmatpush1.bf16.msra.mxu0 0
        %1168 = vmatprep.subr.bf16.mxu0 0
        %1169 = vmatpush1.bf16.msra.mxu0 0
        %1170 = vmatprep.mubr.bf16.mxu0 0
        %1171 = vmatmul.mubr.bf16.gmra.mrb[0].mxu0 %v1133
        %v1172 = vpop.f32.mrb[0].mxu0
        %v1173 = vadd.f32 0.0, %v1172
        %v1174 = vpop.f32.mrb[0].mxu0
        %v1175 = vpop.f32.mrb[0].mxu0
        %v1176 = vpop.f32.mrb[0].mxu0
        %1177 = vdwg.mxu0
        %v1179 = vsel %vm1032, %v1079, 0
        %v1182 = vsel %vm1088, %v1083, 0
        %1184 = vmatprep.subr.bf16.mxu0 0
        %1185 = vmatpush1.bf16.msra.mxu0 %v1182
        %1186 = vmatprep.subr.bf16.mxu0 0
        %1187 = vmatpush1.bf16.msra.mxu0 0
        %1188 = vmatprep.subr.bf16.mxu0 0
        %1189 = vmatpush1.bf16.msra.mxu0 0
        %1190 = vmatprep.subr.bf16.mxu0 0
        %1191 = vmatpush1.bf16.msra.mxu0 0
        %1192 = vmatprep.subr.bf16.mxu0 0
        %1193 = vmatpush1.bf16.msra.mxu0 0
        %1194 = vmatprep.subr.bf16.mxu0 0
        %1195 = vmatpush1.bf16.msra.mxu0 0
        %1196 = vmatprep.subr.bf16.mxu0 0
        %1197 = vmatpush1.bf16.msra.mxu0 0
        %1198 = vmatprep.subr.bf16.mxu0 0
        %1199 = vmatpush1.bf16.msra.mxu0 0
        %1200 = vmatprep.subr.bf16.mxu0 0
        %1201 = vmatpush1.bf16.msra.mxu0 0
        %1202 = vmatprep.subr.bf16.mxu0 0
        %1203 = vmatpush1.bf16.msra.mxu0 0
        %1204 = vmatprep.subr.bf16.mxu0 0
        %1205 = vmatpush1.bf16.msra.mxu0 0
        %1206 = vmatprep.subr.bf16.mxu0 0
        %1207 = vmatpush1.bf16.msra.mxu0 0
        %1208 = vmatprep.subr.bf16.mxu0 0
        %1209 = vmatpush1.bf16.msra.mxu0 0
        %1210 = vmatprep.subr.bf16.mxu0 0
        %1211 = vmatpush1.bf16.msra.mxu0 0
        %1212 = vmatprep.subr.bf16.mxu0 0
        %1213 = vmatpush1.bf16.msra.mxu0 0
        %1214 = vmatprep.subr.bf16.mxu0 0
        %1215 = vmatpush1.bf16.msra.mxu0 0
        %1216 = vmatprep.mubr.bf16.mxu0 0
        %1217 = vmatmul.mubr.bf16.gmra.mrb[0].mxu0 %v1179
        %v1218 = vpop.f32.mrb[0].mxu0
        %v1219 = vadd.f32 0.0, %v1218
        %v1220 = vpop.f32.mrb[0].mxu0
        %v1221 = vpop.f32.mrb[0].mxu0
        %v1222 = vpop.f32.mrb[0].mxu0
        %1223 = vdwg.mxu0
        %v1225 = vsel %vm1032, %v1080, 0
        %v1228 = vsel %vm1088, %v1084, 0
        %1230 = vmatprep.subr.bf16.mxu0 0
        %1231 = vmatpush1.bf16.msra.mxu0 %v1228
        %1232 = vmatprep.subr.bf16.mxu0 0
        %1233 = vmatpush1.bf16.msra.mxu0 0
        %1234 = vmatprep.subr.bf16.mxu0 0
        %1235 = vmatpush1.bf16.msra.mxu0 0
        %1236 = vmatprep.subr.bf16.mxu0 0
        %1237 = vmatpush1.bf16.msra.mxu0 0
        %1238 = vmatprep.subr.bf16.mxu0 0
        %1239 = vmatpush1.bf16.msra.mxu0 0
        %1240 = vmatprep.subr.bf16.mxu0 0
        %1241 = vmatpush1.bf16.msra.mxu0 0
        %1242 = vmatprep.subr.bf16.mxu0 0
        %1243 = vmatpush1.bf16.msra.mxu0 0
        %1244 = vmatprep.subr.bf16.mxu0 0
        %1245 = vmatpush1.bf16.msra.mxu0 0
        %1246 = vmatprep.subr.bf16.mxu0 0
        %1247 = vmatpush1.bf16.msra.mxu0 0
        %1248 = vmatprep.subr.bf16.mxu0 0
        %1249 = vmatpush1.bf16.msra.mxu0 0
        %1250 = vmatprep.subr.bf16.mxu0 0
        %1251 = vmatpush1.bf16.msra.mxu0 0
        %1252 = vmatprep.subr.bf16.mxu0 0
        %1253 = vmatpush1.bf16.msra.mxu0 0
        %1254 = vmatprep.subr.bf16.mxu0 0
        %1255 = vmatpush1.bf16.msra.mxu0 0
        %1256 = vmatprep.subr.bf16.mxu0 0
        %1257 = vmatpush1.bf16.msra.mxu0 0
        %1258 = vmatprep.subr.bf16.mxu0 0
        %1259 = vmatpush1.bf16.msra.mxu0 0
        %1260 = vmatprep.subr.bf16.mxu0 0
        %1261 = vmatpush1.bf16.msra.mxu0 0
        %1262 = vmatprep.mubr.bf16.mxu0 0
        %1263 = vmatmul.mubr.bf16.gmra.mrb[0].mxu0 %v1225
        %v1264 = vpop.f32.mrb[0].mxu0
        %v1265 = vadd.f32 0.0, %v1264
        %v1266 = vpop.f32.mrb[0].mxu0
        %v1267 = vpop.f32.mrb[0].mxu0
        %v1268 = vpop.f32.mrb[0].mxu0
        %1269 = vdwg.mxu0
        %v1270 = vpack.c.bf16 %v844, %v844
        %v1271 = vpack.c.bf16 %v845, %v845
        %v1272 = vpack.c.bf16 %v846, %v846
        %v1273 = vpack.c.bf16 %v847, %v847
        %v1274 = vpack.c.bf16 %v852, %v852
        %v1275 = vpack.c.bf16 %v853, %v853
        %v1276 = vpack.c.bf16 %v854, %v854
        %v1277 = vpack.c.bf16 %v855, %v855
        %1278 = vmatprep.subr.bf16.mxu0 0
        %1279 = vmatpush1.bf16.xpose.msra.mxu0 %v1274
        %1280 = vmatprep.subr.bf16.mxu0 0
        %1281 = vmatpush1.bf16.xpose.msra.mxu0 0
        %1282 = vmatprep.subr.bf16.mxu0 0
        %1283 = vmatpush1.bf16.xpose.msra.mxu0 0
        %1284 = vmatprep.subr.bf16.mxu0 0
        %1285 = vmatpush1.bf16.xpose.msra.mxu0 0
        %1286 = vmatprep.subr.bf16.mxu0 0
        %1287 = vmatpush1.bf16.xpose.msra.mxu0 0
        %1288 = vmatprep.subr.bf16.mxu0 0
        %1289 = vmatpush1.bf16.xpose.msra.mxu0 0
        %1290 = vmatprep.subr.bf16.mxu0 0
        %1291 = vmatpush1.bf16.xpose.msra.mxu0 0
        %1292 = vmatprep.subr.bf16.mxu0 0
        %1293 = vmatpush1.bf16.xpose.msra.mxu0 0
        %1294 = vmatprep.subr.bf16.mxu0 0
        %1295 = vmatpush1.bf16.xpose.msra.mxu0 0
        %1296 = vmatprep.subr.bf16.mxu0 0
        %1297 = vmatpush1.bf16.xpose.msra.mxu0 0
        %1298 = vmatprep.subr.bf16.mxu0 0
        %1299 = vmatpush1.bf16.xpose.msra.mxu0 0
        %1300 = vmatprep.subr.bf16.mxu0 0
        %1301 = vmatpush1.bf16.xpose.msra.mxu0 0
        %1302 = vmatprep.subr.bf16.mxu0 0
        %1303 = vmatpush1.bf16.xpose.msra.mxu0 0
        %1304 = vmatprep.subr.bf16.mxu0 0
        %1305 = vmatpush1.bf16.xpose.msra.mxu0 0
        %1306 = vmatprep.subr.bf16.mxu0 0
        %1307 = vmatpush1.bf16.xpose.msra.mxu0 0
        %1308 = vmatprep.subr.bf16.mxu0 0
        %1309 = vmatpush1.bf16.xpose.msra.mxu0 0
        %1310 = vmatprep.mubr.bf16.mxu0 0
        %1311 = vmatmul.mubr.bf16.gmra.mrb[0].mxu0 %v1270
        %v1312 = vpop.f32.mrb[0].mxu0
        %v1313 = vadd.f32 0.0, %v1312
        %v1314 = vpop.f32.mrb[0].mxu0
        %v1315 = vpop.f32.mrb[0].mxu0
        %v1316 = vpop.f32.mrb[0].mxu0
        %1317 = vdwg.mxu0
        %1318 = vmatprep.subr.bf16.mxu0 0
        %1319 = vmatpush1.bf16.xpose.msra.mxu0 %v1275
        %1320 = vmatprep.subr.bf16.mxu0 0
        %1321 = vmatpush1.bf16.xpose.msra.mxu0 0
        %1322 = vmatprep.subr.bf16.mxu0 0
        %1323 = vmatpush1.bf16.xpose.msra.mxu0 0
        %1324 = vmatprep.subr.bf16.mxu0 0
        %1325 = vmatpush1.bf16.xpose.msra.mxu0 0
        %1326 = vmatprep.subr.bf16.mxu0 0
        %1327 = vmatpush1.bf16.xpose.msra.mxu0 0
        %1328 = vmatprep.subr.bf16.mxu0 0
        %1329 = vmatpush1.bf16.xpose.msra.mxu0 0
        %1330 = vmatprep.subr.bf16.mxu0 0
        %1331 = vmatpush1.bf16.xpose.msra.mxu0 0
        %1332 = vmatprep.subr.bf16.mxu0 0
        %1333 = vmatpush1.bf16.xpose.msra.mxu0 0
        %1334 = vmatprep.subr.bf16.mxu0 0
        %1335 = vmatpush1.bf16.xpose.msra.mxu0 0
        %1336 = vmatprep.subr.bf16.mxu0 0
        %1337 = vmatpush1.bf16.xpose.msra.mxu0 0
        %1338 = vmatprep.subr.bf16.mxu0 0
        %1339 = vmatpush1.bf16.xpose.msra.mxu0 0
        %1340 = vmatprep.subr.bf16.mxu0 0
        %1341 = vmatpush1.bf16.xpose.msra.mxu0 0
        %1342 = vmatprep.subr.bf16.mxu0 0
        %1343 = vmatpush1.bf16.xpose.msra.mxu0 0
        %1344 = vmatprep.subr.bf16.mxu0 0
        %1345 = vmatpush1.bf16.xpose.msra.mxu0 0
        %1346 = vmatprep.subr.bf16.mxu0 0
        %1347 = vmatpush1.bf16.xpose.msra.mxu0 0
        %1348 = vmatprep.subr.bf16.mxu0 0
        %1349 = vmatpush1.bf16.xpose.msra.mxu0 0
        %1350 = vmatprep.mubr.bf16.mxu0 0
        %1351 = vmatmul.mubr.bf16.gmra.mrb[0].mxu0 %v1271
        %v1352 = vpop.f32.mrb[0].mxu0
        %v1353 = vadd.f32 0.0, %v1352
        %v1354 = vpop.f32.mrb[0].mxu0
        %v1355 = vpop.f32.mrb[0].mxu0
        %v1356 = vpop.f32.mrb[0].mxu0
        %1357 = vdwg.mxu0
        %1358 = vmatprep.subr.bf16.mxu0 0
        %1359 = vmatpush1.bf16.xpose.msra.mxu0 %v1276
        %1360 = vmatprep.subr.bf16.mxu0 0
        %1361 = vmatpush1.bf16.xpose.msra.mxu0 0
        %1362 = vmatprep.subr.bf16.mxu0 0
        %1363 = vmatpush1.bf16.xpose.msra.mxu0 0
        %1364 = vmatprep.subr.bf16.mxu0 0
        %1365 = vmatpush1.bf16.xpose.msra.mxu0 0
        %1366 = vmatprep.subr.bf16.mxu0 0
        %1367 = vmatpush1.bf16.xpose.msra.mxu0 0
        %1368 = vmatprep.subr.bf16.mxu0 0
        %1369 = vmatpush1.bf16.xpose.msra.mxu0 0
        %1370 = vmatprep.subr.bf16.mxu0 0
        %1371 = vmatpush1.bf16.xpose.msra.mxu0 0
        %1372 = vmatprep.subr.bf16.mxu0 0
        %1373 = vmatpush1.bf16.xpose.msra.mxu0 0
        %1374 = vmatprep.subr.bf16.mxu0 0
        %1375 = vmatpush1.bf16.xpose.msra.mxu0 0
        %1376 = vmatprep.subr.bf16.mxu0 0
        %1377 = vmatpush1.bf16.xpose.msra.mxu0 0
        %1378 = vmatprep.subr.bf16.mxu0 0
        %1379 = vmatpush1.bf16.xpose.msra.mxu0 0
        %1380 = vmatprep.subr.bf16.mxu0 0
        %1381 = vmatpush1.bf16.xpose.msra.mxu0 0
        %1382 = vmatprep.subr.bf16.mxu0 0
        %1383 = vmatpush1.bf16.xpose.msra.mxu0 0
        %1384 = vmatprep.subr.bf16.mxu0 0
        %1385 = vmatpush1.bf16.xpose.msra.mxu0 0
        %1386 = vmatprep.subr.bf16.mxu0 0
        %1387 = vmatpush1.bf16.xpose.msra.mxu0 0
        %1388 = vmatprep.subr.bf16.mxu0 0
        %1389 = vmatpush1.bf16.xpose.msra.mxu0 0
        %1390 = vmatprep.mubr.bf16.mxu0 0
        %1391 = vmatmul.mubr.bf16.gmra.mrb[0].mxu0 %v1272
        %v1392 = vpop.f32.mrb[0].mxu0
        %v1393 = vadd.f32 0.0, %v1392
        %v1394 = vpop.f32.mrb[0].mxu0
        %v1395 = vpop.f32.mrb[0].mxu0
        %v1396 = vpop.f32.mrb[0].mxu0
        %1397 = vdwg.mxu0
        %1398 = vmatprep.subr.bf16.mxu0 0
        %1399 = vmatpush1.bf16.xpose.msra.mxu0 %v1277
        %1400 = vmatprep.subr.bf16.mxu0 0
        %1401 = vmatpush1.bf16.xpose.msra.mxu0 0
        %1402 = vmatprep.subr.bf16.mxu0 0
        %1403 = vmatpush1.bf16.xpose.msra.mxu0 0
        %1404 = vmatprep.subr.bf16.mxu0 0
        %1405 = vmatpush1.bf16.xpose.msra.mxu0 0
        %1406 = vmatprep.subr.bf16.mxu0 0
        %1407 = vmatpush1.bf16.xpose.msra.mxu0 0
        %1408 = vmatprep.subr.bf16.mxu0 0
        %1409 = vmatpush1.bf16.xpose.msra.mxu0 0
        %1410 = vmatprep.subr.bf16.mxu0 0
        %1411 = vmatpush1.bf16.xpose.msra.mxu0 0
        %1412 = vmatprep.subr.bf16.mxu0 0
        %1413 = vmatpush1.bf16.xpose.msra.mxu0 0
        %1414 = vmatprep.subr.bf16.mxu0 0
        %1415 = vmatpush1.bf16.xpose.msra.mxu0 0
        %1416 = vmatprep.subr.bf16.mxu0 0
        %1417 = vmatpush1.bf16.xpose.msra.mxu0 0
        %1418 = vmatprep.subr.bf16.mxu0 0
        %1419 = vmatpush1.bf16.xpose.msra.mxu0 0
        %1420 = vmatprep.subr.bf16.mxu0 0
        %1421 = vmatpush1.bf16.xpose.msra.mxu0 0
        %1422 = vmatprep.subr.bf16.mxu0 0
        %1423 = vmatpush1.bf16.xpose.msra.mxu0 0
        %1424 = vmatprep.subr.bf16.mxu0 0
        %1425 = vmatpush1.bf16.xpose.msra.mxu0 0
        %1426 = vmatprep.subr.bf16.mxu0 0
        %1427 = vmatpush1.bf16.xpose.msra.mxu0 0
        %1428 = vmatprep.subr.bf16.mxu0 0
        %1429 = vmatpush1.bf16.xpose.msra.mxu0 0
        %1430 = vmatprep.mubr.bf16.mxu0 0
        %1431 = vmatmul.mubr.bf16.gmra.mrb[0].mxu0 %v1273
        %v1432 = vpop.f32.mrb[0].mxu0
        %v1433 = vadd.f32 0.0, %v1432
        %v1434 = vpop.f32.mrb[0].mxu0
        %v1435 = vpop.f32.mrb[0].mxu0
        %v1436 = vpop.f32.mrb[0].mxu0
        %1437 = vdwg.mxu0
        %v1438 = vsel %vm1032, %v1313, -inf
        %1439 = vmax.xlane.f32.xlu0 %v1438
        %v1440 = vpop.xlane.xlu0 %1439
        %v1441 = vsel %vm1032, %v1353, -inf
        %1442 = vmax.xlane.f32.xlu0 %v1441
        %v1443 = vpop.xlane.xlu0 %1442
        %v1444 = vsel %vm1032, %v1393, -inf
        %1445 = vmax.xlane.f32.xlu0 %v1444
        %v1446 = vpop.xlane.xlu0 %1445
        %v1447 = vsel %vm1032, %v1433, -inf
        %1448 = vmax.xlane.f32.xlu0 %v1447
        %v1449 = vpop.xlane.xlu0 %1448
        %v1450 = vsub.f32 %v1313, %v1440
        %v1451 = vsub.f32 %v1353, %v1443
        %v1452 = vsub.f32 %v1393, %v1446
        %v1453 = vsub.f32 %v1433, %v1449
        %v1454 = vmul.f32 %v1450, 1.442695
        %v1455 = vpow.pop %v1454
        %v1456 = vmul.f32 %v1451, 1.442695
        %v1457 = vpow.pop %v1456
        %v1458 = vmul.f32 %v1452, 1.442695
        %v1459 = vpow.pop %v1458
        %v1460 = vmul.f32 %v1453, 1.442695
        %v1461 = vpow.pop %v1460
        %v1462 = vsel %vm1032, %v1455, 0.0
        %1463 = vadd.xlane.f32.xlu0 %v1462
        %v1464 = vpop.xlane.xlu0 %1463
        %v1465 = vsel %vm1032, %v1457, 0.0
        %1466 = vadd.xlane.f32.xlu0 %v1465
        %v1467 = vpop.xlane.xlu0 %1466
        %v1468 = vsel %vm1032, %v1459, 0.0
        %1469 = vadd.xlane.f32.xlu0 %v1468
        %v1470 = vpop.xlane.xlu0 %1469
        %v1471 = vsel %vm1032, %v1461, 0.0
        %1472 = vadd.xlane.f32.xlu0 %v1471
        %v1473 = vpop.xlane.xlu0 %1472
        %v1474 = vrcp.pop %v1464
        %v1475 = vrcp.pop %v1467
        %v1476 = vrcp.pop %v1470
        %v1477 = vrcp.pop %v1473
        %v1478 = vmul.f32 %v1455, %v1474
        %v1479 = vmul.f32 %v1457, %v1475
        %v1480 = vmul.f32 %v1459, %v1476
        %v1481 = vmul.f32 %v1461, %v1477
        %v1482 = vpack.c.bf16 %v1478, %v1478
        %v1483 = vpack.c.bf16 %v1479, %v1479
        %v1484 = vpack.c.bf16 %v1480, %v1480
        %v1485 = vpack.c.bf16 %v1481, %v1481
        %v1486 = vpack.c.bf16 %v860, %v860
        %v1487 = vpack.c.bf16 %v861, %v861
        %v1488 = vpack.c.bf16 %v862, %v862
        %v1489 = vpack.c.bf16 %v863, %v863
        %v1491 = vsel %vm1032, %v1482, 0
        %v1494 = vsel %vm1088, %v1486, 0
        %1496 = vmatprep.subr.bf16.mxu0 0
        %1497 = vmatpush1.bf16.msra.mxu0 %v1494
        %1498 = vmatprep.subr.bf16.mxu0 0
        %1499 = vmatpush1.bf16.msra.mxu0 0
        %1500 = vmatprep.subr.bf16.mxu0 0
        %1501 = vmatpush1.bf16.msra.mxu0 0
        %1502 = vmatprep.subr.bf16.mxu0 0
        %1503 = vmatpush1.bf16.msra.mxu0 0
        %1504 = vmatprep.subr.bf16.mxu0 0
        %1505 = vmatpush1.bf16.msra.mxu0 0
        %1506 = vmatprep.subr.bf16.mxu0 0
        %1507 = vmatpush1.bf16.msra.mxu0 0
        %1508 = vmatprep.subr.bf16.mxu0 0
        %1509 = vmatpush1.bf16.msra.mxu0 0
        %1510 = vmatprep.subr.bf16.mxu0 0
        %1511 = vmatpush1.bf16.msra.mxu0 0
        %1512 = vmatprep.subr.bf16.mxu0 0
        %1513 = vmatpush1.bf16.msra.mxu0 0
        %1514 = vmatprep.subr.bf16.mxu0 0
        %1515 = vmatpush1.bf16.msra.mxu0 0
        %1516 = vmatprep.subr.bf16.mxu0 0
        %1517 = vmatpush1.bf16.msra.mxu0 0
        %1518 = vmatprep.subr.bf16.mxu0 0
        %1519 = vmatpush1.bf16.msra.mxu0 0
        %1520 = vmatprep.subr.bf16.mxu0 0
        %1521 = vmatpush1.bf16.msra.mxu0 0
        %1522 = vmatprep.subr.bf16.mxu0 0
        %1523 = vmatpush1.bf16.msra.mxu0 0
        %1524 = vmatprep.subr.bf16.mxu0 0
        %1525 = vmatpush1.bf16.msra.mxu0 0
        %1526 = vmatprep.subr.bf16.mxu0 0
        %1527 = vmatpush1.bf16.msra.mxu0 0
        %1528 = vmatprep.mubr.bf16.mxu0 0
        %1529 = vmatmul.mubr.bf16.gmra.mrb[0].mxu0 %v1491
        %v1530 = vpop.f32.mrb[0].mxu0
        %v1531 = vadd.f32 0.0, %v1530
        %v1532 = vpop.f32.mrb[0].mxu0
        %v1533 = vpop.f32.mrb[0].mxu0
        %v1534 = vpop.f32.mrb[0].mxu0
        %1535 = vdwg.mxu0
        %v1537 = vsel %vm1032, %v1483, 0
        %v1540 = vsel %vm1088, %v1487, 0
        %1542 = vmatprep.subr.bf16.mxu0 0
        %1543 = vmatpush1.bf16.msra.mxu0 %v1540
        %1544 = vmatprep.subr.bf16.mxu0 0
        %1545 = vmatpush1.bf16.msra.mxu0 0
        %1546 = vmatprep.subr.bf16.mxu0 0
        %1547 = vmatpush1.bf16.msra.mxu0 0
        %1548 = vmatprep.subr.bf16.mxu0 0
        %1549 = vmatpush1.bf16.msra.mxu0 0
        %1550 = vmatprep.subr.bf16.mxu0 0
        %1551 = vmatpush1.bf16.msra.mxu0 0
        %1552 = vmatprep.subr.bf16.mxu0 0
        %1553 = vmatpush1.bf16.msra.mxu0 0
        %1554 = vmatprep.subr.bf16.mxu0 0
        %1555 = vmatpush1.bf16.msra.mxu0 0
        %1556 = vmatprep.subr.bf16.mxu0 0
        %1557 = vmatpush1.bf16.msra.mxu0 0
        %1558 = vmatprep.subr.bf16.mxu0 0
        %1559 = vmatpush1.bf16.msra.mxu0 0
        %1560 = vmatprep.subr.bf16.mxu0 0
        %1561 = vmatpush1.bf16.msra.mxu0 0
        %1562 = vmatprep.subr.bf16.mxu0 0
        %1563 = vmatpush1.bf16.msra.mxu0 0
        %1564 = vmatprep.subr.bf16.mxu0 0
        %1565 = vmatpush1.bf16.msra.mxu0 0
        %1566 = vmatprep.subr.bf16.mxu0 0
        %1567 = vmatpush1.bf16.msra.mxu0 0
        %1568 = vmatprep.subr.bf16.mxu0 0
        %1569 = vmatpush1.bf16.msra.mxu0 0
        %1570 = vmatprep.subr.bf16.mxu0 0
        %1571 = vmatpush1.bf16.msra.mxu0 0
        %1572 = vmatprep.subr.bf16.mxu0 0
        %1573 = vmatpush1.bf16.msra.mxu0 0
        %1574 = vmatprep.mubr.bf16.mxu0 0
        %1575 = vmatmul.mubr.bf16.gmra.mrb[0].mxu0 %v1537
        %v1576 = vpop.f32.mrb[0].mxu0
        %v1577 = vadd.f32 0.0, %v1576
        %v1578 = vpop.f32.mrb[0].mxu0
        %v1579 = vpop.f32.mrb[0].mxu0
        %v1580 = vpop.f32.mrb[0].mxu0
        %1581 = vdwg.mxu0
        %v1583 = vsel %vm1032, %v1484, 0
        %v1586 = vsel %vm1088, %v1488, 0
        %1588 = vmatprep.subr.bf16.mxu0 0
        %1589 = vmatpush1.bf16.msra.mxu0 %v1586
        %1590 = vmatprep.subr.bf16.mxu0 0
        %1591 = vmatpush1.bf16.msra.mxu0 0
        %1592 = vmatprep.subr.bf16.mxu0 0
        %1593 = vmatpush1.bf16.msra.mxu0 0
        %1594 = vmatprep.subr.bf16.mxu0 0
        %1595 = vmatpush1.bf16.msra.mxu0 0
        %1596 = vmatprep.subr.bf16.mxu0 0
        %1597 = vmatpush1.bf16.msra.mxu0 0
        %1598 = vmatprep.subr.bf16.mxu0 0
        %1599 = vmatpush1.bf16.msra.mxu0 0
        %1600 = vmatprep.subr.bf16.mxu0 0
        %1601 = vmatpush1.bf16.msra.mxu0 0
        %1602 = vmatprep.subr.bf16.mxu0 0
        %1603 = vmatpush1.bf16.msra.mxu0 0
        %1604 = vmatprep.subr.bf16.mxu0 0
        %1605 = vmatpush1.bf16.msra.mxu0 0
        %1606 = vmatprep.subr.bf16.mxu0 0
        %1607 = vmatpush1.bf16.msra.mxu0 0
        %1608 = vmatprep.subr.bf16.mxu0 0
        %1609 = vmatpush1.bf16.msra.mxu0 0
        %1610 = vmatprep.subr.bf16.mxu0 0
        %1611 = vmatpush1.bf16.msra.mxu0 0
        %1612 = vmatprep.subr.bf16.mxu0 0
        %1613 = vmatpush1.bf16.msra.mxu0 0
        %1614 = vmatprep.subr.bf16.mxu0 0
        %1615 = vmatpush1.bf16.msra.mxu0 0
        %1616 = vmatprep.subr.bf16.mxu0 0
        %1617 = vmatpush1.bf16.msra.mxu0 0
        %1618 = vmatprep.subr.bf16.mxu0 0
        %1619 = vmatpush1.bf16.msra.mxu0 0
        %1620 = vmatprep.mubr.bf16.mxu0 0
        %1621 = vmatmul.mubr.bf16.gmra.mrb[0].mxu0 %v1583
        %v1622 = vpop.f32.mrb[0].mxu0
        %v1623 = vadd.f32 0.0, %v1622
        %v1624 = vpop.f32.mrb[0].mxu0
        %v1625 = vpop.f32.mrb[0].mxu0
        %v1626 = vpop.f32.mrb[0].mxu0
        %1627 = vdwg.mxu0
        %v1629 = vsel %vm1032, %v1485, 0
        %v1632 = vsel %vm1088, %v1489, 0
        %1634 = vmatprep.subr.bf16.mxu0 0
        %1635 = vmatpush1.bf16.msra.mxu0 %v1632
        %1636 = vmatprep.subr.bf16.mxu0 0
        %1637 = vmatpush1.bf16.msra.mxu0 0
        %1638 = vmatprep.subr.bf16.mxu0 0
        %1639 = vmatpush1.bf16.msra.mxu0 0
        %1640 = vmatprep.subr.bf16.mxu0 0
        %1641 = vmatpush1.bf16.msra.mxu0 0
        %1642 = vmatprep.subr.bf16.mxu0 0
        %1643 = vmatpush1.bf16.msra.mxu0 0
        %1644 = vmatprep.subr.bf16.mxu0 0
        %1645 = vmatpush1.bf16.msra.mxu0 0
        %1646 = vmatprep.subr.bf16.mxu0 0
        %1647 = vmatpush1.bf16.msra.mxu0 0
        %1648 = vmatprep.subr.bf16.mxu0 0
        %1649 = vmatpush1.bf16.msra.mxu0 0
        %1650 = vmatprep.subr.bf16.mxu0 0
        %1651 = vmatpush1.bf16.msra.mxu0 0
        %1652 = vmatprep.subr.bf16.mxu0 0
        %1653 = vmatpush1.bf16.msra.mxu0 0
        %1654 = vmatprep.subr.bf16.mxu0 0
        %1655 = vmatpush1.bf16.msra.mxu0 0
        %1656 = vmatprep.subr.bf16.mxu0 0
        %1657 = vmatpush1.bf16.msra.mxu0 0
        %1658 = vmatprep.subr.bf16.mxu0 0
        %1659 = vmatpush1.bf16.msra.mxu0 0
        %1660 = vmatprep.subr.bf16.mxu0 0
        %1661 = vmatpush1.bf16.msra.mxu0 0
        %1662 = vmatprep.subr.bf16.mxu0 0
        %1663 = vmatpush1.bf16.msra.mxu0 0
        %1664 = vmatprep.subr.bf16.mxu0 0
        %1665 = vmatpush1.bf16.msra.mxu0 0
        %1666 = vmatprep.mubr.bf16.mxu0 0
        %1667 = vmatmul.mubr.bf16.gmra.mrb[0].mxu0 %v1629
        %v1668 = vpop.f32.mrb[0].mxu0
        %v1669 = vadd.f32 0.0, %v1668
        %v1670 = vpop.f32.mrb[0].mxu0
        %v1671 = vpop.f32.mrb[0].mxu0
        %v1672 = vpop.f32.mrb[0].mxu0
        %1673 = vdwg.mxu0
        %v1674 = vstv %s354
        %v1675 = vmul.f32 %v1127, %v1674
        %v1676 = vmul.f32 %v1173, %v1674
        %v1677 = vmul.f32 %v1219, %v1674
        %v1678 = vmul.f32 %v1265, %v1674
        %s1679 = ssub.f32 1.0, %s354
        %v1680 = vstv %s1679
        %v1681 = vmul.f32 %v1531, %v1680
        %v1682 = vmul.f32 %v1577, %v1680
        %v1683 = vmul.f32 %v1623, %v1680
        %v1684 = vmul.f32 %v1669, %v1680
        %v1685 = vadd.f32 %v1675, %v1681
        %v1686 = vadd.f32 %v1676, %v1682
        %v1687 = vadd.f32 %v1677, %v1683
        %v1688 = vadd.f32 %v1678, %v1684
        %v1689 = vadd.f32 %v355, %v1685
        %v1690 = vadd.f32 %v356, %v1686
        %v1691 = vadd.f32 %v357, %v1687
        %v1692 = vadd.f32 %v358, %v1688
        %1693 = vadd.xlane.f32.xlu0 %v1689
        %v1694 = vpop.xlane.xlu0 %1693
        %1695 = vadd.xlane.f32.xlu0 %v1690
        %v1696 = vpop.xlane.xlu0 %1695
        %1697 = vadd.xlane.f32.xlu0 %v1691
        %v1698 = vpop.xlane.xlu0 %1697
        %1699 = vadd.xlane.f32.xlu0 %v1692
        %v1700 = vpop.xlane.xlu0 %1699
        %v1701 = vrcp.pop 128.0
        %v1702 = vmul.f32 %v1694, %v1701
        %v1703 = vmul.f32 %v1696, %v1701
        %v1704 = vmul.f32 %v1698, %v1701
        %v1705 = vmul.f32 %v1700, %v1701
        %v1706 = vsub.f32 %v1689, %v1702
        %v1707 = vsub.f32 %v1690, %v1703
        %v1708 = vsub.f32 %v1691, %v1704
        %v1709 = vsub.f32 %v1692, %v1705
        %v1710 = vmul.f32 %v1706, %v1706
        %v1711 = vmul.f32 %v1707, %v1707
        %v1712 = vmul.f32 %v1708, %v1708
        %v1713 = vmul.f32 %v1709, %v1709
        %1714 = vadd.xlane.f32.xlu0 %v1710
        %v1715 = vpop.xlane.xlu0 %1714
        %1716 = vadd.xlane.f32.xlu0 %v1711
        %v1717 = vpop.xlane.xlu0 %1716
        %1718 = vadd.xlane.f32.xlu0 %v1712
        %v1719 = vpop.xlane.xlu0 %1718
        %1720 = vadd.xlane.f32.xlu0 %v1713
        %v1721 = vpop.xlane.xlu0 %1720
        %v1722 = vmul.f32 %v1715, %v1701
        %v1723 = vmul.f32 %v1717, %v1701
        %v1724 = vmul.f32 %v1719, %v1701
        %v1725 = vmul.f32 %v1721, %v1701
        %v1726 = vadd.f32 %v1722, 1e-05
        %v1727 = vadd.f32 %v1723, 1e-05
        %v1728 = vadd.f32 %v1724, 1e-05
        %v1729 = vadd.f32 %v1725, 1e-05
        %v1730 = vrsqrt.pop %v1726
        %v1731 = vrsqrt.pop %v1727
        %v1732 = vrsqrt.pop %v1728
        %v1733 = vrsqrt.pop %v1729
        %v1734 = vmul.f32 %v1706, %v1730
        %v1735 = vmul.f32 %v1707, %v1731
        %v1736 = vmul.f32 %v1708, %v1732
        %v1737 = vmul.f32 %v1709, %v1733
        %v1738 = vlaneseq
        %v1739 = vshrl.u32 %v1738, 7
        %v1740 = vsub.s32 0, %v1739
        %v1741 = vrot.slane %v368, %v1740
        %v1742 = vmul.f32 %v1734, %v1741
        %v1743 = vmul.f32 %v1735, %v1741
        %v1744 = vmul.f32 %v1736, %v1741
        %v1745 = vmul.f32 %v1737, %v1741
        %v1746 = vlaneseq
        %v1747 = vshrl.u32 %v1746, 7
        %v1748 = vsub.s32 1, %v1747
        %v1749 = vrot.slane %v368, %v1748
        %v1750 = vadd.f32 %v1742, %v1749
        %v1751 = vadd.f32 %v1743, %v1749
        %v1752 = vadd.f32 %v1744, %v1749
        %v1753 = vadd.f32 %v1745, %v1749
        %v1754 = vpack.c.bf16 %v1751, %v1750
        %v1755 = vpack.c.bf16 %v1753, %v1752
        %v1756 = vld [vmem:[%s272 + $0x18] sm:$0xf]
        %v1757 = vld [vmem:[%s272 + $0x38] sm:$0xf]
        %v1758 = vld [vmem:[%s272 + $0x58] sm:$0xf]
        %v1759 = vld [vmem:[%s272 + $0x78] sm:$0xf]
        %v1760 = vld [vmem:[%s272 + $0x98] sm:$0xf]
        %v1761 = vld [vmem:[%s272 + $0xb8] sm:$0xf]
        %v1762 = vld [vmem:[%s272 + $0xd8] sm:$0xf]
        %v1763 = vld [vmem:[%s272 + $0xf8] sm:$0xf]
        %v1764 = vld [vmem:[%s272 + $0x118] sm:$0xf]
        %v1765 = vld [vmem:[%s272 + $0x138] sm:$0xf]
        %v1766 = vld [vmem:[%s272 + $0x158] sm:$0xf]
        %v1767 = vld [vmem:[%s272 + $0x178] sm:$0xf]
        %v1768 = vld [vmem:[%s272 + $0x198] sm:$0xf]
        %v1769 = vld [vmem:[%s272 + $0x1b8] sm:$0xf]
        %v1770 = vld [vmem:[%s272 + $0x1d8] sm:$0xf]
        %v1771 = vld [vmem:[%s272 + $0x1f8] sm:$0xf]
        %v1772 = vlaneseq
        %v1773 = vshrl.u32 %v1772, 7
        %v1774 = vsub.s32 6, %v1773
        %v1775 = vrot.slane %v367, %v1774
        %v1792 = vunpack.c.l.b16 %v1756
        %v1793 = vunpack.c.l.b16 %v1757
        %v1794 = vunpack.c.l.b16 %v1758
        %v1795 = vunpack.c.l.b16 %v1759
        %v1796 = vunpack.c.l.b16 %v1760
        %v1797 = vunpack.c.l.b16 %v1761
        %v1798 = vunpack.c.l.b16 %v1762
        %v1799 = vunpack.c.l.b16 %v1763
        %v1800 = vunpack.c.l.b16 %v1764
        %v1801 = vunpack.c.l.b16 %v1765
        %v1802 = vunpack.c.l.b16 %v1766
        %v1803 = vunpack.c.l.b16 %v1767
        %v1804 = vunpack.c.l.b16 %v1768
        %v1805 = vunpack.c.l.b16 %v1769
        %v1806 = vunpack.c.l.b16 %v1770
        %v1807 = vunpack.c.l.b16 %v1771
        %v1808 = vpack.c.b16 %v1793, %v1792
        %v1809 = vpack.c.b16 %v1795, %v1794
        %v1810 = vpack.c.b16 %v1797, %v1796
        %v1811 = vpack.c.b16 %v1799, %v1798
        %v1812 = vpack.c.b16 %v1801, %v1800
        %v1813 = vpack.c.b16 %v1803, %v1802
        %v1814 = vpack.c.b16 %v1805, %v1804
        %v1815 = vpack.c.b16 %v1807, %v1806
        %1824 = vmatprep.subr.bf16.mxu0 0
        %1825 = vmatpush1.bf16.msra.mxu0 %v1808
        %1826 = vmatprep.subr.bf16.mxu0 0
        %1827 = vmatpush1.bf16.msra.mxu0 %v1809
        %1828 = vmatprep.subr.bf16.mxu0 0
        %1829 = vmatpush1.bf16.msra.mxu0 %v1810
        %1830 = vmatprep.subr.bf16.mxu0 0
        %1831 = vmatpush1.bf16.msra.mxu0 %v1811
        %1832 = vmatprep.subr.bf16.mxu0 0
        %1833 = vmatpush1.bf16.msra.mxu0 %v1812
        %1834 = vmatprep.subr.bf16.mxu0 0
        %1835 = vmatpush1.bf16.msra.mxu0 %v1813
        %1836 = vmatprep.subr.bf16.mxu0 0
        %1837 = vmatpush1.bf16.msra.mxu0 %v1814
        %1838 = vmatprep.subr.bf16.mxu0 0
        %1839 = vmatpush1.bf16.msra.mxu0 %v1815
        %1840 = vmatprep.subr.bf16.mxu0 0
        %1841 = vmatpush1.bf16.msra.mxu0 0
        %1842 = vmatprep.subr.bf16.mxu0 0
        %1843 = vmatpush1.bf16.msra.mxu0 0
        %1844 = vmatprep.subr.bf16.mxu0 0
        %1845 = vmatpush1.bf16.msra.mxu0 0
        %1846 = vmatprep.subr.bf16.mxu0 0
        %1847 = vmatpush1.bf16.msra.mxu0 0
        %1848 = vmatprep.subr.bf16.mxu0 0
        %1849 = vmatpush1.bf16.msra.mxu0 0
        %1850 = vmatprep.subr.bf16.mxu0 0
        %1851 = vmatpush1.bf16.msra.mxu0 0
        %1852 = vmatprep.subr.bf16.mxu0 0
        %1853 = vmatpush1.bf16.msra.mxu0 0
        %1854 = vmatprep.subr.bf16.mxu0 0
        %1855 = vmatpush1.bf16.msra.mxu0 0
        %1856 = vmatprep.mubr.bf16.mxu0 0
        %1857 = vmatmul.mubr.bf16.gmra.mrb[0].mxu0 %v1754
        %v1858 = vpop.f32.mrb[0].mxu0
        %v1859 = vadd.f32 %v1775, %v1858
        %v1860 = vpop.f32.mrb[0].mxu0
        %v1861 = vpop.f32.mrb[0].mxu0
        %v1862 = vadd.f32 %v1775, %v1861
        %v1863 = vpop.f32.mrb[0].mxu0
        %1864 = vmatprep.mubr.bf16.mxu0 0
        %1865 = vmatmul.mubr.bf16.gmra.mrb[0].mxu0 %v1755
        %v1866 = vpop.f32.mrb[0].mxu0
        %v1867 = vadd.f32 %v1775, %v1866
        %v1868 = vpop.f32.mrb[0].mxu0
        %v1869 = vpop.f32.mrb[0].mxu0
        %v1870 = vadd.f32 %v1775, %v1869
        %v1871 = vpop.f32.mrb[0].mxu0
        %1872 = vdwg.mxu0
        %v1873 = vadd.f32 %v1750, %v1859
        %v1874 = vadd.f32 %v1751, %v1862
        %v1875 = vadd.f32 %v1752, %v1867
        %v1876 = vadd.f32 %v1753, %v1870
        %1877 = vadd.xlane.f32.xlu0 %v1873
        %v1878 = vpop.xlane.xlu0 %1877
        %1879 = vadd.xlane.f32.xlu0 %v1874
        %v1880 = vpop.xlane.xlu0 %1879
        %1881 = vadd.xlane.f32.xlu0 %v1875
        %v1882 = vpop.xlane.xlu0 %1881
        %1883 = vadd.xlane.f32.xlu0 %v1876
        %v1884 = vpop.xlane.xlu0 %1883
        %v1885 = vmul.f32 %v1878, %v1701
        %v1886 = vmul.f32 %v1880, %v1701
        %v1887 = vmul.f32 %v1882, %v1701
        %v1888 = vmul.f32 %v1884, %v1701
        %v1889 = vsub.f32 %v1873, %v1885
        %v1890 = vsub.f32 %v1874, %v1886
        %v1891 = vsub.f32 %v1875, %v1887
        %v1892 = vsub.f32 %v1876, %v1888
        %v1893 = vmul.f32 %v1889, %v1889
        %v1894 = vmul.f32 %v1890, %v1890
        %v1895 = vmul.f32 %v1891, %v1891
        %v1896 = vmul.f32 %v1892, %v1892
        %1897 = vadd.xlane.f32.xlu0 %v1893
        %v1898 = vpop.xlane.xlu0 %1897
        %1899 = vadd.xlane.f32.xlu0 %v1894
        %v1900 = vpop.xlane.xlu0 %1899
        %1901 = vadd.xlane.f32.xlu0 %v1895
        %v1902 = vpop.xlane.xlu0 %1901
        %1903 = vadd.xlane.f32.xlu0 %v1896
        %v1904 = vpop.xlane.xlu0 %1903
        %v1905 = vmul.f32 %v1898, %v1701
        %v1906 = vmul.f32 %v1900, %v1701
        %v1907 = vmul.f32 %v1902, %v1701
        %v1908 = vmul.f32 %v1904, %v1701
        %v1909 = vadd.f32 %v1905, 1e-05
        %v1910 = vadd.f32 %v1906, 1e-05
        %v1911 = vadd.f32 %v1907, 1e-05
        %v1912 = vadd.f32 %v1908, 1e-05
        %v1913 = vrsqrt.pop %v1909
        %v1914 = vrsqrt.pop %v1910
        %v1915 = vrsqrt.pop %v1911
        %v1916 = vrsqrt.pop %v1912
        %v1917 = vmul.f32 %v1889, %v1913
        %v1918 = vmul.f32 %v1890, %v1914
        %v1919 = vmul.f32 %v1891, %v1915
        %v1920 = vmul.f32 %v1892, %v1916
        %v1921 = vlaneseq
        %v1922 = vshrl.u32 %v1921, 7
        %v1923 = vsub.s32 2, %v1922
        %v1924 = vrot.slane %v368, %v1923
        %v1925 = vmul.f32 %v1917, %v1924
        %v1926 = vmul.f32 %v1918, %v1924
        %v1927 = vmul.f32 %v1919, %v1924
        %v1928 = vmul.f32 %v1920, %v1924
        %v1929 = vlaneseq
        %v1930 = vshrl.u32 %v1929, 7
        %v1931 = vsub.s32 3, %v1930
        %v1932 = vrot.slane %v368, %v1931
        %v1933 = vadd.f32 %v1925, %v1932
        %v1934 = vadd.f32 %v1926, %v1932
        %v1935 = vadd.f32 %v1927, %v1932
        %v1936 = vadd.f32 %v1928, %v1932
        %v1937 = vpack.c.bf16 %v1934, %v1933
        %v1938 = vpack.c.bf16 %v1936, %v1935
        %v1939 = vld [vmem:[%s272 + $0x1c] sm:$0xf]
        %v1940 = vld [vmem:[%s272 + $0x3c] sm:$0xf]
        %v1941 = vld [vmem:[%s272 + $0x5c] sm:$0xf]
        %v1942 = vld [vmem:[%s272 + $0x7c] sm:$0xf]
        %v1943 = vld [vmem:[%s272 + $0x9c] sm:$0xf]
        %v1944 = vld [vmem:[%s272 + $0xbc] sm:$0xf]
        %v1945 = vld [vmem:[%s272 + $0xdc] sm:$0xf]
        %v1946 = vld [vmem:[%s272 + $0xfc] sm:$0xf]
        %v1947 = vld [vmem:[%s272 + $0x11c] sm:$0xf]
        %v1948 = vld [vmem:[%s272 + $0x13c] sm:$0xf]
        %v1949 = vld [vmem:[%s272 + $0x15c] sm:$0xf]
        %v1950 = vld [vmem:[%s272 + $0x17c] sm:$0xf]
        %v1951 = vld [vmem:[%s272 + $0x19c] sm:$0xf]
        %v1952 = vld [vmem:[%s272 + $0x1bc] sm:$0xf]
        %v1953 = vld [vmem:[%s272 + $0x1dc] sm:$0xf]
        %v1954 = vld [vmem:[%s272 + $0x1fc] sm:$0xf]
        %v1955 = vlaneseq
        %v1956 = vshrl.u32 %v1955, 7
        %v1957 = vsub.s32 7, %v1956
        %v1958 = vrot.slane %v367, %v1957
        %v1975 = vunpack.c.l.b16 %v1939
        %v1976 = vunpack.c.l.b16 %v1940
        %v1977 = vunpack.c.l.b16 %v1941
        %v1978 = vunpack.c.l.b16 %v1942
        %v1979 = vunpack.c.l.b16 %v1943
        %v1980 = vunpack.c.l.b16 %v1944
        %v1981 = vunpack.c.l.b16 %v1945
        %v1982 = vunpack.c.l.b16 %v1946
        %v1983 = vunpack.c.l.b16 %v1947
        %v1984 = vunpack.c.l.b16 %v1948
        %v1985 = vunpack.c.l.b16 %v1949
        %v1986 = vunpack.c.l.b16 %v1950
        %v1987 = vunpack.c.l.b16 %v1951
        %v1988 = vunpack.c.l.b16 %v1952
        %v1989 = vunpack.c.l.b16 %v1953
        %v1990 = vunpack.c.l.b16 %v1954
        %v1991 = vpack.c.b16 %v1976, %v1975
        %v1992 = vpack.c.b16 %v1978, %v1977
        %v1993 = vpack.c.b16 %v1980, %v1979
        %v1994 = vpack.c.b16 %v1982, %v1981
        %v1995 = vpack.c.b16 %v1984, %v1983
        %v1996 = vpack.c.b16 %v1986, %v1985
        %v1997 = vpack.c.b16 %v1988, %v1987
        %v1998 = vpack.c.b16 %v1990, %v1989
        %2007 = vmatprep.subr.bf16.mxu0 0
        %2008 = vmatpush1.bf16.msra.mxu0 %v1991
        %2009 = vmatprep.subr.bf16.mxu0 0
        %2010 = vmatpush1.bf16.msra.mxu0 %v1992
        %2011 = vmatprep.subr.bf16.mxu0 0
        %2012 = vmatpush1.bf16.msra.mxu0 %v1993
        %2013 = vmatprep.subr.bf16.mxu0 0
        %2014 = vmatpush1.bf16.msra.mxu0 %v1994
        %2015 = vmatprep.subr.bf16.mxu0 0
        %2016 = vmatpush1.bf16.msra.mxu0 %v1995
        %2017 = vmatprep.subr.bf16.mxu0 0
        %2018 = vmatpush1.bf16.msra.mxu0 %v1996
        %2019 = vmatprep.subr.bf16.mxu0 0
        %2020 = vmatpush1.bf16.msra.mxu0 %v1997
        %2021 = vmatprep.subr.bf16.mxu0 0
        %2022 = vmatpush1.bf16.msra.mxu0 %v1998
        %2023 = vmatprep.subr.bf16.mxu0 0
        %2024 = vmatpush1.bf16.msra.mxu0 0
        %2025 = vmatprep.subr.bf16.mxu0 0
        %2026 = vmatpush1.bf16.msra.mxu0 0
        %2027 = vmatprep.subr.bf16.mxu0 0
        %2028 = vmatpush1.bf16.msra.mxu0 0
        %2029 = vmatprep.subr.bf16.mxu0 0
        %2030 = vmatpush1.bf16.msra.mxu0 0
        %2031 = vmatprep.subr.bf16.mxu0 0
        %2032 = vmatpush1.bf16.msra.mxu0 0
        %2033 = vmatprep.subr.bf16.mxu0 0
        %2034 = vmatpush1.bf16.msra.mxu0 0
        %2035 = vmatprep.subr.bf16.mxu0 0
        %2036 = vmatpush1.bf16.msra.mxu0 0
        %2037 = vmatprep.subr.bf16.mxu0 0
        %2038 = vmatpush1.bf16.msra.mxu0 0
        %2039 = vmatprep.mubr.bf16.mxu0 0
        %2040 = vmatmul.mubr.bf16.gmra.mrb[0].mxu0 %v1937
        %v2041 = vpop.f32.mrb[0].mxu0
        %v2042 = vadd.f32 %v1958, %v2041
        %v2043 = vpop.f32.mrb[0].mxu0
        %v2044 = vpop.f32.mrb[0].mxu0
        %v2045 = vadd.f32 %v1958, %v2044
        %v2046 = vpop.f32.mrb[0].mxu0
        %2047 = vmatprep.mubr.bf16.mxu0 0
        %2048 = vmatmul.mubr.bf16.gmra.mrb[0].mxu0 %v1938
        %v2049 = vpop.f32.mrb[0].mxu0
        %v2050 = vadd.f32 %v1958, %v2049
        %v2051 = vpop.f32.mrb[0].mxu0
        %v2052 = vpop.f32.mrb[0].mxu0
        %v2053 = vadd.f32 %v1958, %v2052
        %v2054 = vpop.f32.mrb[0].mxu0
        %2055 = vdwg.mxu0
        %2056 = vst [vmem:[#allocation2] sm:$0xff] %v2042
        %2057 = vst [vmem:[#allocation2 + $0x8] sm:$0xff] %v2045
        %2058 = vst [vmem:[#allocation2 + $0x10] sm:$0xff] %v2050
        %2059 = vst [vmem:[#allocation2 + $0x18] sm:$0xff] %v2053
        %v2060 = vrot.slane %v2042, 4
        %v2061 = vadd.f32 %v2042, %v2060
        %v2062 = vrot.slane %v2061, 2
        %v2063 = vadd.f32 %v2061, %v2062
        %v2064 = vrot.slane %v2063, 1
        %v2065 = vadd.f32 %v2063, %v2064
        %v2066 = vrot.slane %v2045, 4
        %v2067 = vadd.f32 %v2045, %v2066
        %v2068 = vrot.slane %v2067, 2
        %v2069 = vadd.f32 %v2067, %v2068
        %v2070 = vrot.slane %v2069, 1
        %v2071 = vadd.f32 %v2069, %v2070
        %v2072 = vrot.slane %v2050, 4
        %v2073 = vadd.f32 %v2050, %v2072
        %v2074 = vrot.slane %v2073, 2
        %v2075 = vadd.f32 %v2073, %v2074
        %v2076 = vrot.slane %v2075, 1
        %v2077 = vadd.f32 %v2075, %v2076
        %v2078 = vrot.slane %v2053, 4
        %v2079 = vadd.f32 %v2053, %v2078
        %v2080 = vrot.slane %v2079, 2
        %v2081 = vadd.f32 %v2079, %v2080
        %v2082 = vrot.slane %v2081, 1
        %v2083 = vadd.f32 %v2081, %v2082
        %v2084 = vrcp.pop 8.0
        %v2085 = vmul.f32 %v2065, %v2084
        %v2086 = vmul.f32 %v2071, %v2084
        %v2087 = vmul.f32 %v2077, %v2084
        %v2088 = vmul.f32 %v2083, %v2084
        %vm2093 = vcmask 1041409
        %v2094 = vsel %vm2093, %v2086, %v2085
        %vm2095 = vcmask 1042434
        %v2096 = vsel %vm2095, %v2087, %v2094
        %vm2097 = vcmask 1043459
        %v2098 = vsel %vm2097, %v2088, %v2096
        %2100 = vst [vmem:[%s340] sm:$0xf] %v2098
        %p2101 = scmp.lt.s32.totalorder %s25, 1
        %s2102 = scalar_select %p2101, %s25, 1
        %p2103 = scmp.lt.s32.totalorder %s24, 0
        %s2104 = scalar_select %p2103, %s24, 0
        %s2105 = sadd.s32 %s2104, %s2102
        %s2106 = smul.addr %s2105, 4
        %s2107 = scalar_lea.vmem %s5, %s2106
        // Predicated region
        $region53: #{transformer_forward.4} parent=39 // pred_check
          %p2108 = pneg %p177
        $region54: #{transformer_forward.4} parent=39 // pred_check_branch
          %2110 = sbr.rel (%p2108) target = $region56
        $region55: #{transformer_forward.4} parent=39 // pred_region
          _
        $region56: #{transformer_forward.4} parent=39 // pred_fallthru
          _
      $region40: #{transformer_forward.4} parent=5 // pred_fallthru
        _
      %p2111 = scmp.le.s32.totalorder 2, %s15
      // Predicated region
      $region57: #{transformer_forward.4} parent=5 // pred_check
        %p2112 = pneg %p2111
      $region58: #{transformer_forward.4} parent=5 // pred_check_branch
        %2114 = sbr.rel (%p2112) target = $region60
      $region59: #{transformer_forward.4} parent=5 // pred_region
        %s2115 = ssub.s32 %s15, 2
        // Predicated region
        $region61: #{transformer_forward.4} parent=59 // pred_check
          %p2116 = pneg %p183
        $region62: #{transformer_forward.4} parent=59 // pred_check_branch
          %2118 = sbr.rel (%p2116) target = $region64
        $region63: #{transformer_forward.4} parent=59 // pred_region
          %p2119 = scmp.lt.s32.totalorder %s27, 1
          %s2120 = scalar_select %p2119, %s27, 1
          %p2121 = scmp.lt.s32.totalorder %s26, 0
          %s2122 = scalar_select %p2121, %s26, 0
          %s2123 = sadd.s32 %s2122, %s2120
          %s2124 = smul.addr %s2123, 4
          %s2125 = scalar_lea.vmem %s5, %s2124
        $region64: #{transformer_forward.4} parent=59 // pred_fallthru
          _
      $region60: #{transformer_forward.4} parent=5 // pred_fallthru
        _
    $region6: #{transformer_forward.4} parent=1 // loop_footer
      %s19 = sadd.s32 1, %s15
    $region7: #{transformer_forward.4} parent=1 // loop_footer_branch
      %14 = sbr.rel target = $region3
    $region8: #{transformer_forward.4} parent=1 // loop_exit
      _
    %2126 = vsyncpa [#allocation4], 1
    %s2127 = scalar_lea.sflag [#allocation4], 1
    %2128 = vsyncpa %s2127, 1
    %2129 = vsyncpa [#allocation5], 1
    %s2130 = scalar_lea.sflag [#allocation5], 1
    %2131 = vsyncpa %s2130, 1

</llo_original>
